<compile_context>
chip_gen: v7x
topology: tpu7x:2x2x1
jax: 0.10.0
libtpu: 0.0.40
codegen_flags: <defaults>
</compile_context>

<pallas_src>
import functools
import math

import jax
import jax.numpy as jnp
from jax.experimental import pallas as pl
from jax.experimental.pallas import tpu as pltpu


# --------------------------- device-aware tiling ----------------------------

@functools.lru_cache(maxsize=None)
def _device_kind():
    try:
        return jax.devices()[0].device_kind.lower()
    except Exception:
        return ""


def _is_v7x():
    return "v7" in _device_kind()


def _vmem_limit_bytes():
    # v7x has 64 MiB physical VMEM per TensorCore; v5e/v6e have 128 MiB.
    return (32 << 20) if _is_v7x() else (64 << 20)


def _choose_tile_m(M, C, n_stream_slabs, other_grid=1):
    """Lane tile for a flattened spatial axis of length M.

    Budget first (double-buffered streamed fp32 slabs), then a hard cap (the
    HBM roofline is already reached well below 8K lanes), then shrink until
    the total grid (other_grid x lane tiles) has enough steps to overlap DMA
    and give both v7x TensorCores work.
    """
    if M <= 1024:
        return M                                    # single full-extent block
    budget = (8 << 20) if _is_v7x() else (16 << 20)
    per_lane = n_stream_slabs * 2 * max(C, 8) * 4   # x2 = double buffering
    tile = min(budget // per_lane, 8192, M)
    tile = max((tile // 128) * 128, 128)
    min_steps = 8 if _is_v7x() else 4
    while tile > 128 and other_grid * pl.cdiv(M, tile) < min_steps:
        tile = max(((tile // 2) // 128) * 128, 128)
    return tile


# ----------------------------- in-kernel atan2 ------------------------------

@functools.lru_cache(maxsize=None)
def _probe_kernel_op(name):
    """Probe whether an elementwise op lowers in Mosaic (runs a tiny kernel)."""
    ops = {
        "arctan2": lambda a, b: jnp.arctan2(a, b),
        "arctan": lambda a, b: jnp.arctan(a) + 0.0 * b,
    }
    fn = ops[name]

    def k(a_ref, b_ref, o_ref):
        o_ref[...] = fn(a_ref[...], b_ref[...])

    try:
        with jax.ensure_compile_time_eval():
            z = jnp.full((8, 128), 0.5, jnp.float32)
            out = pl.pallas_call(
                k, out_shape=jax.ShapeDtypeStruct((8, 128), jnp.float32))(z, z)
            jax.block_until_ready(out)
        return True
    except Exception:
        return False


@functools.lru_cache(maxsize=None)
def _phase_mode():
    if _probe_kernel_op("arctan2"):
        return "arctan2"
    if _probe_kernel_op("arctan"):
        return "arctan"
    return "poly"


# Odd polynomial for atan(t), t in [0, 1]  (|err| <= ~1e-5 rad).
_ATAN_POLY = (0.9998660, -0.3302995, 0.1801410, -0.0851330, 0.0208351)


def _atan_poly01(t):
    z = t * t
    p = _ATAN_POLY[4]
    for c in _ATAN_POLY[3::-1]:
        p = p * z + c
    return t * p


def _atan2_poly(y, x):
    pi = float(math.pi)
    ax, ay = jnp.abs(x), jnp.abs(y)
    hi = jnp.maximum(ax, ay)
    lo = jnp.minimum(ax, ay)
    t = lo / jnp.where(hi == 0.0, 1.0, hi)
    r = _atan_poly01(t)
    r = jnp.where(ay > ax, pi * 0.5 - r, r)
    r = jnp.where(x < 0.0, pi - r, r)
    r = jnp.where(y < 0.0, -r, r)
    return jnp.where(jnp.logical_and(ax == 0.0, ay == 0.0), 0.0, r)


def _atan2_from_atan(y, x):
    pi = float(math.pi)
    safe_x = jnp.where(x == 0.0, 1.0, x)
    a = jnp.arctan(y / safe_x)
    return jnp.where(
        x > 0.0, a,
        jnp.where(x < 0.0, a + jnp.where(y >= 0.0, pi, -pi),
                  jnp.where(y > 0.0, pi * 0.5,
                            jnp.where(y < 0.0, -pi * 0.5, 0.0))))


def _atan2(y, x):
    mode = _phase_mode()
    if mode == "arctan2":
        return jnp.arctan2(y, x)
    if mode == "arctan":
        return _atan2_from_atan(y, x)
    return _atan2_poly(y, x)


# --------------------------- channel matmul helper ---------------------------

def _chan_matmul(w, x):
    """(Cout, Cin) @ (Cin, T), fp32 accumulate.

    Small C: unrolled broadcast FMAs on the VPU (the MXU would be ~(C/256)^2
    utilized).  Large C: bf16 MXU issue with fp32 accumulate.
    """
    cout, cin = w.shape
    if cin <= 32 and cout <= 32:
        acc = w[:, 0:1] * x[0:1, :]
        for k in range(1, cin):
            acc = acc + w[:, k:k + 1] * x[k:k + 1, :]
        return acc
    if cin >= 128 and cout >= 128:
        w = w.astype(jnp.bfloat16)
        x = x.astype(jnp.bfloat16)
    return jnp.dot(w, x, preferred_element_type=jnp.float32)


# ----------------------------- Pallas kernels ------------------------------

def _pre_kernel(ms_ref, pan_ref, w1_ref, b1_ref, w2_ref, b2_ref,
                oms_ref, opan_ref):
    # self.pre1(msf)+1e-8 / self.pre2(panf)+1e-8 ; eps folded into the biases.
    oms_ref[...] = _chan_matmul(w1_ref[...], ms_ref[...]) + b1_ref[...]
    opan_ref[...] = _chan_matmul(w2_ref[...], pan_ref[...]) + b2_ref[...]


def _fuse_kernel(re_ms_ref, im_ms_ref, re_pan_ref, im_pan_ref,
                 wa1m_ref, wa1p_ref, ba1_ref, wa2_ref, ba2_ref,
                 wp1m_ref, wp1p_ref, bp1_ref, wp2_ref, bp2_ref,
                 real_ref, imag_ref):
    re_ms, im_ms = re_ms_ref[...], im_ms_ref[...]
    re_pan, im_pan = re_pan_ref[...], im_pan_ref[...]

    # torch.abs / torch.angle of the spectra, fused in-kernel (no XLA pass).
    amp_ms = jnp.sqrt(re_ms * re_ms + im_ms * im_ms)
    amp_pan = jnp.sqrt(re_pan * re_pan + im_pan * im_pan)
    pha_ms = _atan2(im_ms, re_ms)
    pha_pan = _atan2(im_pan, re_pan)

    def mlp(a, b, w1a, w1b, b1, w2, b2):
        # conv1x1(2C->C) on cat([a, b], channel) == w1[:, :C]@a + w1[:, C:]@b.
        h = _chan_matmul(w1a, a) + _chan_matmul(w1b, b) + b1
        h = jnp.maximum(h, 0.1 * h)                     # LeakyReLU(0.1)
        return _chan_matmul(w2, h) + b2

    amp = mlp(amp_ms, amp_pan, wa1m_ref[...], wa1p_ref[...], ba1_ref[...],
              wa2_ref[...], ba2_ref[...])
    pha = mlp(pha_ms, pha_pan, wp1m_ref[...], wp1p_ref[...], bp1_ref[...],
              wp2_ref[...], bp2_ref[...])

    # real = amp*cos+1e-8, imag = amp*sin+1e-8; torch.complex(real,imag)+1e-8
    # adds the extra 1e-8 to the real part only.
    real_ref[...] = amp * jnp.cos(pha) + 2e-8
    imag_ref[...] = amp * jnp.sin(pha) + 1e-8


def _post_kernel(x_ref, w_ref, b_ref, o_ref):
    # self.post(torch.abs(irfft2(...))) — abs fused into the conv kernel.
    o_ref[...] = _chan_matmul(w_ref[...], jnp.abs(x_ref[...])) + b_ref[...]


# --------------------------- pallas_call wrappers ---------------------------

def _conv_pre(ms, pan, w1, b1, w2, b2):
    N, C, M = ms.shape
    tile = _choose_tile_m(M, C, n_stream_slabs=4, other_grid=N)
    act = pl.BlockSpec((None, C, tile), lambda n, t: (n, 0, t))
    wsp = pl.BlockSpec((C, C), lambda n, t: (0, 0))
    bsp = pl.BlockSpec((C, 1), lambda n, t: (0, 0))
    cost = pl.CostEstimate(flops=4 * C * C * N * M, transcendentals=0,
                           bytes_accessed=16 * C * N * M)
    return pl.pallas_call(
        _pre_kernel,
        out_shape=(jax.ShapeDtypeStruct((N, C, M), jnp.float32),
                   jax.ShapeDtypeStruct((N, C, M), jnp.float32)),
        grid=(N, pl.cdiv(M, tile)),
        in_specs=[act, act, wsp, bsp, wsp, bsp],
        out_specs=(act, act),
        compiler_params=pltpu.CompilerParams(
            dimension_semantics=("parallel", "parallel"),
            vmem_limit_bytes=_vmem_limit_bytes()),
        cost_estimate=cost,
    )(ms, pan, w1, b1, w2, b2)


def _fuse(re_ms, im_ms, re_pan, im_pan, wts):
    N, C, Mf = re_ms.shape
    tile = _choose_tile_m(Mf, C, n_stream_slabs=6, other_grid=N)
    act = pl.BlockSpec((None, C, tile), lambda n, t: (n, 0, t))
    wsp = pl.BlockSpec((C, C), lambda n, t: (0, 0))
    bsp = pl.BlockSpec((C, 1), lambda n, t: (0, 0))
    cost = pl.CostEstimate(flops=12 * C * C * N * Mf,
                           transcendentals=8 * C * N * Mf,
                           bytes_accessed=24 * C * N * Mf)
    return pl.pallas_call(
        _fuse_kernel,
        out_shape=(jax.ShapeDtypeStruct((N, C, Mf), jnp.float32),
                   jax.ShapeDtypeStruct((N, C, Mf), jnp.float32)),
        grid=(N, pl.cdiv(Mf, tile)),
        in_specs=[act, act, act, act,
                  wsp, wsp, bsp, wsp, bsp,
                  wsp, wsp, bsp, wsp, bsp],
        out_specs=(act, act),
        compiler_params=pltpu.CompilerParams(
            dimension_semantics=("parallel", "parallel"),
            vmem_limit_bytes=_vmem_limit_bytes()),
        cost_estimate=cost,
    )(re_ms, im_ms, re_pan, im_pan, *wts)


def _post(x, w, b):
    N, C, M = x.shape
    tile = _choose_tile_m(M, C, n_stream_slabs=2, other_grid=N)
    act = pl.BlockSpec((None, C, tile), lambda n, t: (n, 0, t))
    cost = pl.CostEstimate(flops=2 * C * C * N * M, transcendentals=0,
                           bytes_accessed=8 * C * N * M)
    return pl.pallas_call(
        _post_kernel,
        out_shape=jax.ShapeDtypeStruct((N, C, M), jnp.float32),
        grid=(N, pl.cdiv(M, tile)),
        in_specs=[act,
                  pl.BlockSpec((C, C), lambda n, t: (0, 0)),
                  pl.BlockSpec((C, 1), lambda n, t: (0, 0))],
        out_specs=act,
        compiler_params=pltpu.CompilerParams(
            dimension_semantics=("parallel", "parallel"),
            vmem_limit_bytes=_vmem_limit_bytes()),
        cost_estimate=cost,
    )(x, w, b)


# ------------------------------ full forward -------------------------------

def freprocess_forward(msf, panf, params):
    N, C, H, W = msf.shape
    Wf = W // 2 + 1
    HW, HWf = H * W, H * Wf

    # Native NCHW viewed as (N, C, H*W) — no transposes at entry or exit.
    ms2 = msf.reshape(N, C, HW)
    pan2 = panf.reshape(N, C, HW)
    # Fold the "+1e-8" of `preX(x) + 1e-8` into the conv biases (host-side).
    b_pre1 = params["b_pre1"] + 1e-8
    b_pre2 = params["b_pre2"] + 1e-8

    pre_ms, pre_pan = _conv_pre(ms2, pan2, params["w_pre1"], b_pre1,
                                params["w_pre2"], b_pre2)

    # TODO(synk): rfft2/irfft2 stay in XLA (no Pallas FFT primitive); a
    # DFT-as-matmul formulation would fuse these passes into the Pallas stages.
    F_ms = jnp.fft.rfft2(pre_ms.reshape(N, C, H, W), norm="backward")
    F_pan = jnp.fft.rfft2(pre_pan.reshape(N, C, H, W), norm="backward")

    re_ms = jnp.real(F_ms).reshape(N, C, HWf)
    im_ms = jnp.imag(F_ms).reshape(N, C, HWf)
    re_pan = jnp.real(F_pan).reshape(N, C, HWf)
    im_pan = jnp.imag(F_pan).reshape(N, C, HWf)

    wa1, wp1 = params["wa1"], params["wp1"]
    wts = (wa1[:, :C], wa1[:, C:], params["ba1"], params["wa2"], params["ba2"],
           wp1[:, :C], wp1[:, C:], params["bp1"], params["wp2"], params["bp2"])

    real, imag = _fuse(re_ms, im_ms, re_pan, im_pan, wts)

    outF = jax.lax.complex(real.reshape(N, C, H, Wf),
                           imag.reshape(N, C, H, Wf))
    spatial = jnp.fft.irfft2(outF, s=(H, W), norm="backward")   # (N, C, H, W)

    out = _post(spatial.reshape(N, C, HW).astype(jnp.float32),
                params["w_post"], params["b_post"])
    return out.reshape(N, C, H, W)


# ----------------------------- pure-JAX reference ----------------------------

def _reference_forward(msf, panf, p):
    N, C, H, W = msf.shape

    def conv(x, w, b):
        return jnp.einsum("oi,nihw->nohw", w, x) + b.reshape(1, -1, 1, 1)

    msF = jnp.fft.rfft2(conv(msf, p["w_pre1"], p["b_pre1"]) + 1e-8,
                        norm="backward")
    panF = jnp.fft.rfft2(conv(panf, p["w_pre2"], p["b_pre2"]) + 1e-8,
                         norm="backward")
    amp = jnp.concatenate([jnp.abs(msF), jnp.abs(panF)], axis=1)
    pha = jnp.concatenate([jnp.angle(msF), jnp.angle(panF)], axis=1)

    def mlp(x, w1, b1, w2, b2):
        h = conv(x, w1, b1)
        h = jnp.where(h >= 0, h, 0.1 * h)
        return conv(h, w2, b2)

    amp_f = mlp(amp, p["wa1"], p["ba1"], p["wa2"], p["ba2"])
    pha_f = mlp(pha, p["wp1"], p["bp1"], p["wp2"], p["bp2"])
    real = amp_f * jnp.cos(pha_f) + 1e-8
    imag = amp_f * jnp.sin(pha_f) + 1e-8
    z = jax.lax.complex(real + 1e-8, imag)          # +1e-8 to real part only
    sp = jnp.abs(jnp.fft.irfft2(z, s=(H, W), norm="backward"))
    return conv(sp, p["w_post"], p["b_post"])


# ----------------------------- parameter setup ------------------------------

def init_params(key, C):
    ks = jax.random.split(key, 14)

    def w(k, co, ci):
        return 0.2 * jax.random.normal(k, (co, ci), jnp.float32)

    def b(k, co):
        return 0.05 * jax.random.normal(k, (co, 1), jnp.float32)

    return dict(
        w_pre1=w(ks[0], C, C), b_pre1=b(ks[1], C),
        w_pre2=w(ks[2], C, C), b_pre2=b(ks[3], C),
        wa1=w(ks[4], C, 2 * C), ba1=b(ks[5], C),
        wa2=w(ks[6], C, C), ba2=b(ks[7], C),
        wp1=w(ks[8], C, 2 * C), bp1=b(ks[9], C),
        wp2=w(ks[10], C, C), bp2=b(ks[11], C),
        w_post=w(ks[12], C, C), b_post=b(ks[13], C),
    )


if __name__ == "__main__":
    key = jax.random.PRNGKey(0)
    kp, kx, ky = jax.random.split(key, 3)
    N, C, H, W = 2, 4, 16, 16

    params = init_params(kp, C)
    msf = jax.random.normal(kx, (N, C, H, W), jnp.float32)
    panf = jax.random.normal(ky, (N, C, H, W), jnp.float32)

    fwd = jax.jit(freprocess_forward)
    out = fwd(msf, panf, params)
    jax.block_until_ready(out)
    assert out.shape == (N, C, H, W) and out.dtype == jnp.float32

    ref = jax.jit(_reference_forward)(msf, panf, params)
    jax.block_until_ready(ref)
    err = float(jnp.max(jnp.abs(out - ref)) / (jnp.max(jnp.abs(ref)) + 1e-6))
    assert err < 5e-3, f"max relative error too large: {err}"
    print("KERNEL_OK")
</pallas_src>

<mosaic_0001>
module attributes {stable_mosaic.version = 11 : i64} {
  func.func @_pre_kernel(%arg0: i32, %arg1: i32, %arg2: memref<1x4x256xf32, #tpu.memory_space<vmem>>, %arg3: memref<1x4x256xf32, #tpu.memory_space<vmem>>, %arg4: memref<4x4xf32, #tpu.memory_space<vmem>>, %arg5: memref<4x1xf32, #tpu.memory_space<vmem>>, %arg6: memref<4x4xf32, #tpu.memory_space<vmem>>, %arg7: memref<4x1xf32, #tpu.memory_space<vmem>>, %arg8: memref<1x4x256xf32, #tpu.memory_space<vmem>>, %arg9: memref<1x4x256xf32, #tpu.memory_space<vmem>>) attributes {dimension_semantics = [#tpu.dimension_semantics<parallel>, #tpu.dimension_semantics<parallel>], iteration_bounds = array<i64: 2, 1>, scalar_prefetch = 0 : i64, scratch_operands = 0 : i64, tpu.core_type = #tpu.core_type<tc>, window_params = [{transform_indices = @transform_0, window_bounds = array<i64: 1, 4, 256>}, {transform_indices = @transform_1, window_bounds = array<i64: 1, 4, 256>}, {pipeline_mode = #tpu.pipeline_mode<synchronous>, transform_indices = @transform_2, window_bounds = array<i64: 4, 4>}, {pipeline_mode = #tpu.pipeline_mode<synchronous>, transform_indices = @transform_3, window_bounds = array<i64: 4, 1>}, {pipeline_mode = #tpu.pipeline_mode<synchronous>, transform_indices = @transform_4, window_bounds = array<i64: 4, 4>}, {pipeline_mode = #tpu.pipeline_mode<synchronous>, transform_indices = @transform_5, window_bounds = array<i64: 4, 1>}, {transform_indices = @transform_6, window_bounds = array<i64: 1, 4, 256>}, {transform_indices = @transform_7, window_bounds = array<i64: 1, 4, 256>}]} {
    %c0 = arith.constant 0 : index
    %c0_0 = arith.constant 0 : index
    %0 = vector.load %arg4[%c0, %c0_0] : memref<4x4xf32, #tpu.memory_space<vmem>>, vector<4x4xf32>
    %c0_1 = arith.constant 0 : index
    %c0_2 = arith.constant 0 : index
    %c0_3 = arith.constant 0 : index
    %1 = vector.load %arg2[%c0_1, %c0_2, %c0_3] : memref<1x4x256xf32, #tpu.memory_space<vmem>>, vector<1x4x256xf32>
    %2 = vector.shape_cast %1 : vector<1x4x256xf32> to vector<4x256xf32>
    %3 = vector.extract_strided_slice %0 {offsets = [0, 0], sizes = [4, 1], strides = [1, 1]} : vector<4x4xf32> to vector<4x1xf32>
    %4 = vector.extract_strided_slice %2 {offsets = [0, 0], sizes = [1, 256], strides = [1, 1]} : vector<4x256xf32> to vector<1x256xf32>
    %5 = vector.broadcast %3 : vector<4x1xf32> to vector<4x256xf32>
    %6 = vector.broadcast %4 : vector<1x256xf32> to vector<4x256xf32>
    %7 = arith.mulf %5, %6 : vector<4x256xf32>
    %8 = vector.extract_strided_slice %0 {offsets = [0, 1], sizes = [4, 1], strides = [1, 1]} : vector<4x4xf32> to vector<4x1xf32>
    %9 = vector.extract_strided_slice %2 {offsets = [1, 0], sizes = [1, 256], strides = [1, 1]} : vector<4x256xf32> to vector<1x256xf32>
    %10 = vector.broadcast %8 : vector<4x1xf32> to vector<4x256xf32>
    %11 = vector.broadcast %9 : vector<1x256xf32> to vector<4x256xf32>
    %12 = arith.mulf %10, %11 : vector<4x256xf32>
    %13 = arith.addf %7, %12 : vector<4x256xf32>
    %14 = vector.extract_strided_slice %0 {offsets = [0, 2], sizes = [4, 1], strides = [1, 1]} : vector<4x4xf32> to vector<4x1xf32>
    %15 = vector.extract_strided_slice %2 {offsets = [2, 0], sizes = [1, 256], strides = [1, 1]} : vector<4x256xf32> to vector<1x256xf32>
    %16 = vector.broadcast %14 : vector<4x1xf32> to vector<4x256xf32>
    %17 = vector.broadcast %15 : vector<1x256xf32> to vector<4x256xf32>
    %18 = arith.mulf %16, %17 : vector<4x256xf32>
    %19 = arith.addf %13, %18 : vector<4x256xf32>
    %20 = vector.extract_strided_slice %0 {offsets = [0, 3], sizes = [4, 1], strides = [1, 1]} : vector<4x4xf32> to vector<4x1xf32>
    %21 = vector.extract_strided_slice %2 {offsets = [3, 0], sizes = [1, 256], strides = [1, 1]} : vector<4x256xf32> to vector<1x256xf32>
    %22 = vector.broadcast %20 : vector<4x1xf32> to vector<4x256xf32>
    %23 = vector.broadcast %21 : vector<1x256xf32> to vector<4x256xf32>
    %24 = arith.mulf %22, %23 : vector<4x256xf32>
    %25 = arith.addf %19, %24 : vector<4x256xf32>
    %c0_4 = arith.constant 0 : index
    %c0_5 = arith.constant 0 : index
    %26 = vector.load %arg5[%c0_4, %c0_5] : memref<4x1xf32, #tpu.memory_space<vmem>>, vector<4x1xf32>
    %27 = vector.broadcast %26 : vector<4x1xf32> to vector<4x256xf32>
    %28 = arith.addf %25, %27 : vector<4x256xf32>
    %c0_6 = arith.constant 0 : index
    %c0_7 = arith.constant 0 : index
    %c0_8 = arith.constant 0 : index
    %29 = vector.load %arg8[%c0_6, %c0_7, %c0_8] : memref<1x4x256xf32, #tpu.memory_space<vmem>>, vector<1x4x256xf32>
    %30 = vector.shape_cast %29 : vector<1x4x256xf32> to vector<4x256xf32>
    %31 = vector.shape_cast %28 : vector<4x256xf32> to vector<1x4x256xf32>
    tpu.vector_store %arg8[%c0_6, %c0_7, %c0_8], %31 {strides = array<i32>} : memref<1x4x256xf32, #tpu.memory_space<vmem>>, vector<1x4x256xf32>,
    %c0_9 = arith.constant 0 : index
    %c0_10 = arith.constant 0 : index
    %32 = vector.load %arg6[%c0_9, %c0_10] : memref<4x4xf32, #tpu.memory_space<vmem>>, vector<4x4xf32>
    %c0_11 = arith.constant 0 : index
    %c0_12 = arith.constant 0 : index
    %c0_13 = arith.constant 0 : index
    %33 = vector.load %arg3[%c0_11, %c0_12, %c0_13] : memref<1x4x256xf32, #tpu.memory_space<vmem>>, vector<1x4x256xf32>
    %34 = vector.shape_cast %33 : vector<1x4x256xf32> to vector<4x256xf32>
    %35 = vector.extract_strided_slice %32 {offsets = [0, 0], sizes = [4, 1], strides = [1, 1]} : vector<4x4xf32> to vector<4x1xf32>
    %36 = vector.extract_strided_slice %34 {offsets = [0, 0], sizes = [1, 256], strides = [1, 1]} : vector<4x256xf32> to vector<1x256xf32>
    %37 = vector.broadcast %35 : vector<4x1xf32> to vector<4x256xf32>
    %38 = vector.broadcast %36 : vector<1x256xf32> to vector<4x256xf32>
    %39 = arith.mulf %37, %38 : vector<4x256xf32>
    %40 = vector.extract_strided_slice %32 {offsets = [0, 1], sizes = [4, 1], strides = [1, 1]} : vector<4x4xf32> to vector<4x1xf32>
    %41 = vector.extract_strided_slice %34 {offsets = [1, 0], sizes = [1, 256], strides = [1, 1]} : vector<4x256xf32> to vector<1x256xf32>
    %42 = vector.broadcast %40 : vector<4x1xf32> to vector<4x256xf32>
    %43 = vector.broadcast %41 : vector<1x256xf32> to vector<4x256xf32>
    %44 = arith.mulf %42, %43 : vector<4x256xf32>
    %45 = arith.addf %39, %44 : vector<4x256xf32>
    %46 = vector.extract_strided_slice %32 {offsets = [0, 2], sizes = [4, 1], strides = [1, 1]} : vector<4x4xf32> to vector<4x1xf32>
    %47 = vector.extract_strided_slice %34 {offsets = [2, 0], sizes = [1, 256], strides = [1, 1]} : vector<4x256xf32> to vector<1x256xf32>
    %48 = vector.broadcast %46 : vector<4x1xf32> to vector<4x256xf32>
    %49 = vector.broadcast %47 : vector<1x256xf32> to vector<4x256xf32>
    %50 = arith.mulf %48, %49 : vector<4x256xf32>
    %51 = arith.addf %45, %50 : vector<4x256xf32>
    %52 = vector.extract_strided_slice %32 {offsets = [0, 3], sizes = [4, 1], strides = [1, 1]} : vector<4x4xf32> to vector<4x1xf32>
    %53 = vector.extract_strided_slice %34 {offsets = [3, 0], sizes = [1, 256], strides = [1, 1]} : vector<4x256xf32> to vector<1x256xf32>
    %54 = vector.broadcast %52 : vector<4x1xf32> to vector<4x256xf32>
    %55 = vector.broadcast %53 : vector<1x256xf32> to vector<4x256xf32>
    %56 = arith.mulf %54, %55 : vector<4x256xf32>
    %57 = arith.addf %51, %56 : vector<4x256xf32>
    %c0_14 = arith.constant 0 : index
    %c0_15 = arith.constant 0 : index
    %58 = vector.load %arg7[%c0_14, %c0_15] : memref<4x1xf32, #tpu.memory_space<vmem>>, vector<4x1xf32>
    %59 = vector.broadcast %58 : vector<4x1xf32> to vector<4x256xf32>
    %60 = arith.addf %57, %59 : vector<4x256xf32>
    %c0_16 = arith.constant 0 : index
    %c0_17 = arith.constant 0 : index
    %c0_18 = arith.constant 0 : index
    %61 = vector.load %arg9[%c0_16, %c0_17, %c0_18] : memref<1x4x256xf32, #tpu.memory_space<vmem>>, vector<1x4x256xf32>
    %62 = vector.shape_cast %61 : vector<1x4x256xf32> to vector<4x256xf32>
    %63 = vector.shape_cast %60 : vector<4x256xf32> to vector<1x4x256xf32>
    tpu.vector_store %arg9[%c0_16, %c0_17, %c0_18], %63 {strides = array<i32>} : memref<1x4x256xf32, #tpu.memory_space<vmem>>, vector<1x4x256xf32>,
    return
  }
  func.func @transform_0(%arg0: i32, %arg1: i32) -> (i32, i32, i32) {
    %c0_i32 = arith.constant 0 : i32
    %c0_i32_0 = arith.constant 0 : i32
    return %arg0, %c0_i32, %arg1 : i32, i32, i32
  }
  func.func @transform_1(%arg0: i32, %arg1: i32) -> (i32, i32, i32) {
    %c0_i32 = arith.constant 0 : i32
    %c0_i32_0 = arith.constant 0 : i32
    return %arg0, %c0_i32, %arg1 : i32, i32, i32
  }
  func.func @transform_2(%arg0: i32, %arg1: i32) -> (i32, i32) {
    %c0_i32 = arith.constant 0 : i32
    %c0_i32_0 = arith.constant 0 : i32
    %c0_i32_1 = arith.constant 0 : i32
    return %c0_i32, %c0_i32_0 : i32, i32
  }
  func.func @transform_3(%arg0: i32, %arg1: i32) -> (i32, i32) {
    %c0_i32 = arith.constant 0 : i32
    %c0_i32_0 = arith.constant 0 : i32
    %c0_i32_1 = arith.constant 0 : i32
    return %c0_i32, %c0_i32_0 : i32, i32
  }
  func.func @transform_4(%arg0: i32, %arg1: i32) -> (i32, i32) {
    %c0_i32 = arith.constant 0 : i32
    %c0_i32_0 = arith.constant 0 : i32
    %c0_i32_1 = arith.constant 0 : i32
    return %c0_i32, %c0_i32_0 : i32, i32
  }
  func.func @transform_5(%arg0: i32, %arg1: i32) -> (i32, i32) {
    %c0_i32 = arith.constant 0 : i32
    %c0_i32_0 = arith.constant 0 : i32
    %c0_i32_1 = arith.constant 0 : i32
    return %c0_i32, %c0_i32_0 : i32, i32
  }
  func.func @transform_6(%arg0: i32, %arg1: i32) -> (i32, i32, i32) {
    %c0_i32 = arith.constant 0 : i32
    %c0_i32_0 = arith.constant 0 : i32
    return %arg0, %c0_i32, %arg1 : i32, i32, i32
  }
  func.func @transform_7(%arg0: i32, %arg1: i32) -> (i32, i32, i32) {
    %c0_i32 = arith.constant 0 : i32
    %c0_i32_0 = arith.constant 0 : i32
    return %arg0, %c0_i32, %arg1 : i32, i32, i32
  }
}

module attributes {stable_mosaic.version = 11 : i64} {
  func.func @_fuse_kernel(%arg0: i32, %arg1: i32, %arg2: memref<1x4x144xf32, #tpu.memory_space<vmem>>, %arg3: memref<1x4x144xf32, #tpu.memory_space<vmem>>, %arg4: memref<1x4x144xf32, #tpu.memory_space<vmem>>, %arg5: memref<1x4x144xf32, #tpu.memory_space<vmem>>, %arg6: memref<4x4xf32, #tpu.memory_space<vmem>>, %arg7: memref<4x4xf32, #tpu.memory_space<vmem>>, %arg8: memref<4x1xf32, #tpu.memory_space<vmem>>, %arg9: memref<4x4xf32, #tpu.memory_space<vmem>>, %arg10: memref<4x1xf32, #tpu.memory_space<vmem>>, %arg11: memref<4x4xf32, #tpu.memory_space<vmem>>, %arg12: memref<4x4xf32, #tpu.memory_space<vmem>>, %arg13: memref<4x1xf32, #tpu.memory_space<vmem>>, %arg14: memref<4x4xf32, #tpu.memory_space<vmem>>, %arg15: memref<4x1xf32, #tpu.memory_space<vmem>>, %arg16: memref<1x4x144xf32, #tpu.memory_space<vmem>>, %arg17: memref<1x4x144xf32, #tpu.memory_space<vmem>>) attributes {dimension_semantics = [#tpu.dimension_semantics<parallel>, #tpu.dimension_semantics<parallel>], iteration_bounds = array<i64: 2, 1>, scalar_prefetch = 0 : i64, scratch_operands = 0 : i64, tpu.core_type = #tpu.core_type<tc>, window_params = [{transform_indices = @transform_0, window_bounds = array<i64: 1, 4, 144>}, {transform_indices = @transform_1, window_bounds = array<i64: 1, 4, 144>}, {transform_indices = @transform_2, window_bounds = array<i64: 1, 4, 144>}, {transform_indices = @transform_3, window_bounds = array<i64: 1, 4, 144>}, {pipeline_mode = #tpu.pipeline_mode<synchronous>, transform_indices = @transform_4, window_bounds = array<i64: 4, 4>}, {pipeline_mode = #tpu.pipeline_mode<synchronous>, transform_indices = @transform_5, window_bounds = array<i64: 4, 4>}, {pipeline_mode = #tpu.pipeline_mode<synchronous>, transform_indices = @transform_6, window_bounds = array<i64: 4, 1>}, {pipeline_mode = #tpu.pipeline_mode<synchronous>, transform_indices = @transform_7, window_bounds = array<i64: 4, 4>}, {pipeline_mode = #tpu.pipeline_mode<synchronous>, transform_indices = @transform_8, window_bounds = array<i64: 4, 1>}, {pipeline_mode = #tpu.pipeline_mode<synchronous>, transform_indices = @transform_9, window_bounds = array<i64: 4, 4>}, {pipeline_mode = #tpu.pipeline_mode<synchronous>, transform_indices = @transform_10, window_bounds = array<i64: 4, 4>}, {pipeline_mode = #tpu.pipeline_mode<synchronous>, transform_indices = @transform_11, window_bounds = array<i64: 4, 1>}, {pipeline_mode = #tpu.pipeline_mode<synchronous>, transform_indices = @transform_12, window_bounds = array<i64: 4, 4>}, {pipeline_mode = #tpu.pipeline_mode<synchronous>, transform_indices = @transform_13, window_bounds = array<i64: 4, 1>}, {transform_indices = @transform_14, window_bounds = array<i64: 1, 4, 144>}, {transform_indices = @transform_15, window_bounds = array<i64: 1, 4, 144>}]} {
    %c0 = arith.constant 0 : index
    %c0_0 = arith.constant 0 : index
    %c0_1 = arith.constant 0 : index
    %0 = vector.load %arg2[%c0, %c0_0, %c0_1] : memref<1x4x144xf32, #tpu.memory_space<vmem>>, vector<1x4x144xf32>
    %1 = vector.shape_cast %0 : vector<1x4x144xf32> to vector<4x144xf32>
    %c0_2 = arith.constant 0 : index
    %c0_3 = arith.constant 0 : index
    %c0_4 = arith.constant 0 : index
    %2 = vector.load %arg3[%c0_2, %c0_3, %c0_4] : memref<1x4x144xf32, #tpu.memory_space<vmem>>, vector<1x4x144xf32>
    %3 = vector.shape_cast %2 : vector<1x4x144xf32> to vector<4x144xf32>
    %c0_5 = arith.constant 0 : index
    %c0_6 = arith.constant 0 : index
    %c0_7 = arith.constant 0 : index
    %4 = vector.load %arg4[%c0_5, %c0_6, %c0_7] : memref<1x4x144xf32, #tpu.memory_space<vmem>>, vector<1x4x144xf32>
    %5 = vector.shape_cast %4 : vector<1x4x144xf32> to vector<4x144xf32>
    %c0_8 = arith.constant 0 : index
    %c0_9 = arith.constant 0 : index
    %c0_10 = arith.constant 0 : index
    %6 = vector.load %arg5[%c0_8, %c0_9, %c0_10] : memref<1x4x144xf32, #tpu.memory_space<vmem>>, vector<1x4x144xf32>
    %7 = vector.shape_cast %6 : vector<1x4x144xf32> to vector<4x144xf32>
    %8 = arith.mulf %1, %1 : vector<4x144xf32>
    %9 = arith.mulf %3, %3 : vector<4x144xf32>
    %10 = arith.addf %8, %9 : vector<4x144xf32>
    %11 = math.sqrt %10 : vector<4x144xf32>
    %12 = arith.mulf %5, %5 : vector<4x144xf32>
    %13 = arith.mulf %7, %7 : vector<4x144xf32>
    %14 = arith.addf %12, %13 : vector<4x144xf32>
    %15 = math.sqrt %14 : vector<4x144xf32>
    %16 = math.absf %1 : vector<4x144xf32>
    %17 = math.absf %3 : vector<4x144xf32>
    %18 = arith.maximumf %16, %17 : vector<4x144xf32>
    %19 = arith.minimumf %16, %17 : vector<4x144xf32>
    %cst = arith.constant 0.000000e+00 : f32
    %20 = vector.broadcast %cst : f32 to vector<4x144xf32>
    %21 = arith.cmpf oeq, %18, %20 : vector<4x144xf32>
    %cst_11 = arith.constant 1.000000e+00 : f32
    %22 = vector.broadcast %cst_11 : f32 to vector<4x144xf32>
    %23 = arith.select %21, %22, %18 : vector<4x144xi1>, vector<4x144xf32>
    %24 = arith.divf %19, %23 : vector<4x144xf32>
    %25 = arith.mulf %24, %24 : vector<4x144xf32>
    %cst_12 = arith.constant 2.083510e-02 : f32
    %26 = vector.broadcast %cst_12 : f32 to vector<4x144xf32>
    %27 = arith.mulf %26, %25 : vector<4x144xf32>
    %cst_13 = arith.constant -8.513300e-02 : f32
    %28 = vector.broadcast %cst_13 : f32 to vector<4x144xf32>
    %29 = arith.addf %27, %28 : vector<4x144xf32>
    %30 = arith.mulf %29, %25 : vector<4x144xf32>
    %cst_14 = arith.constant 1.801410e-01 : f32
    %31 = vector.broadcast %cst_14 : f32 to vector<4x144xf32>
    %32 = arith.addf %30, %31 : vector<4x144xf32>
    %33 = arith.mulf %32, %25 : vector<4x144xf32>
    %cst_15 = arith.constant -0.330299497 : f32
    %34 = vector.broadcast %cst_15 : f32 to vector<4x144xf32>
    %35 = arith.addf %33, %34 : vector<4x144xf32>
    %36 = arith.mulf %35, %25 : vector<4x144xf32>
    %cst_16 = arith.constant 9.998660e-01 : f32
    %37 = vector.broadcast %cst_16 : f32 to vector<4x144xf32>
    %38 = arith.addf %36, %37 : vector<4x144xf32>
    %39 = arith.mulf %24, %38 : vector<4x144xf32>
    %40 = arith.cmpf ogt, %17, %16 : vector<4x144xf32>
    %cst_17 = arith.constant 1.57079637 : f32
    %41 = vector.broadcast %cst_17 : f32 to vector<4x144xf32>
    %42 = arith.subf %41, %39 : vector<4x144xf32>
    %43 = arith.select %40, %42, %39 : vector<4x144xi1>, vector<4x144xf32>
    %cst_18 = arith.constant 0.000000e+00 : f32
    %44 = vector.broadcast %cst_18 : f32 to vector<4x144xf32>
    %45 = arith.cmpf olt, %1, %44 : vector<4x144xf32>
    %cst_19 = arith.constant 3.14159274 : f32
    %46 = vector.broadcast %cst_19 : f32 to vector<4x144xf32>
    %47 = arith.subf %46, %43 : vector<4x144xf32>
    %48 = arith.select %45, %47, %43 : vector<4x144xi1>, vector<4x144xf32>
    %cst_20 = arith.constant 0.000000e+00 : f32
    %49 = vector.broadcast %cst_20 : f32 to vector<4x144xf32>
    %50 = arith.cmpf olt, %3, %49 : vector<4x144xf32>
    %cst_21 = arith.constant 0.000000e+00 : f32
    %51 = vector.broadcast %cst_21 : f32 to vector<4x144xf32>
    %52 = arith.subf %51, %48 : vector<4x144xf32>
    %53 = arith.select %50, %52, %48 : vector<4x144xi1>, vector<4x144xf32>
    %cst_22 = arith.constant 0.000000e+00 : f32
    %54 = vector.broadcast %cst_22 : f32 to vector<4x144xf32>
    %55 = arith.cmpf oeq, %16, %54 : vector<4x144xf32>
    %cst_23 = arith.constant 0.000000e+00 : f32
    %56 = vector.broadcast %cst_23 : f32 to vector<4x144xf32>
    %57 = arith.cmpf oeq, %17, %56 : vector<4x144xf32>
    %58 = arith.andi %55, %57 : vector<4x144xi1>
    %cst_24 = arith.constant 0.000000e+00 : f32
    %59 = vector.broadcast %cst_24 : f32 to vector<4x144xf32>
    %60 = arith.select %58, %59, %53 : vector<4x144xi1>, vector<4x144xf32>
    %61 = math.absf %5 : vector<4x144xf32>
    %62 = math.absf %7 : vector<4x144xf32>
    %63 = arith.maximumf %61, %62 : vector<4x144xf32>
    %64 = arith.minimumf %61, %62 : vector<4x144xf32>
    %cst_25 = arith.constant 0.000000e+00 : f32
    %65 = vector.broadcast %cst_25 : f32 to vector<4x144xf32>
    %66 = arith.cmpf oeq, %63, %65 : vector<4x144xf32>
    %cst_26 = arith.constant 1.000000e+00 : f32
    %67 = vector.broadcast %cst_26 : f32 to vector<4x144xf32>
    %68 = arith.select %66, %67, %63 : vector<4x144xi1>, vector<4x144xf32>
    %69 = arith.divf %64, %68 : vector<4x144xf32>
    %70 = arith.mulf %69, %69 : vector<4x144xf32>
    %cst_27 = arith.constant 2.083510e-02 : f32
    %71 = vector.broadcast %cst_27 : f32 to vector<4x144xf32>
    %72 = arith.mulf %71, %70 : vector<4x144xf32>
    %cst_28 = arith.constant -8.513300e-02 : f32
    %73 = vector.broadcast %cst_28 : f32 to vector<4x144xf32>
    %74 = arith.addf %72, %73 : vector<4x144xf32>
    %75 = arith.mulf %74, %70 : vector<4x144xf32>
    %cst_29 = arith.constant 1.801410e-01 : f32
    %76 = vector.broadcast %cst_29 : f32 to vector<4x144xf32>
    %77 = arith.addf %75, %76 : vector<4x144xf32>
    %78 = arith.mulf %77, %70 : vector<4x144xf32>
    %cst_30 = arith.constant -0.330299497 : f32
    %79 = vector.broadcast %cst_30 : f32 to vector<4x144xf32>
    %80 = arith.addf %78, %79 : vector<4x144xf32>
    %81 = arith.mulf %80, %70 : vector<4x144xf32>
    %cst_31 = arith.constant 9.998660e-01 : f32
    %82 = vector.broadcast %cst_31 : f32 to vector<4x144xf32>
    %83 = arith.addf %81, %82 : vector<4x144xf32>
    %84 = arith.mulf %69, %83 : vector<4x144xf32>
    %85 = arith.cmpf ogt, %62, %61 : vector<4x144xf32>
    %cst_32 = arith.constant 1.57079637 : f32
    %86 = vector.broadcast %cst_32 : f32 to vector<4x144xf32>
    %87 = arith.subf %86, %84 : vector<4x144xf32>
    %88 = arith.select %85, %87, %84 : vector<4x144xi1>, vector<4x144xf32>
    %cst_33 = arith.constant 0.000000e+00 : f32
    %89 = vector.broadcast %cst_33 : f32 to vector<4x144xf32>
    %90 = arith.cmpf olt, %5, %89 : vector<4x144xf32>
    %cst_34 = arith.constant 3.14159274 : f32
    %91 = vector.broadcast %cst_34 : f32 to vector<4x144xf32>
    %92 = arith.subf %91, %88 : vector<4x144xf32>
    %93 = arith.select %90, %92, %88 : vector<4x144xi1>, vector<4x144xf32>
    %cst_35 = arith.constant 0.000000e+00 : f32
    %94 = vector.broadcast %cst_35 : f32 to vector<4x144xf32>
    %95 = arith.cmpf olt, %7, %94 : vector<4x144xf32>
    %cst_36 = arith.constant 0.000000e+00 : f32
    %96 = vector.broadcast %cst_36 : f32 to vector<4x144xf32>
    %97 = arith.subf %96, %93 : vector<4x144xf32>
    %98 = arith.select %95, %97, %93 : vector<4x144xi1>, vector<4x144xf32>
    %cst_37 = arith.constant 0.000000e+00 : f32
    %99 = vector.broadcast %cst_37 : f32 to vector<4x144xf32>
    %100 = arith.cmpf oeq, %61, %99 : vector<4x144xf32>
    %cst_38 = arith.constant 0.000000e+00 : f32
    %101 = vector.broadcast %cst_38 : f32 to vector<4x144xf32>
    %102 = arith.cmpf oeq, %62, %101 : vector<4x144xf32>
    %103 = arith.andi %100, %102 : vector<4x144xi1>
    %cst_39 = arith.constant 0.000000e+00 : f32
    %104 = vector.broadcast %cst_39 : f32 to vector<4x144xf32>
    %105 = arith.select %103, %104, %98 : vector<4x144xi1>, vector<4x144xf32>
    %c0_40 = arith.constant 0 : index
    %c0_41 = arith.constant 0 : index
    %106 = vector.load %arg6[%c0_40, %c0_41] : memref<4x4xf32, #tpu.memory_space<vmem>>, vector<4x4xf32>
    %c0_42 = arith.constant 0 : index
    %c0_43 = arith.constant 0 : index
    %107 = vector.load %arg7[%c0_42, %c0_43] : memref<4x4xf32, #tpu.memory_space<vmem>>, vector<4x4xf32>
    %c0_44 = arith.constant 0 : index
    %c0_45 = arith.constant 0 : index
    %108 = vector.load %arg8[%c0_44, %c0_45] : memref<4x1xf32, #tpu.memory_space<vmem>>, vector<4x1xf32>
    %c0_46 = arith.constant 0 : index
    %c0_47 = arith.constant 0 : index
    %109 = vector.load %arg9[%c0_46, %c0_47] : memref<4x4xf32, #tpu.memory_space<vmem>>, vector<4x4xf32>
    %c0_48 = arith.constant 0 : index
    %c0_49 = arith.constant 0 : index
    %110 = vector.load %arg10[%c0_48, %c0_49] : memref<4x1xf32, #tpu.memory_space<vmem>>, vector<4x1xf32>
    %111 = vector.extract_strided_slice %106 {offsets = [0, 0], sizes = [4, 1], strides = [1, 1]} : vector<4x4xf32> to vector<4x1xf32>
    %112 = vector.extract_strided_slice %11 {offsets = [0, 0], sizes = [1, 144], strides = [1, 1]} : vector<4x144xf32> to vector<1x144xf32>
    %113 = vector.broadcast %111 : vector<4x1xf32> to vector<4x144xf32>
    %114 = vector.broadcast %112 : vector<1x144xf32> to vector<4x144xf32>
    %115 = arith.mulf %113, %114 : vector<4x144xf32>
    %116 = vector.extract_strided_slice %106 {offsets = [0, 1], sizes = [4, 1], strides = [1, 1]} : vector<4x4xf32> to vector<4x1xf32>
    %117 = vector.extract_strided_slice %11 {offsets = [1, 0], sizes = [1, 144], strides = [1, 1]} : vector<4x144xf32> to vector<1x144xf32>
    %118 = vector.broadcast %116 : vector<4x1xf32> to vector<4x144xf32>
    %119 = vector.broadcast %117 : vector<1x144xf32> to vector<4x144xf32>
    %120 = arith.mulf %118, %119 : vector<4x144xf32>
    %121 = arith.addf %115, %120 : vector<4x144xf32>
    %122 = vector.extract_strided_slice %106 {offsets = [0, 2], sizes = [4, 1], strides = [1, 1]} : vector<4x4xf32> to vector<4x1xf32>
    %123 = vector.extract_strided_slice %11 {offsets = [2, 0], sizes = [1, 144], strides = [1, 1]} : vector<4x144xf32> to vector<1x144xf32>
    %124 = vector.broadcast %122 : vector<4x1xf32> to vector<4x144xf32>
    %125 = vector.broadcast %123 : vector<1x144xf32> to vector<4x144xf32>
    %126 = arith.mulf %124, %125 : vector<4x144xf32>
    %127 = arith.addf %121, %126 : vector<4x144xf32>
    %128 = vector.extract_strided_slice %106 {offsets = [0, 3], sizes = [4, 1], strides = [1, 1]} : vector<4x4xf32> to vector<4x1xf32>
    %129 = vector.extract_strided_slice %11 {offsets = [3, 0], sizes = [1, 144], strides = [1, 1]} : vector<4x144xf32> to vector<1x144xf32>
    %130 = vector.broadcast %128 : vector<4x1xf32> to vector<4x144xf32>
    %131 = vector.broadcast %129 : vector<1x144xf32> to vector<4x144xf32>
    %132 = arith.mulf %130, %131 : vector<4x144xf32>
    %133 = arith.addf %127, %132 : vector<4x144xf32>
    %134 = vector.extract_strided_slice %107 {offsets = [0, 0], sizes = [4, 1], strides = [1, 1]} : vector<4x4xf32> to vector<4x1xf32>
    %135 = vector.extract_strided_slice %15 {offsets = [0, 0], sizes = [1, 144], strides = [1, 1]} : vector<4x144xf32> to vector<1x144xf32>
    %136 = vector.broadcast %134 : vector<4x1xf32> to vector<4x144xf32>
    %137 = vector.broadcast %135 : vector<1x144xf32> to vector<4x144xf32>
    %138 = arith.mulf %136, %137 : vector<4x144xf32>
    %139 = vector.extract_strided_slice %107 {offsets = [0, 1], sizes = [4, 1], strides = [1, 1]} : vector<4x4xf32> to vector<4x1xf32>
    %140 = vector.extract_strided_slice %15 {offsets = [1, 0], sizes = [1, 144], strides = [1, 1]} : vector<4x144xf32> to vector<1x144xf32>
    %141 = vector.broadcast %139 : vector<4x1xf32> to vector<4x144xf32>
    %142 = vector.broadcast %140 : vector<1x144xf32> to vector<4x144xf32>
    %143 = arith.mulf %141, %142 : vector<4x144xf32>
    %144 = arith.addf %138, %143 : vector<4x144xf32>
    %145 = vector.extract_strided_slice %107 {offsets = [0, 2], sizes = [4, 1], strides = [1, 1]} : vector<4x4xf32> to vector<4x1xf32>
    %146 = vector.extract_strided_slice %15 {offsets = [2, 0], sizes = [1, 144], strides = [1, 1]} : vector<4x144xf32> to vector<1x144xf32>
    %147 = vector.broadcast %145 : vector<4x1xf32> to vector<4x144xf32>
    %148 = vector.broadcast %146 : vector<1x144xf32> to vector<4x144xf32>
    %149 = arith.mulf %147, %148 : vector<4x144xf32>
    %150 = arith.addf %144, %149 : vector<4x144xf32>
    %151 = vector.extract_strided_slice %107 {offsets = [0, 3], sizes = [4, 1], strides = [1, 1]} : vector<4x4xf32> to vector<4x1xf32>
    %152 = vector.extract_strided_slice %15 {offsets = [3, 0], sizes = [1, 144], strides = [1, 1]} : vector<4x144xf32> to vector<1x144xf32>
    %153 = vector.broadcast %151 : vector<4x1xf32> to vector<4x144xf32>
    %154 = vector.broadcast %152 : vector<1x144xf32> to vector<4x144xf32>
    %155 = arith.mulf %153, %154 : vector<4x144xf32>
    %156 = arith.addf %150, %155 : vector<4x144xf32>
    %157 = arith.addf %133, %156 : vector<4x144xf32>
    %158 = vector.broadcast %108 : vector<4x1xf32> to vector<4x144xf32>
    %159 = arith.addf %157, %158 : vector<4x144xf32>
    %cst_50 = arith.constant 1.000000e-01 : f32
    %160 = vector.broadcast %cst_50 : f32 to vector<4x144xf32>
    %161 = arith.mulf %160, %159 : vector<4x144xf32>
    %162 = arith.maximumf %159, %161 : vector<4x144xf32>
    %163 = vector.extract_strided_slice %109 {offsets = [0, 0], sizes = [4, 1], strides = [1, 1]} : vector<4x4xf32> to vector<4x1xf32>
    %164 = vector.extract_strided_slice %162 {offsets = [0, 0], sizes = [1, 144], strides = [1, 1]} : vector<4x144xf32> to vector<1x144xf32>
    %165 = vector.broadcast %163 : vector<4x1xf32> to vector<4x144xf32>
    %166 = vector.broadcast %164 : vector<1x144xf32> to vector<4x144xf32>
    %167 = arith.mulf %165, %166 : vector<4x144xf32>
    %168 = vector.extract_strided_slice %109 {offsets = [0, 1], sizes = [4, 1], strides = [1, 1]} : vector<4x4xf32> to vector<4x1xf32>
    %169 = vector.extract_strided_slice %162 {offsets = [1, 0], sizes = [1, 144], strides = [1, 1]} : vector<4x144xf32> to vector<1x144xf32>
    %170 = vector.broadcast %168 : vector<4x1xf32> to vector<4x144xf32>
    %171 = vector.broadcast %169 : vector<1x144xf32> to vector<4x144xf32>
    %172 = arith.mulf %170, %171 : vector<4x144xf32>
    %173 = arith.addf %167, %172 : vector<4x144xf32>
    %174 = vector.extract_strided_slice %109 {offsets = [0, 2], sizes = [4, 1], strides = [1, 1]} : vector<4x4xf32> to vector<4x1xf32>
    %175 = vector.extract_strided_slice %162 {offsets = [2, 0], sizes = [1, 144], strides = [1, 1]} : vector<4x144xf32> to vector<1x144xf32>
    %176 = vector.broadcast %174 : vector<4x1xf32> to vector<4x144xf32>
    %177 = vector.broadcast %175 : vector<1x144xf32> to vector<4x144xf32>
    %178 = arith.mulf %176, %177 : vector<4x144xf32>
    %179 = arith.addf %173, %178 : vector<4x144xf32>
    %180 = vector.extract_strided_slice %109 {offsets = [0, 3], sizes = [4, 1], strides = [1, 1]} : vector<4x4xf32> to vector<4x1xf32>
    %181 = vector.extract_strided_slice %162 {offsets = [3, 0], sizes = [1, 144], strides = [1, 1]} : vector<4x144xf32> to vector<1x144xf32>
    %182 = vector.broadcast %180 : vector<4x1xf32> to vector<4x144xf32>
    %183 = vector.broadcast %181 : vector<1x144xf32> to vector<4x144xf32>
    %184 = arith.mulf %182, %183 : vector<4x144xf32>
    %185 = arith.addf %179, %184 : vector<4x144xf32>
    %186 = vector.broadcast %110 : vector<4x1xf32> to vector<4x144xf32>
    %187 = arith.addf %185, %186 : vector<4x144xf32>
    %c0_51 = arith.constant 0 : index
    %c0_52 = arith.constant 0 : index
    %188 = vector.load %arg11[%c0_51, %c0_52] : memref<4x4xf32, #tpu.memory_space<vmem>>, vector<4x4xf32>
    %c0_53 = arith.constant 0 : index
    %c0_54 = arith.constant 0 : index
    %189 = vector.load %arg12[%c0_53, %c0_54] : memref<4x4xf32, #tpu.memory_space<vmem>>, vector<4x4xf32>
    %c0_55 = arith.constant 0 : index
    %c0_56 = arith.constant 0 : index
    %190 = vector.load %arg13[%c0_55, %c0_56] : memref<4x1xf32, #tpu.memory_space<vmem>>, vector<4x1xf32>
    %c0_57 = arith.constant 0 : index
    %c0_58 = arith.constant 0 : index
    %191 = vector.load %arg14[%c0_57, %c0_58] : memref<4x4xf32, #tpu.memory_space<vmem>>, vector<4x4xf32>
    %c0_59 = arith.constant 0 : index
    %c0_60 = arith.constant 0 : index
    %192 = vector.load %arg15[%c0_59, %c0_60] : memref<4x1xf32, #tpu.memory_space<vmem>>, vector<4x1xf32>
    %193 = vector.extract_strided_slice %188 {offsets = [0, 0], sizes = [4, 1], strides = [1, 1]} : vector<4x4xf32> to vector<4x1xf32>
    %194 = vector.extract_strided_slice %60 {offsets = [0, 0], sizes = [1, 144], strides = [1, 1]} : vector<4x144xf32> to vector<1x144xf32>
    %195 = vector.broadcast %193 : vector<4x1xf32> to vector<4x144xf32>
    %196 = vector.broadcast %194 : vector<1x144xf32> to vector<4x144xf32>
    %197 = arith.mulf %195, %196 : vector<4x144xf32>
    %198 = vector.extract_strided_slice %188 {offsets = [0, 1], sizes = [4, 1], strides = [1, 1]} : vector<4x4xf32> to vector<4x1xf32>
    %199 = vector.extract_strided_slice %60 {offsets = [1, 0], sizes = [1, 144], strides = [1, 1]} : vector<4x144xf32> to vector<1x144xf32>
    %200 = vector.broadcast %198 : vector<4x1xf32> to vector<4x144xf32>
    %201 = vector.broadcast %199 : vector<1x144xf32> to vector<4x144xf32>
    %202 = arith.mulf %200, %201 : vector<4x144xf32>
    %203 = arith.addf %197, %202 : vector<4x144xf32>
    %204 = vector.extract_strided_slice %188 {offsets = [0, 2], sizes = [4, 1], strides = [1, 1]} : vector<4x4xf32> to vector<4x1xf32>
    %205 = vector.extract_strided_slice %60 {offsets = [2, 0], sizes = [1, 144], strides = [1, 1]} : vector<4x144xf32> to vector<1x144xf32>
    %206 = vector.broadcast %204 : vector<4x1xf32> to vector<4x144xf32>
    %207 = vector.broadcast %205 : vector<1x144xf32> to vector<4x144xf32>
    %208 = arith.mulf %206, %207 : vector<4x144xf32>
    %209 = arith.addf %203, %208 : vector<4x144xf32>
    %210 = vector.extract_strided_slice %188 {offsets = [0, 3], sizes = [4, 1], strides = [1, 1]} : vector<4x4xf32> to vector<4x1xf32>
    %211 = vector.extract_strided_slice %60 {offsets = [3, 0], sizes = [1, 144], strides = [1, 1]} : vector<4x144xf32> to vector<1x144xf32>
    %212 = vector.broadcast %210 : vector<4x1xf32> to vector<4x144xf32>
    %213 = vector.broadcast %211 : vector<1x144xf32> to vector<4x144xf32>
    %214 = arith.mulf %212, %213 : vector<4x144xf32>
    %215 = arith.addf %209, %214 : vector<4x144xf32>
    %216 = vector.extract_strided_slice %189 {offsets = [0, 0], sizes = [4, 1], strides = [1, 1]} : vector<4x4xf32> to vector<4x1xf32>
    %217 = vector.extract_strided_slice %105 {offsets = [0, 0], sizes = [1, 144], strides = [1, 1]} : vector<4x144xf32> to vector<1x144xf32>
    %218 = vector.broadcast %216 : vector<4x1xf32> to vector<4x144xf32>
    %219 = vector.broadcast %217 : vector<1x144xf32> to vector<4x144xf32>
    %220 = arith.mulf %218, %219 : vector<4x144xf32>
    %221 = vector.extract_strided_slice %189 {offsets = [0, 1], sizes = [4, 1], strides = [1, 1]} : vector<4x4xf32> to vector<4x1xf32>
    %222 = vector.extract_strided_slice %105 {offsets = [1, 0], sizes = [1, 144], strides = [1, 1]} : vector<4x144xf32> to vector<1x144xf32>
    %223 = vector.broadcast %221 : vector<4x1xf32> to vector<4x144xf32>
    %224 = vector.broadcast %222 : vector<1x144xf32> to vector<4x144xf32>
    %225 = arith.mulf %223, %224 : vector<4x144xf32>
    %226 = arith.addf %220, %225 : vector<4x144xf32>
    %227 = vector.extract_strided_slice %189 {offsets = [0, 2], sizes = [4, 1], strides = [1, 1]} : vector<4x4xf32> to vector<4x1xf32>
    %228 = vector.extract_strided_slice %105 {offsets = [2, 0], sizes = [1, 144], strides = [1, 1]} : vector<4x144xf32> to vector<1x144xf32>
    %229 = vector.broadcast %227 : vector<4x1xf32> to vector<4x144xf32>
    %230 = vector.broadcast %228 : vector<1x144xf32> to vector<4x144xf32>
    %231 = arith.mulf %229, %230 : vector<4x144xf32>
    %232 = arith.addf %226, %231 : vector<4x144xf32>
    %233 = vector.extract_strided_slice %189 {offsets = [0, 3], sizes = [4, 1], strides = [1, 1]} : vector<4x4xf32> to vector<4x1xf32>
    %234 = vector.extract_strided_slice %105 {offsets = [3, 0], sizes = [1, 144], strides = [1, 1]} : vector<4x144xf32> to vector<1x144xf32>
    %235 = vector.broadcast %233 : vector<4x1xf32> to vector<4x144xf32>
    %236 = vector.broadcast %234 : vector<1x144xf32> to vector<4x144xf32>
    %237 = arith.mulf %235, %236 : vector<4x144xf32>
    %238 = arith.addf %232, %237 : vector<4x144xf32>
    %239 = arith.addf %215, %238 : vector<4x144xf32>
    %240 = vector.broadcast %190 : vector<4x1xf32> to vector<4x144xf32>
    %241 = arith.addf %239, %240 : vector<4x144xf32>
    %cst_61 = arith.constant 1.000000e-01 : f32
    %242 = vector.broadcast %cst_61 : f32 to vector<4x144xf32>
    %243 = arith.mulf %242, %241 : vector<4x144xf32>
    %244 = arith.maximumf %241, %243 : vector<4x144xf32>
    %245 = vector.extract_strided_slice %191 {offsets = [0, 0], sizes = [4, 1], strides = [1, 1]} : vector<4x4xf32> to vector<4x1xf32>
    %246 = vector.extract_strided_slice %244 {offsets = [0, 0], sizes = [1, 144], strides = [1, 1]} : vector<4x144xf32> to vector<1x144xf32>
    %247 = vector.broadcast %245 : vector<4x1xf32> to vector<4x144xf32>
    %248 = vector.broadcast %246 : vector<1x144xf32> to vector<4x144xf32>
    %249 = arith.mulf %247, %248 : vector<4x144xf32>
    %250 = vector.extract_strided_slice %191 {offsets = [0, 1], sizes = [4, 1], strides = [1, 1]} : vector<4x4xf32> to vector<4x1xf32>
    %251 = vector.extract_strided_slice %244 {offsets = [1, 0], sizes = [1, 144], strides = [1, 1]} : vector<4x144xf32> to vector<1x144xf32>
    %252 = vector.broadcast %250 : vector<4x1xf32> to vector<4x144xf32>
    %253 = vector.broadcast %251 : vector<1x144xf32> to vector<4x144xf32>
    %254 = arith.mulf %252, %253 : vector<4x144xf32>
    %255 = arith.addf %249, %254 : vector<4x144xf32>
    %256 = vector.extract_strided_slice %191 {offsets = [0, 2], sizes = [4, 1], strides = [1, 1]} : vector<4x4xf32> to vector<4x1xf32>
    %257 = vector.extract_strided_slice %244 {offsets = [2, 0], sizes = [1, 144], strides = [1, 1]} : vector<4x144xf32> to vector<1x144xf32>
    %258 = vector.broadcast %256 : vector<4x1xf32> to vector<4x144xf32>
    %259 = vector.broadcast %257 : vector<1x144xf32> to vector<4x144xf32>
    %260 = arith.mulf %258, %259 : vector<4x144xf32>
    %261 = arith.addf %255, %260 : vector<4x144xf32>
    %262 = vector.extract_strided_slice %191 {offsets = [0, 3], sizes = [4, 1], strides = [1, 1]} : vector<4x4xf32> to vector<4x1xf32>
    %263 = vector.extract_strided_slice %244 {offsets = [3, 0], sizes = [1, 144], strides = [1, 1]} : vector<4x144xf32> to vector<1x144xf32>
    %264 = vector.broadcast %262 : vector<4x1xf32> to vector<4x144xf32>
    %265 = vector.broadcast %263 : vector<1x144xf32> to vector<4x144xf32>
    %266 = arith.mulf %264, %265 : vector<4x144xf32>
    %267 = arith.addf %261, %266 : vector<4x144xf32>
    %268 = vector.broadcast %192 : vector<4x1xf32> to vector<4x144xf32>
    %269 = arith.addf %267, %268 : vector<4x144xf32>
    %270 = math.cos %269 : vector<4x144xf32>
    %271 = arith.mulf %187, %270 : vector<4x144xf32>
    %cst_62 = arith.constant 2.000000e-08 : f32
    %272 = vector.broadcast %cst_62 : f32 to vector<4x144xf32>
    %273 = arith.addf %271, %272 : vector<4x144xf32>
    %c0_63 = arith.constant 0 : index
    %c0_64 = arith.constant 0 : index
    %c0_65 = arith.constant 0 : index
    %274 = vector.load %arg16[%c0_63, %c0_64, %c0_65] : memref<1x4x144xf32, #tpu.memory_space<vmem>>, vector<1x4x144xf32>
    %275 = vector.shape_cast %274 : vector<1x4x144xf32> to vector<4x144xf32>
    %276 = vector.shape_cast %273 : vector<4x144xf32> to vector<1x4x144xf32>
    tpu.vector_store %arg16[%c0_63, %c0_64, %c0_65], %276 {strides = array<i32>} : memref<1x4x144xf32, #tpu.memory_space<vmem>>, vector<1x4x144xf32>,
    %277 = math.sin %269 : vector<4x144xf32>
    %278 = arith.mulf %187, %277 : vector<4x144xf32>
    %cst_66 = arith.constant 9.99999993E-9 : f32
    %279 = vector.broadcast %cst_66 : f32 to vector<4x144xf32>
    %280 = arith.addf %278, %279 : vector<4x144xf32>
    %c0_67 = arith.constant 0 : index
    %c0_68 = arith.constant 0 : index
    %c0_69 = arith.constant 0 : index
    %281 = vector.load %arg17[%c0_67, %c0_68, %c0_69] : memref<1x4x144xf32, #tpu.memory_space<vmem>>, vector<1x4x144xf32>
    %282 = vector.shape_cast %281 : vector<1x4x144xf32> to vector<4x144xf32>
    %283 = vector.shape_cast %280 : vector<4x144xf32> to vector<1x4x144xf32>
    tpu.vector_store %arg17[%c0_67, %c0_68, %c0_69], %283 {strides = array<i32>} : memref<1x4x144xf32, #tpu.memory_space<vmem>>, vector<1x4x144xf32>,
    return
  }
  func.func @transform_0(%arg0: i32, %arg1: i32) -> (i32, i32, i32) {
    %c0_i32 = arith.constant 0 : i32
    %c0_i32_0 = arith.constant 0 : i32
    return %arg0, %c0_i32, %arg1 : i32, i32, i32
  }
  func.func @transform_1(%arg0: i32, %arg1: i32) -> (i32, i32, i32) {
    %c0_i32 = arith.constant 0 : i32
    %c0_i32_0 = arith.constant 0 : i32
    return %arg0, %c0_i32, %arg1 : i32, i32, i32
  }
  func.func @transform_2(%arg0: i32, %arg1: i32) -> (i32, i32, i32) {
    %c0_i32 = arith.constant 0 : i32
    %c0_i32_0 = arith.constant 0 : i32
    return %arg0, %c0_i32, %arg1 : i32, i32, i32
  }
  func.func @transform_3(%arg0: i32, %arg1: i32) -> (i32, i32, i32) {
    %c0_i32 = arith.constant 0 : i32
    %c0_i32_0 = arith.constant 0 : i32
    return %arg0, %c0_i32, %arg1 : i32, i32, i32
  }
  func.func @transform_4(%arg0: i32, %arg1: i32) -> (i32, i32) {
    %c0_i32 = arith.constant 0 : i32
    %c0_i32_0 = arith.constant 0 : i32
    %c0_i32_1 = arith.constant 0 : i32
    return %c0_i32, %c0_i32_0 : i32, i32
  }
  func.func @transform_5(%arg0: i32, %arg1: i32) -> (i32, i32) {
    %c0_i32 = arith.constant 0 : i32
    %c0_i32_0 = arith.constant 0 : i32
    %c0_i32_1 = arith.constant 0 : i32
    return %c0_i32, %c0_i32_0 : i32, i32
  }
  func.func @transform_6(%arg0: i32, %arg1: i32) -> (i32, i32) {
    %c0_i32 = arith.constant 0 : i32
    %c0_i32_0 = arith.constant 0 : i32
    %c0_i32_1 = arith.constant 0 : i32
    return %c0_i32, %c0_i32_0 : i32, i32
  }
  func.func @transform_7(%arg0: i32, %arg1: i32) -> (i32, i32) {
    %c0_i32 = arith.constant 0 : i32
    %c0_i32_0 = arith.constant 0 : i32
    %c0_i32_1 = arith.constant 0 : i32
    return %c0_i32, %c0_i32_0 : i32, i32
  }
  func.func @transform_8(%arg0: i32, %arg1: i32) -> (i32, i32) {
    %c0_i32 = arith.constant 0 : i32
    %c0_i32_0 = arith.constant 0 : i32
    %c0_i32_1 = arith.constant 0 : i32
    return %c0_i32, %c0_i32_0 : i32, i32
  }
  func.func @transform_9(%arg0: i32, %arg1: i32) -> (i32, i32) {
    %c0_i32 = arith.constant 0 : i32
    %c0_i32_0 = arith.constant 0 : i32
    %c0_i32_1 = arith.constant 0 : i32
    return %c0_i32, %c0_i32_0 : i32, i32
  }
  func.func @transform_10(%arg0: i32, %arg1: i32) -> (i32, i32) {
    %c0_i32 = arith.constant 0 : i32
    %c0_i32_0 = arith.constant 0 : i32
    %c0_i32_1 = arith.constant 0 : i32
    return %c0_i32, %c0_i32_0 : i32, i32
  }
  func.func @transform_11(%arg0: i32, %arg1: i32) -> (i32, i32) {
    %c0_i32 = arith.constant 0 : i32
    %c0_i32_0 = arith.constant 0 : i32
    %c0_i32_1 = arith.constant 0 : i32
    return %c0_i32, %c0_i32_0 : i32, i32
  }
  func.func @transform_12(%arg0: i32, %arg1: i32) -> (i32, i32) {
    %c0_i32 = arith.constant 0 : i32
    %c0_i32_0 = arith.constant 0 : i32
    %c0_i32_1 = arith.constant 0 : i32
    return %c0_i32, %c0_i32_0 : i32, i32
  }
  func.func @transform_13(%arg0: i32, %arg1: i32) -> (i32, i32) {
    %c0_i32 = arith.constant 0 : i32
    %c0_i32_0 = arith.constant 0 : i32
    %c0_i32_1 = arith.constant 0 : i32
    return %c0_i32, %c0_i32_0 : i32, i32
  }
  func.func @transform_14(%arg0: i32, %arg1: i32) -> (i32, i32, i32) {
    %c0_i32 = arith.constant 0 : i32
    %c0_i32_0 = arith.constant 0 : i32
    return %arg0, %c0_i32, %arg1 : i32, i32, i32
  }
  func.func @transform_15(%arg0: i32, %arg1: i32) -> (i32, i32, i32) {
    %c0_i32 = arith.constant 0 : i32
    %c0_i32_0 = arith.constant 0 : i32
    return %arg0, %c0_i32, %arg1 : i32, i32, i32
  }
}

module attributes {stable_mosaic.version = 11 : i64} {
  func.func @_post_kernel(%arg0: i32, %arg1: i32, %arg2: memref<1x4x256xf32, #tpu.memory_space<vmem>>, %arg3: memref<4x4xf32, #tpu.memory_space<vmem>>, %arg4: memref<4x1xf32, #tpu.memory_space<vmem>>, %arg5: memref<1x4x256xf32, #tpu.memory_space<vmem>>) attributes {dimension_semantics = [#tpu.dimension_semantics<parallel>, #tpu.dimension_semantics<parallel>], iteration_bounds = array<i64: 2, 1>, scalar_prefetch = 0 : i64, scratch_operands = 0 : i64, tpu.core_type = #tpu.core_type<tc>, window_params = [{transform_indices = @transform_0, window_bounds = array<i64: 1, 4, 256>}, {pipeline_mode = #tpu.pipeline_mode<synchronous>, transform_indices = @transform_1, window_bounds = array<i64: 4, 4>}, {pipeline_mode = #tpu.pipeline_mode<synchronous>, transform_indices = @transform_2, window_bounds = array<i64: 4, 1>}, {transform_indices = @transform_3, window_bounds = array<i64: 1, 4, 256>}]} {
    %c0 = arith.constant 0 : index
    %c0_0 = arith.constant 0 : index
    %0 = vector.load %arg3[%c0, %c0_0] : memref<4x4xf32, #tpu.memory_space<vmem>>, vector<4x4xf32>
    %c0_1 = arith.constant 0 : index
    %c0_2 = arith.constant 0 : index
    %c0_3 = arith.constant 0 : index
    %1 = vector.load %arg2[%c0_1, %c0_2, %c0_3] : memref<1x4x256xf32, #tpu.memory_space<vmem>>, vector<1x4x256xf32>
    %2 = vector.shape_cast %1 : vector<1x4x256xf32> to vector<4x256xf32>
    %3 = math.absf %2 : vector<4x256xf32>
    %4 = vector.extract_strided_slice %0 {offsets = [0, 0], sizes = [4, 1], strides = [1, 1]} : vector<4x4xf32> to vector<4x1xf32>
    %5 = vector.extract_strided_slice %3 {offsets = [0, 0], sizes = [1, 256], strides = [1, 1]} : vector<4x256xf32> to vector<1x256xf32>
    %6 = vector.broadcast %4 : vector<4x1xf32> to vector<4x256xf32>
    %7 = vector.broadcast %5 : vector<1x256xf32> to vector<4x256xf32>
    %8 = arith.mulf %6, %7 : vector<4x256xf32>
    %9 = vector.extract_strided_slice %0 {offsets = [0, 1], sizes = [4, 1], strides = [1, 1]} : vector<4x4xf32> to vector<4x1xf32>
    %10 = vector.extract_strided_slice %3 {offsets = [1, 0], sizes = [1, 256], strides = [1, 1]} : vector<4x256xf32> to vector<1x256xf32>
    %11 = vector.broadcast %9 : vector<4x1xf32> to vector<4x256xf32>
    %12 = vector.broadcast %10 : vector<1x256xf32> to vector<4x256xf32>
    %13 = arith.mulf %11, %12 : vector<4x256xf32>
    %14 = arith.addf %8, %13 : vector<4x256xf32>
    %15 = vector.extract_strided_slice %0 {offsets = [0, 2], sizes = [4, 1], strides = [1, 1]} : vector<4x4xf32> to vector<4x1xf32>
    %16 = vector.extract_strided_slice %3 {offsets = [2, 0], sizes = [1, 256], strides = [1, 1]} : vector<4x256xf32> to vector<1x256xf32>
    %17 = vector.broadcast %15 : vector<4x1xf32> to vector<4x256xf32>
    %18 = vector.broadcast %16 : vector<1x256xf32> to vector<4x256xf32>
    %19 = arith.mulf %17, %18 : vector<4x256xf32>
    %20 = arith.addf %14, %19 : vector<4x256xf32>
    %21 = vector.extract_strided_slice %0 {offsets = [0, 3], sizes = [4, 1], strides = [1, 1]} : vector<4x4xf32> to vector<4x1xf32>
    %22 = vector.extract_strided_slice %3 {offsets = [3, 0], sizes = [1, 256], strides = [1, 1]} : vector<4x256xf32> to vector<1x256xf32>
    %23 = vector.broadcast %21 : vector<4x1xf32> to vector<4x256xf32>
    %24 = vector.broadcast %22 : vector<1x256xf32> to vector<4x256xf32>
    %25 = arith.mulf %23, %24 : vector<4x256xf32>
    %26 = arith.addf %20, %25 : vector<4x256xf32>
    %c0_4 = arith.constant 0 : index
    %c0_5 = arith.constant 0 : index
    %27 = vector.load %arg4[%c0_4, %c0_5] : memref<4x1xf32, #tpu.memory_space<vmem>>, vector<4x1xf32>
    %28 = vector.broadcast %27 : vector<4x1xf32> to vector<4x256xf32>
    %29 = arith.addf %26, %28 : vector<4x256xf32>
    %c0_6 = arith.constant 0 : index
    %c0_7 = arith.constant 0 : index
    %c0_8 = arith.constant 0 : index
    %30 = vector.load %arg5[%c0_6, %c0_7, %c0_8] : memref<1x4x256xf32, #tpu.memory_space<vmem>>, vector<1x4x256xf32>
    %31 = vector.shape_cast %30 : vector<1x4x256xf32> to vector<4x256xf32>
    %32 = vector.shape_cast %29 : vector<4x256xf32> to vector<1x4x256xf32>
    tpu.vector_store %arg5[%c0_6, %c0_7, %c0_8], %32 {strides = array<i32>} : memref<1x4x256xf32, #tpu.memory_space<vmem>>, vector<1x4x256xf32>,
    return
  }
  func.func @transform_0(%arg0: i32, %arg1: i32) -> (i32, i32, i32) {
    %c0_i32 = arith.constant 0 : i32
    %c0_i32_0 = arith.constant 0 : i32
    return %arg0, %c0_i32, %arg1 : i32, i32, i32
  }
  func.func @transform_1(%arg0: i32, %arg1: i32) -> (i32, i32) {
    %c0_i32 = arith.constant 0 : i32
    %c0_i32_0 = arith.constant 0 : i32
    %c0_i32_1 = arith.constant 0 : i32
    return %c0_i32, %c0_i32_0 : i32, i32
  }
  func.func @transform_2(%arg0: i32, %arg1: i32) -> (i32, i32) {
    %c0_i32 = arith.constant 0 : i32
    %c0_i32_0 = arith.constant 0 : i32
    %c0_i32_1 = arith.constant 0 : i32
    return %c0_i32, %c0_i32_0 : i32, i32
  }
  func.func @transform_3(%arg0: i32, %arg1: i32) -> (i32, i32, i32) {
    %c0_i32 = arith.constant 0 : i32
    %c0_i32_0 = arith.constant 0 : i32
    return %arg0, %c0_i32, %arg1 : i32, i32, i32
  }
}

</mosaic_0001>

<llo_original>
// kernel: freprocess_forward.3
$region0: #{freprocess_forward.3}
  #allocation0 [shape = 'u32[]', space=smem, size = 0x4, offset = 0x4, fixed_abs, tag = 'smem constant byte address 0x4 - core index']
  #allocation1 [shape = 'u32[144,128]{1,0:T(1,128)}', space=vmem, size = 0x12000, scoped, tag = 'internal scratch']
  %s0 = inlined_call_operand.hbm [shape: f32[2,4,256], index: 0, kind: input, shape index: {}]
  %s1 = inlined_call_operand.hbm [shape: f32[2,4,256], index: 1, kind: input, shape index: {}]
  %s2 = inlined_call_operand.hbm [shape: f32[4,4], index: 2, kind: input, shape index: {}]
  %s3 = inlined_call_operand.hbm [shape: f32[4,1], index: 3, kind: input, shape index: {}]
  %s4 = inlined_call_operand.hbm [shape: f32[4,4], index: 4, kind: input, shape index: {}]
  %s5 = inlined_call_operand.hbm [shape: f32[4,1], index: 5, kind: input, shape index: {}]
  %s6 = inlined_call_operand.hbm [shape: f32[2,4,256], index: 6, kind: output, shape index: {0}]
  %s7 = inlined_call_operand.hbm [shape: f32[2,4,256], index: 7, kind: output, shape index: {1}]
  %8 = xla_tuple %s6, %s7
  %s9 = sld [smem:[#allocation0]]
  $region89: #{freprocess_forward.3} parent=0
    _
  %s11 = ssub.s32 1, %s9
  %s12 = scalar_select 0, %s11, %s9
  $region1: #{freprocess_forward.3} parent=0
    #allocation2 [shape = 'u8[8192]{0}', space=vmem, size = 0x2000, scoped, tag = 'input window, operand 0']
    #allocation3 [shape = 's32[2]{0}', space=sflag, size = 0x8, scoped, tag = 'scoped memory for freprocess_forward.3']
    #allocation4 [shape = 's32[2]{0}', space=sflag, size = 0x8, scoped, tag = 'scoped memory for freprocess_forward.3']
    #allocation5 [shape = 'u8[8192]{0}', space=vmem, size = 0x2000, scoped, tag = 'input window, operand 1']
    #allocation6 [shape = 's32[2]{0}', space=sflag, size = 0x8, scoped, tag = 'scoped memory for freprocess_forward.3']
    #allocation7 [shape = 'u8[2048]{0}', space=vmem, size = 0x800, scoped, tag = 'input window, operand 2, single buffered']
    #allocation8 [shape = 'u8[2048]{0}', space=vmem, size = 0x800, scoped, tag = 'input window, operand 3, single buffered']
    #allocation9 [shape = 's32[1]{0}', space=sflag, size = 0x4, scoped, tag = 'scoped memory for freprocess_forward.3']
    #allocation10 [shape = 'u8[2048]{0}', space=vmem, size = 0x800, scoped, tag = 'input window, operand 4, single buffered']
    #allocation11 [shape = 'u8[2048]{0}', space=vmem, size = 0x800, scoped, tag = 'input window, operand 5, single buffered']
    #allocation12 [shape = 's32[1]{0}', space=sflag, size = 0x4, scoped, tag = 'scoped memory for freprocess_forward.3']
    #allocation13 [shape = 'u8[8192]{0}', space=vmem, size = 0x2000, scoped, tag = 'output window, operand 0']
    #allocation14 [shape = 'u8[8192]{0}', space=vmem, size = 0x2000, scoped, tag = 'output window, operand 1']
    #allocation15 [shape = 's32[2]{0}', space=sflag, size = 0x8, scoped, tag = 'scoped memory for freprocess_forward.3']
    %13 = vsyncpa [#allocation3], 0
    %s14 = scalar_lea.sflag [#allocation3], 1
    %15 = vsyncpa %s14, 0
    %16 = vsyncpa [#allocation6], 0
    %s17 = scalar_lea.sflag [#allocation6], 1
    %18 = vsyncpa %s17, 0
    %19 = vsyncpa [#allocation9], 0
    %20 = vsyncpa [#allocation12], 0
    %21 = vsyncpa [#allocation4], 0
    %s22 = scalar_lea.sflag [#allocation4], 1
    %23 = vsyncpa %s22, 0
    %24 = vsyncpa [#allocation15], 0
    %s25 = scalar_lea.sflag [#allocation15], 1
    %26 = vsyncpa %s25, 0
    loop: start=0, step=1, limit=4
    $region2: #{freprocess_forward.3} parent=1 // loop_pre_header
      _
    $region3: #{freprocess_forward.3} parent=1 // loop_header
      %s28 = sphi 0, %s32
      %p29 = scmp.ge.s32.totalorder %s28, 4
      %s35 = sphi 0, %s47
      %s36 = sphi 0, %s43
      %s37 = sphi 0, %s35
      %s38 = sphi 0, %s36
      %s39 = sphi 0, %s37
      %s40 = sphi 0, %s38
      %s52 = sphi 0, %s54
      %s55 = sphi 0, %s52
      %s56 = sphi 0, %s55
      %s72 = sphi 0, %s56
      %s80 = sphi 0, %s82
      %s83 = sphi 0, %s80
      %s84 = sphi 0, %s83
      %s100 = sphi 0, %s84
      %s104 = sphi 0, %s104
      %s106 = sphi 0, %s104
      %s107 = sphi 0, %s106
      %s121 = sphi 0, %s107
      %s125 = sphi 0, %s125
      %s127 = sphi 0, %s125
      %s128 = sphi 0, %s127
      %s142 = sphi 0, %s128
      %s146 = sphi 0, %s146
      %s148 = sphi 0, %s146
      %s149 = sphi 0, %s148
      %s163 = sphi 0, %s149
      %s167 = sphi 0, %s167
      %s169 = sphi 0, %s167
      %s170 = sphi 0, %s169
      %s184 = sphi 0, %s170
      %s192 = sphi 0, %s194
      %s195 = sphi 0, %s192
      %s196 = sphi 0, %s195
      %s212 = sphi 0, %s196
      %s220 = sphi 0, %s222
      %s223 = sphi 0, %s220
      %s224 = sphi 0, %s223
      %s240 = sphi 0, %s224
    $region4: #{freprocess_forward.3} parent=1 // loop_header_branch
      %31 = sbr.rel (%p29) target = $region8
    $region5: #{freprocess_forward.3} parent=1 // loop_body
      %s33 = ssub.s32 %s28, 1
      %s34 = ssub.s32 %s28, 2
      %s41 = sadd.s32 1, %s36
      %p42 = scmp.ge.s32.totalorder %s41, 1
      %s43 = scalar_select %p42, 0, %s41
      %s44 = sadd.s32 1, %s35
      %s45 = scalar_select %p42, %s44, %s35
      %p46 = scmp.ge.s32.totalorder %s45, 2
      %s47 = scalar_select %p46, 0, %s45
      %s48 = ssub.s32 %s35, %s47
      %s49 = ssub.s32 %s36, %s43
      %s50 = sor.u32 %s48, %s49
      %p51 = scmp.eq.s32.totalorder %s50, 0
      %s53 = sadd.s32 %s52, 1
      %s54 = scalar_select %p51, %s52, %s53
      %p57 = pneg %p51
      %p58 = scmp.eq.s32.totalorder %s28, 1
      %p59 = por %p57, %p58
      %p60 = scmp.ne.s32.totalorder %s52, %s55
      %p61 = scmp.eq.s32.totalorder %s28, 0
      %p62 = por %p60, %p61
      %p63 = scmp.ne.s32.totalorder %s52, %s55
      %p64 = scmp.eq.s32.totalorder %s33, 1
      %p65 = por %p63, %p64
      %p66 = scmp.ne.s32.totalorder %s55, %s56
      %p67 = scmp.eq.s32.totalorder %s33, 0
      %p68 = por %p66, %p67
      %p69 = scmp.ne.s32.totalorder %s55, %s56
      %p70 = scmp.eq.s32.totalorder %s34, 1
      %p71 = por %p69, %p70
      %p73 = scmp.ne.s32.totalorder %s56, %s72
      %p74 = scmp.eq.s32.totalorder %s34, 0
      %p75 = por %p73, %p74
      %s76 = ssub.s32 %s35, %s47
      %s77 = ssub.s32 %s36, %s43
      %s78 = sor.u32 %s76, %s77
      %p79 = scmp.eq.s32.totalorder %s78, 0
      %s81 = sadd.s32 %s80, 1
      %s82 = scalar_select %p79, %s80, %s81
      %p85 = pneg %p79
      %p86 = scmp.eq.s32.totalorder %s28, 1
      %p87 = por %p85, %p86
      %p88 = scmp.ne.s32.totalorder %s80, %s83
      %p89 = scmp.eq.s32.totalorder %s28, 0
      %p90 = por %p88, %p89
      %p91 = scmp.ne.s32.totalorder %s80, %s83
      %p92 = scmp.eq.s32.totalorder %s33, 1
      %p93 = por %p91, %p92
      %p94 = scmp.ne.s32.totalorder %s83, %s84
      %p95 = scmp.eq.s32.totalorder %s33, 0
      %p96 = por %p94, %p95
      %p97 = scmp.ne.s32.totalorder %s83, %s84
      %p98 = scmp.eq.s32.totalorder %s34, 1
      %p99 = por %p97, %p98
      %p101 = scmp.ne.s32.totalorder %s84, %s100
      %p102 = scmp.eq.s32.totalorder %s34, 0
      %p103 = por %p101, %p102
      %s105 = sadd.s32 %s104, 1
      %p108 = scmp.eq.s32.totalorder %s28, 1
      %p109 = scmp.ne.s32.totalorder %s104, %s106
      %p110 = scmp.eq.s32.totalorder %s28, 0
      %p111 = por %p109, %p110
      %p112 = scmp.ne.s32.totalorder %s104, %s106
      %p113 = scmp.eq.s32.totalorder %s33, 1
      %p114 = por %p112, %p113
      %p115 = scmp.ne.s32.totalorder %s106, %s107
      %p116 = scmp.eq.s32.totalorder %s33, 0
      %p117 = por %p115, %p116
      %p118 = scmp.ne.s32.totalorder %s106, %s107
      %p119 = scmp.eq.s32.totalorder %s34, 1
      %p120 = por %p118, %p119
      %p122 = scmp.ne.s32.totalorder %s107, %s121
      %p123 = scmp.eq.s32.totalorder %s34, 0
      %p124 = por %p122, %p123
      %s126 = sadd.s32 %s125, 1
      %p129 = scmp.eq.s32.totalorder %s28, 1
      %p130 = scmp.ne.s32.totalorder %s125, %s127
      %p131 = scmp.eq.s32.totalorder %s28, 0
      %p132 = por %p130, %p131
      %p133 = scmp.ne.s32.totalorder %s125, %s127
      %p134 = scmp.eq.s32.totalorder %s33, 1
      %p135 = por %p133, %p134
      %p136 = scmp.ne.s32.totalorder %s127, %s128
      %p137 = scmp.eq.s32.totalorder %s33, 0
      %p138 = por %p136, %p137
      %p139 = scmp.ne.s32.totalorder %s127, %s128
      %p140 = scmp.eq.s32.totalorder %s34, 1
      %p141 = por %p139, %p140
      %p143 = scmp.ne.s32.totalorder %s128, %s142
      %p144 = scmp.eq.s32.totalorder %s34, 0
      %p145 = por %p143, %p144
      %s147 = sadd.s32 %s146, 1
      %p150 = scmp.eq.s32.totalorder %s28, 1
      %p151 = scmp.ne.s32.totalorder %s146, %s148
      %p152 = scmp.eq.s32.totalorder %s28, 0
      %p153 = por %p151, %p152
      %p154 = scmp.ne.s32.totalorder %s146, %s148
      %p155 = scmp.eq.s32.totalorder %s33, 1
      %p156 = por %p154, %p155
      %p157 = scmp.ne.s32.totalorder %s148, %s149
      %p158 = scmp.eq.s32.totalorder %s33, 0
      %p159 = por %p157, %p158
      %p160 = scmp.ne.s32.totalorder %s148, %s149
      %p161 = scmp.eq.s32.totalorder %s34, 1
      %p162 = por %p160, %p161
      %p164 = scmp.ne.s32.totalorder %s149, %s163
      %p165 = scmp.eq.s32.totalorder %s34, 0
      %p166 = por %p164, %p165
      %s168 = sadd.s32 %s167, 1
      %p171 = scmp.eq.s32.totalorder %s28, 1
      %p172 = scmp.ne.s32.totalorder %s167, %s169
      %p173 = scmp.eq.s32.totalorder %s28, 0
      %p174 = por %p172, %p173
      %p175 = scmp.ne.s32.totalorder %s167, %s169
      %p176 = scmp.eq.s32.totalorder %s33, 1
      %p177 = por %p175, %p176
      %p178 = scmp.ne.s32.totalorder %s169, %s170
      %p179 = scmp.eq.s32.totalorder %s33, 0
      %p180 = por %p178, %p179
      %p181 = scmp.ne.s32.totalorder %s169, %s170
      %p182 = scmp.eq.s32.totalorder %s34, 1
      %p183 = por %p181, %p182
      %p185 = scmp.ne.s32.totalorder %s170, %s184
      %p186 = scmp.eq.s32.totalorder %s34, 0
      %p187 = por %p185, %p186
      %s188 = ssub.s32 %s35, %s47
      %s189 = ssub.s32 %s36, %s43
      %s190 = sor.u32 %s188, %s189
      %p191 = scmp.eq.s32.totalorder %s190, 0
      %s193 = sadd.s32 %s192, 1
      %s194 = scalar_select %p191, %s192, %s193
      %p197 = pneg %p191
      %p198 = scmp.eq.s32.totalorder %s28, 1
      %p199 = por %p197, %p198
      %p200 = scmp.ne.s32.totalorder %s192, %s195
      %p201 = scmp.eq.s32.totalorder %s28, 0
      %p202 = por %p200, %p201
      %p203 = scmp.ne.s32.totalorder %s192, %s195
      %p204 = scmp.eq.s32.totalorder %s33, 1
      %p205 = por %p203, %p204
      %p206 = scmp.ne.s32.totalorder %s195, %s196
      %p207 = scmp.eq.s32.totalorder %s33, 0
      %p208 = por %p206, %p207
      %p209 = scmp.ne.s32.totalorder %s195, %s196
      %p210 = scmp.eq.s32.totalorder %s34, 1
      %p211 = por %p209, %p210
      %p213 = scmp.ne.s32.totalorder %s196, %s212
      %p214 = scmp.eq.s32.totalorder %s34, 0
      %p215 = por %p213, %p214
      %s216 = ssub.s32 %s35, %s47
      %s217 = ssub.s32 %s36, %s43
      %s218 = sor.u32 %s216, %s217
      %p219 = scmp.eq.s32.totalorder %s218, 0
      %s221 = sadd.s32 %s220, 1
      %s222 = scalar_select %p219, %s220, %s221
      %p225 = pneg %p219
      %p226 = scmp.eq.s32.totalorder %s28, 1
      %p227 = por %p225, %p226
      %p228 = scmp.ne.s32.totalorder %s220, %s223
      %p229 = scmp.eq.s32.totalorder %s28, 0
      %p230 = por %p228, %p229
      %p231 = scmp.ne.s32.totalorder %s220, %s223
      %p232 = scmp.eq.s32.totalorder %s33, 1
      %p233 = por %p231, %p232
      %p234 = scmp.ne.s32.totalorder %s223, %s224
      %p235 = scmp.eq.s32.totalorder %s33, 0
      %p236 = por %p234, %p235
      %p237 = scmp.ne.s32.totalorder %s223, %s224
      %p238 = scmp.eq.s32.totalorder %s34, 1
      %p239 = por %p237, %p238
      %p241 = scmp.ne.s32.totalorder %s224, %s240
      %p242 = scmp.eq.s32.totalorder %s34, 0
      %p243 = por %p241, %p242
      %p244 = scmp.le.s32.totalorder 1, %s28
      %p245 = scmp.lt.s32.totalorder %s28, 3
      %p246 = pnand %p244, %p245
      %p247 = pneg %p246
      // Predicated region
      $region9: #{freprocess_forward.3} parent=5 // pred_check
        _
      $region10: #{freprocess_forward.3} parent=5 // pred_check_branch
        %249 = sbr.rel (%p246) target = $region12
      $region11: #{freprocess_forward.3} parent=5 // pred_region
        %s250 = ssub.s32 %s28, 1
        // Predicated region
        $region13: #{freprocess_forward.3} parent=11 // pred_check
          %p251 = pneg %p117
        $region14: #{freprocess_forward.3} parent=11 // pred_check_branch
          %253 = sbr.rel (%p251) target = $region16
        $region15: #{freprocess_forward.3} parent=11 // pred_region
          %s255 = ssub.s32 64, 64
          %256 = vsyncadd [#allocation6], %s255
          %s258 = sshll.u32 [#allocation7], 4
          %s259 = int_to_ptr.vmem [resolvable:$true] %s258
          %261 = dma.hbm_to_vmem [thread:$0]  %s2, 64, %s259, [#allocation6]
        $region16: #{freprocess_forward.3} parent=11 // pred_fallthru
          _
        // Predicated region
        $region17: #{freprocess_forward.3} parent=11 // pred_check
          %p262 = pneg %p138
        $region18: #{freprocess_forward.3} parent=11 // pred_check_branch
          %264 = sbr.rel (%p262) target = $region20
        $region19: #{freprocess_forward.3} parent=11 // pred_region
          %s266 = ssub.s32 64, 64
          %267 = vsyncadd [#allocation9], %s266
          %s269 = sshll.u32 [#allocation8], 4
          %s270 = int_to_ptr.vmem [resolvable:$true] %s269
          %272 = dma.hbm_to_vmem [thread:$0]  %s3, 64, %s270, [#allocation9]
        $region20: #{freprocess_forward.3} parent=11 // pred_fallthru
          _
        // Predicated region
        $region21: #{freprocess_forward.3} parent=11 // pred_check
          %p273 = pneg %p159
        $region22: #{freprocess_forward.3} parent=11 // pred_check_branch
          %275 = sbr.rel (%p273) target = $region24
        $region23: #{freprocess_forward.3} parent=11 // pred_region
          %s277 = ssub.s32 64, 64
          %278 = vsyncadd [#allocation9], %s277
          %s280 = sshll.u32 [#allocation10], 4
          %s281 = int_to_ptr.vmem [resolvable:$true] %s280
          %283 = dma.hbm_to_vmem [thread:$0]  %s4, 64, %s281, [#allocation9]
        $region24: #{freprocess_forward.3} parent=11 // pred_fallthru
          _
        // Predicated region
        $region25: #{freprocess_forward.3} parent=11 // pred_check
          %p284 = pneg %p180
        $region26: #{freprocess_forward.3} parent=11 // pred_check_branch
          %286 = sbr.rel (%p284) target = $region28
        $region27: #{freprocess_forward.3} parent=11 // pred_region
          %s288 = ssub.s32 64, 64
          %289 = vsyncadd [#allocation12], %s288
          %s291 = sshll.u32 [#allocation11], 4
          %s292 = int_to_ptr.vmem [resolvable:$true] %s291
          %294 = dma.hbm_to_vmem [thread:$0]  %s5, 64, %s292, [#allocation12]
        $region28: #{freprocess_forward.3} parent=11 // pred_fallthru
          _
      $region12: #{freprocess_forward.3} parent=5 // pred_fallthru
        _
      %p295 = scmp.lt.s32.totalorder %s28, 2
      // Predicated region
      $region29: #{freprocess_forward.3} parent=5 // pred_check
        %p296 = pneg %p295
      $region30: #{freprocess_forward.3} parent=5 // pred_check_branch
        %298 = sbr.rel (%p296) target = $region32
      $region31: #{freprocess_forward.3} parent=5 // pred_region
        // Predicated region
        $region33: #{freprocess_forward.3} parent=31 // pred_check
          %p299 = pneg %p62
        $region34: #{freprocess_forward.3} parent=31 // pred_check_branch
          %301 = sbr.rel (%p299) target = $region36
        $region35: #{freprocess_forward.3} parent=31 // pred_region
          %s302 = sand.u32 %s52, 1
          %s303 = scalar_lea.sflag [#allocation3], %s302
          %s304 = sand.u32 %s52, 1
          %s305 = smul.addr %s304, 8
          %s306 = scalar_lea.vmem [#allocation2], %s305
          %s307 = smul.u32 2, %s36
          %s309 = ssub.s32 128, 128
          %310 = vsyncadd %s303, %s309
          %s311 = smul.addr %s35, 2
          %s312 = sadd.s32 %s307, %s311
          %s313 = smul.addr %s312, 64
          %s314 = scalar_lea.hbm %s0, %s313
          %s316 = sshll.u32 %s306, 4
          %s317 = int_to_ptr.vmem [resolvable:$true] %s316
          %319 = dma.hbm_to_vmem [thread:$0]  %s314, 128, %s317, %s303
        $region36: #{freprocess_forward.3} parent=31 // pred_fallthru
          _
        // Predicated region
        $region37: #{freprocess_forward.3} parent=31 // pred_check
          %p320 = pneg %p90
        $region38: #{freprocess_forward.3} parent=31 // pred_check_branch
          %322 = sbr.rel (%p320) target = $region40
        $region39: #{freprocess_forward.3} parent=31 // pred_region
          %s323 = sand.u32 %s28, 1
          %s324 = scalar_lea.sflag [#allocation6], %s323
          %s325 = sand.u32 %s80, 1
          %s326 = smul.addr %s325, 8
          %s327 = scalar_lea.vmem [#allocation5], %s326
          %s328 = smul.u32 2, %s36
          %s330 = ssub.s32 128, 128
          %331 = vsyncadd %s324, %s330
          %s332 = smul.addr %s35, 2
          %s333 = sadd.s32 %s328, %s332
          %s334 = smul.addr %s333, 64
          %s335 = scalar_lea.hbm %s1, %s334
          %s337 = sshll.u32 %s327, 4
          %s338 = int_to_ptr.vmem [resolvable:$true] %s337
          %340 = dma.hbm_to_vmem [thread:$0]  %s335, 128, %s338, %s324
        $region40: #{freprocess_forward.3} parent=31 // pred_fallthru
          _
      $region32: #{freprocess_forward.3} parent=5 // pred_fallthru
        _
      %p341 = scmp.le.s32.totalorder 1, %s28
      %p342 = scmp.lt.s32.totalorder %s28, 3
      %p343 = pnand %p341, %p342
      %p344 = pneg %p343
      // Predicated region
      $region41: #{freprocess_forward.3} parent=5 // pred_check
        _
      $region42: #{freprocess_forward.3} parent=5 // pred_check_branch
        %346 = sbr.rel (%p343) target = $region44
      $region43: #{freprocess_forward.3} parent=5 // pred_region
        %s347 = ssub.s32 %s28, 1
        %s348 = sand.u32 %s55, 1
        %s349 = scalar_lea.sflag [#allocation3], %s348
        %s350 = sand.u32 %s55, 1
        %s351 = smul.addr %s350, 8
        %s352 = scalar_lea.vmem [#allocation2], %s351
        // Predicated region
        $region45: #{freprocess_forward.3} parent=43 // pred_check
          %p353 = pneg %p68
        $region46: #{freprocess_forward.3} parent=43 // pred_check_branch
          %355 = sbr.rel (%p353) target = $region48
        $region47: #{freprocess_forward.3} parent=43 // pred_region
          %356 = dma.done %s349, 128
        $region48: #{freprocess_forward.3} parent=43 // pred_fallthru
          _
        %s357 = sand.u32 %s33, 1
        %s358 = scalar_lea.sflag [#allocation6], %s357
        %s359 = sand.u32 %s83, 1
        %s360 = smul.addr %s359, 8
        %s361 = scalar_lea.vmem [#allocation5], %s360
        // Predicated region
        $region49: #{freprocess_forward.3} parent=43 // pred_check
          %p362 = pneg %p96
        $region50: #{freprocess_forward.3} parent=43 // pred_check_branch
          %364 = sbr.rel (%p362) target = $region52
        $region51: #{freprocess_forward.3} parent=43 // pred_region
          %365 = dma.done %s358, 128
        $region52: #{freprocess_forward.3} parent=43 // pred_fallthru
          _
        // Predicated region
        $region53: #{freprocess_forward.3} parent=43 // pred_check
          %p366 = pneg %p117
        $region54: #{freprocess_forward.3} parent=43 // pred_check_branch
          %368 = sbr.rel (%p366) target = $region56
        $region55: #{freprocess_forward.3} parent=43 // pred_region
          %369 = dma.done [#allocation6], 64
        $region56: #{freprocess_forward.3} parent=43 // pred_fallthru
          _
        // Predicated region
        $region57: #{freprocess_forward.3} parent=43 // pred_check
          %p370 = pneg %p138
        $region58: #{freprocess_forward.3} parent=43 // pred_check_branch
          %372 = sbr.rel (%p370) target = $region60
        $region59: #{freprocess_forward.3} parent=43 // pred_region
          %373 = dma.done [#allocation9], 64
        $region60: #{freprocess_forward.3} parent=43 // pred_fallthru
          _
        // Predicated region
        $region61: #{freprocess_forward.3} parent=43 // pred_check
          %p374 = pneg %p159
        $region62: #{freprocess_forward.3} parent=43 // pred_check_branch
          %376 = sbr.rel (%p374) target = $region64
        $region63: #{freprocess_forward.3} parent=43 // pred_region
          %377 = dma.done [#allocation9], 64
        $region64: #{freprocess_forward.3} parent=43 // pred_fallthru
          _
        // Predicated region
        $region65: #{freprocess_forward.3} parent=43 // pred_check
          %p378 = pneg %p180
        $region66: #{freprocess_forward.3} parent=43 // pred_check_branch
          %380 = sbr.rel (%p378) target = $region68
        $region67: #{freprocess_forward.3} parent=43 // pred_region
          %381 = dma.done [#allocation12], 64
        $region68: #{freprocess_forward.3} parent=43 // pred_fallthru
          _
        %s382 = sand.u32 %s55, 1
        %s383 = scalar_lea.sflag [#allocation3], %s382
        %s384 = sand.u32 %s55, 1
        %s385 = smul.addr %s384, 8
        %s386 = scalar_lea.vmem [#allocation2], %s385
        %p387 = pneg %p68
        %p388 = pneg %p65
        %s389 = sand.u32 %s33, 1
        %s390 = scalar_lea.sflag [#allocation6], %s389
        %s391 = sand.u32 %s83, 1
        %s392 = smul.addr %s391, 8
        %s393 = scalar_lea.vmem [#allocation5], %s392
        %p394 = pneg %p96
        %p395 = pneg %p93
        %p396 = pneg %p117
        %p397 = pneg %p114
        %p398 = pneg %p138
        %p399 = pneg %p135
        %p400 = pneg %p159
        %p401 = pneg %p156
        %p402 = pneg %p180
        %p403 = pneg %p177
        %p404 = pneg %p208
        %p405 = pneg %p205
        %s406 = sand.u32 %s195, 1
        %s407 = scalar_lea.sflag [#allocation4], %s406
        %s408 = sand.u32 %s195, 1
        %s409 = smul.addr %s408, 8
        %s410 = scalar_lea.vmem [#allocation13], %s409
        %p411 = pneg %p236
        %p412 = pneg %p233
        %s413 = sand.u32 %s223, 1
        %s414 = scalar_lea.sflag [#allocation15], %s413
        %s415 = sand.u32 %s223, 1
        %s416 = smul.addr %s415, 8
        %s417 = scalar_lea.vmem [#allocation14], %s416
        %s418 = smul.u32 2, %s38
        %s419 = smul.u32 2, %s38
        %s420 = smul.u32 2, %s38
        %s421 = smul.u32 2, %s38
        %v422 = vld [vmem:[#allocation7] sm:$0xf]
        %v423 = vld [vmem:[%s352] sm:$0xff]
        %425 = vset.pattern.permute.xlu0 0
        %426 = vperm.xlu0 %425, %v422
        %v427 = vpop.permute.xlu0 %426
        %v430 = vlaneseq
        %v431 = vshrl.u32 %v430, 7
        %v432 = vsub.s32 0, %v431
        %v433 = vrot.slane %v423, %v432
        %v434 = vlaneseq
        %v435 = vshrl.u32 %v434, 7
        %v436 = vsub.s32 4, %v435
        %v437 = vrot.slane %v423, %v436
        %v440 = vlaneseq
        %v441 = vshrl.u32 %v440, 7
        %v442 = vsub.s32 0, %v441
        %v443 = vrot.slane %v433, %v442
        %v444 = vlaneseq
        %v445 = vshrl.u32 %v444, 7
        %v446 = vsub.s32 0, %v445
        %v447 = vrot.slane %v437, %v446
        %v448 = vmul.f32 %v427, %v443
        %v449 = vmul.f32 %v427, %v447
        %450 = vset.pattern.permute.xlu0 1
        %451 = vperm.xlu0 %450, %v422
        %v452 = vpop.permute.xlu0 %451
        %v454 = vlaneseq
        %v455 = vshrl.u32 %v454, 7
        %v456 = vsub.s32 1, %v455
        %v457 = vrot.slane %v423, %v456
        %v458 = vlaneseq
        %v459 = vshrl.u32 %v458, 7
        %v460 = vsub.s32 5, %v459
        %v461 = vrot.slane %v423, %v460
        %v464 = vlaneseq
        %v465 = vshrl.u32 %v464, 7
        %v466 = vsub.s32 1, %v465
        %v467 = vrot.slane %v457, %v466
        %v468 = vlaneseq
        %v469 = vshrl.u32 %v468, 7
        %v470 = vsub.s32 1, %v469
        %v471 = vrot.slane %v461, %v470
        %v472 = vmul.f32 %v452, %v467
        %v473 = vmul.f32 %v452, %v471
        %v474 = vadd.f32 %v448, %v472
        %v475 = vadd.f32 %v449, %v473
        %476 = vset.pattern.permute.xlu0 2
        %477 = vperm.xlu0 %476, %v422
        %v478 = vpop.permute.xlu0 %477
        %v480 = vlaneseq
        %v481 = vshrl.u32 %v480, 7
        %v482 = vsub.s32 2, %v481
        %v483 = vrot.slane %v423, %v482
        %v484 = vlaneseq
        %v485 = vshrl.u32 %v484, 7
        %v486 = vsub.s32 6, %v485
        %v487 = vrot.slane %v423, %v486
        %v490 = vlaneseq
        %v491 = vshrl.u32 %v490, 7
        %v492 = vsub.s32 2, %v491
        %v493 = vrot.slane %v483, %v492
        %v494 = vlaneseq
        %v495 = vshrl.u32 %v494, 7
        %v496 = vsub.s32 2, %v495
        %v497 = vrot.slane %v487, %v496
        %v498 = vmul.f32 %v478, %v493
        %v499 = vmul.f32 %v478, %v497
        %v500 = vadd.f32 %v474, %v498
        %v501 = vadd.f32 %v475, %v499
        %502 = vset.pattern.permute.xlu0 3
        %503 = vperm.xlu0 %502, %v422
        %v504 = vpop.permute.xlu0 %503
        %v506 = vlaneseq
        %v507 = vshrl.u32 %v506, 7
        %v508 = vsub.s32 3, %v507
        %v509 = vrot.slane %v423, %v508
        %v510 = vlaneseq
        %v511 = vshrl.u32 %v510, 7
        %v512 = vsub.s32 7, %v511
        %v513 = vrot.slane %v423, %v512
        %v516 = vlaneseq
        %v517 = vshrl.u32 %v516, 7
        %v518 = vsub.s32 3, %v517
        %v519 = vrot.slane %v509, %v518
        %v520 = vlaneseq
        %v521 = vshrl.u32 %v520, 7
        %v522 = vsub.s32 3, %v521
        %v523 = vrot.slane %v513, %v522
        %v524 = vmul.f32 %v504, %v519
        %v525 = vmul.f32 %v504, %v523
        %v526 = vadd.f32 %v500, %v524
        %v527 = vadd.f32 %v501, %v525
        %v528 = vld [vmem:[#allocation8] sm:$0xf]
        %530 = vset.pattern.permute.xlu0 0
        %531 = vperm.xlu0 %530, %v528
        %v532 = vpop.permute.xlu0 %531
        %v534 = vadd.f32 %v526, %v532
        %v535 = vadd.f32 %v527, %v532
        %v538 = vcombine.low %v534, %v535
        %540 = vst [vmem:[%s410] sm:$0xff] %v538
        %v541 = vld [vmem:[#allocation10] sm:$0xf]
        %v542 = vld [vmem:[%s361] sm:$0xff]
        %544 = vset.pattern.permute.xlu0 0
        %545 = vperm.xlu0 %544, %v541
        %v546 = vpop.permute.xlu0 %545
        %v549 = vlaneseq
        %v550 = vshrl.u32 %v549, 7
        %v551 = vsub.s32 0, %v550
        %v552 = vrot.slane %v542, %v551
        %v553 = vlaneseq
        %v554 = vshrl.u32 %v553, 7
        %v555 = vsub.s32 4, %v554
        %v556 = vrot.slane %v542, %v555
        %v559 = vlaneseq
        %v560 = vshrl.u32 %v559, 7
        %v561 = vsub.s32 0, %v560
        %v562 = vrot.slane %v552, %v561
        %v563 = vlaneseq
        %v564 = vshrl.u32 %v563, 7
        %v565 = vsub.s32 0, %v564
        %v566 = vrot.slane %v556, %v565
        %v567 = vmul.f32 %v546, %v562
        %v568 = vmul.f32 %v546, %v566
        %569 = vset.pattern.permute.xlu0 1
        %570 = vperm.xlu0 %569, %v541
        %v571 = vpop.permute.xlu0 %570
        %v573 = vlaneseq
        %v574 = vshrl.u32 %v573, 7
        %v575 = vsub.s32 1, %v574
        %v576 = vrot.slane %v542, %v575
        %v577 = vlaneseq
        %v578 = vshrl.u32 %v577, 7
        %v579 = vsub.s32 5, %v578
        %v580 = vrot.slane %v542, %v579
        %v583 = vlaneseq
        %v584 = vshrl.u32 %v583, 7
        %v585 = vsub.s32 1, %v584
        %v586 = vrot.slane %v576, %v585
        %v587 = vlaneseq
        %v588 = vshrl.u32 %v587, 7
        %v589 = vsub.s32 1, %v588
        %v590 = vrot.slane %v580, %v589
        %v591 = vmul.f32 %v571, %v586
        %v592 = vmul.f32 %v571, %v590
        %v593 = vadd.f32 %v567, %v591
        %v594 = vadd.f32 %v568, %v592
        %595 = vset.pattern.permute.xlu0 2
        %596 = vperm.xlu0 %595, %v541
        %v597 = vpop.permute.xlu0 %596
        %v599 = vlaneseq
        %v600 = vshrl.u32 %v599, 7
        %v601 = vsub.s32 2, %v600
        %v602 = vrot.slane %v542, %v601
        %v603 = vlaneseq
        %v604 = vshrl.u32 %v603, 7
        %v605 = vsub.s32 6, %v604
        %v606 = vrot.slane %v542, %v605
        %v609 = vlaneseq
        %v610 = vshrl.u32 %v609, 7
        %v611 = vsub.s32 2, %v610
        %v612 = vrot.slane %v602, %v611
        %v613 = vlaneseq
        %v614 = vshrl.u32 %v613, 7
        %v615 = vsub.s32 2, %v614
        %v616 = vrot.slane %v606, %v615
        %v617 = vmul.f32 %v597, %v612
        %v618 = vmul.f32 %v597, %v616
        %v619 = vadd.f32 %v593, %v617
        %v620 = vadd.f32 %v594, %v618
        %621 = vset.pattern.permute.xlu0 3
        %622 = vperm.xlu0 %621, %v541
        %v623 = vpop.permute.xlu0 %622
        %v625 = vlaneseq
        %v626 = vshrl.u32 %v625, 7
        %v627 = vsub.s32 3, %v626
        %v628 = vrot.slane %v542, %v627
        %v629 = vlaneseq
        %v630 = vshrl.u32 %v629, 7
        %v631 = vsub.s32 7, %v630
        %v632 = vrot.slane %v542, %v631
        %v635 = vlaneseq
        %v636 = vshrl.u32 %v635, 7
        %v637 = vsub.s32 3, %v636
        %v638 = vrot.slane %v628, %v637
        %v639 = vlaneseq
        %v640 = vshrl.u32 %v639, 7
        %v641 = vsub.s32 3, %v640
        %v642 = vrot.slane %v632, %v641
        %v643 = vmul.f32 %v623, %v638
        %v644 = vmul.f32 %v623, %v642
        %v645 = vadd.f32 %v619, %v643
        %v646 = vadd.f32 %v620, %v644
        %v647 = vld [vmem:[#allocation11] sm:$0xf]
        %649 = vset.pattern.permute.xlu0 0
        %650 = vperm.xlu0 %649, %v647
        %v651 = vpop.permute.xlu0 %650
        %v653 = vadd.f32 %v645, %v651
        %v654 = vadd.f32 %v646, %v651
        %v657 = vcombine.low %v653, %v654
        %659 = vst [vmem:[%s417] sm:$0xff] %v657
        %s660 = sand.u32 %s195, 1
        %s661 = scalar_lea.sflag [#allocation4], %s660
        %s662 = sand.u32 %s195, 1
        %s663 = smul.addr %s662, 8
        %s664 = scalar_lea.vmem [#allocation13], %s663
        %s665 = sand.u32 %s223, 1
        %s666 = scalar_lea.sflag [#allocation15], %s665
        %s667 = sand.u32 %s223, 1
        %s668 = smul.addr %s667, 8
        %s669 = scalar_lea.vmem [#allocation14], %s668
        // Predicated region
        $region69: #{freprocess_forward.3} parent=43 // pred_check
          %p670 = pneg %p205
        $region70: #{freprocess_forward.3} parent=43 // pred_check_branch
          %672 = sbr.rel (%p670) target = $region72
        $region71: #{freprocess_forward.3} parent=43 // pred_region
          %s673 = smul.u32 2, %s38
          %s675 = ssub.s32 128, 128
          %676 = vsyncadd %s661, %s675
          %s677 = smul.addr %s37, 2
          %s678 = sadd.s32 %s673, %s677
          %s679 = smul.addr %s678, 64
          %s680 = scalar_lea.hbm %s6, %s679
          %s682 = sshll.u32 %s664, 4
          %s683 = int_to_ptr.vmem [resolvable:$true] %s682
          %685 = dma.vmem_to_hbm [thread:$0]  %s683, 128, %s680, %s661
        $region72: #{freprocess_forward.3} parent=43 // pred_fallthru
          _
        // Predicated region
        $region73: #{freprocess_forward.3} parent=43 // pred_check
          %p686 = pneg %p233
        $region74: #{freprocess_forward.3} parent=43 // pred_check_branch
          %688 = sbr.rel (%p686) target = $region76
        $region75: #{freprocess_forward.3} parent=43 // pred_region
          %s689 = smul.u32 2, %s38
          %s691 = ssub.s32 128, 128
          %692 = vsyncadd %s666, %s691
          %s693 = smul.addr %s37, 2
          %s694 = sadd.s32 %s689, %s693
          %s695 = smul.addr %s694, 64
          %s696 = scalar_lea.hbm %s7, %s695
          %s698 = sshll.u32 %s669, 4
          %s699 = int_to_ptr.vmem [resolvable:$true] %s698
          %701 = dma.vmem_to_hbm [thread:$0]  %s699, 128, %s696, %s666
        $region76: #{freprocess_forward.3} parent=43 // pred_fallthru
          _
      $region44: #{freprocess_forward.3} parent=5 // pred_fallthru
        _
      %p702 = scmp.le.s32.totalorder 2, %s28
      // Predicated region
      $region77: #{freprocess_forward.3} parent=5 // pred_check
        %p703 = pneg %p702
      $region78: #{freprocess_forward.3} parent=5 // pred_check_branch
        %705 = sbr.rel (%p703) target = $region80
      $region79: #{freprocess_forward.3} parent=5 // pred_region
        %s706 = ssub.s32 %s28, 2
        // Predicated region
        $region81: #{freprocess_forward.3} parent=79 // pred_check
          %p707 = pneg %p211
        $region82: #{freprocess_forward.3} parent=79 // pred_check_branch
          %709 = sbr.rel (%p707) target = $region84
        $region83: #{freprocess_forward.3} parent=79 // pred_region
          %s710 = sand.u32 %s196, 1
          %s711 = scalar_lea.sflag [#allocation4], %s710
          %s712 = sand.u32 %s196, 1
          %s713 = smul.addr %s712, 8
          %s714 = scalar_lea.vmem [#allocation13], %s713
          %715 = dma.done %s711, 128
        $region84: #{freprocess_forward.3} parent=79 // pred_fallthru
          _
        // Predicated region
        $region85: #{freprocess_forward.3} parent=79 // pred_check
          %p716 = pneg %p239
        $region86: #{freprocess_forward.3} parent=79 // pred_check_branch
          %718 = sbr.rel (%p716) target = $region88
        $region87: #{freprocess_forward.3} parent=79 // pred_region
          %s719 = sand.u32 %s224, 1
          %s720 = scalar_lea.sflag [#allocation15], %s719
          %s721 = sand.u32 %s224, 1
          %s722 = smul.addr %s721, 8
          %s723 = scalar_lea.vmem [#allocation14], %s722
          %724 = dma.done %s720, 128
        $region88: #{freprocess_forward.3} parent=79 // pred_fallthru
          _
      $region80: #{freprocess_forward.3} parent=5 // pred_fallthru
        _
    $region6: #{freprocess_forward.3} parent=1 // loop_footer
      %s32 = sadd.s32 1, %s28
    $region7: #{freprocess_forward.3} parent=1 // loop_footer_branch
      %27 = sbr.rel target = $region3
    $region8: #{freprocess_forward.3} parent=1 // loop_exit
      _
    %725 = vsyncpa [#allocation3], 1
    %s726 = scalar_lea.sflag [#allocation3], 1
    %727 = vsyncpa %s726, 1
    %728 = vsyncpa [#allocation6], 1
    %s729 = scalar_lea.sflag [#allocation6], 1
    %730 = vsyncpa %s729, 1
    %731 = vsyncpa [#allocation9], 1
    %732 = vsyncpa [#allocation12], 1
    %733 = vsyncpa [#allocation4], 1
    %s734 = scalar_lea.sflag [#allocation4], 1
    %735 = vsyncpa %s734, 1
    %736 = vsyncpa [#allocation15], 1
    %s737 = scalar_lea.sflag [#allocation15], 1
    %738 = vsyncpa %s737, 1

// kernel: reverse.0
$region0: #{reverse.0}
  %s0 = inlined_call_operand.vmem [shape: f32[2,4,16,7], index: 0, kind: input, shape index: {}]
  %s1 = inlined_call_operand.vmem [shape: f32[2,4,16,7], index: 1, kind: output, shape index: {}]
  $region1: #{reverse.0} parent=0
    #allocation0 [shape = 'u8[65536]{0}', space=vmem, size = 0x10000, scoped, tag = 'operand span for operand 0']
    #allocation1 [shape = 'u8[32768]{0}', space=vmem, size = 0x8000, scoped, tag = 'operand span for operand 1']
    %s2 = scalar_lea.vmem [#allocation0], 8
    // Predicated region
    $region2: #{reverse.0} parent=1 // pred_check
      _
    $region3: #{reverse.0} parent=1 // pred_check_branch
      %4 = sbr.rel (0) target = $region5
    $region4: #{reverse.0} parent=1 // pred_region
      // Predicated region
      $region6: #{reverse.0} parent=4 // pred_check
        _
      $region7: #{reverse.0} parent=4 // pred_check_branch
        %6 = sbr.rel (0) target = $region9
      $region8: #{reverse.0} parent=4 // pred_region
        // Predicated region
        $region21: #{reverse.0} parent=8 // pred_check
          _
        $region22: #{reverse.0} parent=8 // pred_check_branch
          %35 = sbr.rel (0) target = $region24
        $region23: #{reverse.0} parent=8 // pred_region
          loop: start=0, step=1, limit=1
          $region25: #{reverse.0} parent=23 // loop_pre_header
            _
          $region26: #{reverse.0} parent=23 // loop_header
            %s37 = sphi 0, %s41
            %p38 = scmp.ge.s32.totalorder %s37, 1
            %s42 = sphi %s0, %s0
            %s43 = sphi %s2, %s2
          $region27: #{reverse.0} parent=23 // loop_header_branch
            %40 = sbr.rel (%p38) target = $region31
          $region28: #{reverse.0} parent=23 // loop_body
            %v44 = vld [vmem:[%s42] sm:$0xff]
            %45 = vst [vmem:[%s43] sm:$0xff] %v44
            %v46 = vld [vmem:[%s42 + $0x8] sm:$0xff]
            %47 = vst [vmem:[%s43 + $0x10] sm:$0xff] %v46
            %v48 = vld [vmem:[%s42 + $0x10] sm:$0xff]
            %49 = vst [vmem:[%s43 + $0x20] sm:$0xff] %v48
            %v50 = vld [vmem:[%s42 + $0x18] sm:$0xff]
            %51 = vst [vmem:[%s43 + $0x30] sm:$0xff] %v50
            %v52 = vld [vmem:[%s42 + $0x20] sm:$0xff]
            %53 = vst [vmem:[%s43 + $0x40] sm:$0xff] %v52
            %v54 = vld [vmem:[%s42 + $0x28] sm:$0xff]
            %55 = vst [vmem:[%s43 + $0x50] sm:$0xff] %v54
            %v56 = vld [vmem:[%s42 + $0x30] sm:$0xff]
            %57 = vst [vmem:[%s43 + $0x60] sm:$0xff] %v56
            %v58 = vld [vmem:[%s42 + $0x38] sm:$0xff]
            %59 = vst [vmem:[%s43 + $0x70] sm:$0xff] %v58
          $region29: #{reverse.0} parent=23 // loop_footer
            %s41 = sadd.s32 1, %s37
          $region30: #{reverse.0} parent=23 // loop_footer_branch
            %36 = sbr.rel target = $region26
          $region31: #{reverse.0} parent=23 // loop_exit
            _
        $region24: #{reverse.0} parent=8 // pred_fallthru
          _
        // Predicated region
        $region32: #{reverse.0} parent=8 // pred_check
          _
        $region33: #{reverse.0} parent=8 // pred_check_branch
          %61 = sbr.rel target = $region35
        $region34: #{reverse.0} parent=8 // pred_region
          _
        $region35: #{reverse.0} parent=8 // pred_fallthru
          _
      $region9: #{reverse.0} parent=4 // pred_fallthru
        _
      // Predicated region
      $region10: #{reverse.0} parent=4 // pred_check
        _
      $region11: #{reverse.0} parent=4 // pred_check_branch
        %8 = sbr.rel target = $region13
      $region12: #{reverse.0} parent=4 // pred_region
        loop: start=0, step=1, limit=1
        $region14: #{reverse.0} parent=12 // loop_pre_header
          _
        $region15: #{reverse.0} parent=12 // loop_header
          %s11 = sphi 0, %s15
          %p12 = scmp.ge.s32.totalorder %s11, 1
          %s16 = sphi %s0, %s0
          %s17 = sphi %s2, %s2
        $region16: #{reverse.0} parent=12 // loop_header_branch
          %14 = sbr.rel (%p12) target = $region20
        $region17: #{reverse.0} parent=12 // loop_body
          %v18 = vld [vmem:[%s16] sm:$0xff]
          %19 = vst [vmem:[%s17] sm:$0xff] %v18
          %v20 = vld [vmem:[%s16 + $0x8] sm:$0xff]
          %21 = vst [vmem:[%s17 + $0x10] sm:$0xff] %v20
          %v22 = vld [vmem:[%s16 + $0x10] sm:$0xff]
          %23 = vst [vmem:[%s17 + $0x20] sm:$0xff] %v22
          %v24 = vld [vmem:[%s16 + $0x18] sm:$0xff]
          %25 = vst [vmem:[%s17 + $0x30] sm:$0xff] %v24
          %v26 = vld [vmem:[%s16 + $0x20] sm:$0xff]
          %27 = vst [vmem:[%s17 + $0x40] sm:$0xff] %v26
          %v28 = vld [vmem:[%s16 + $0x28] sm:$0xff]
          %29 = vst [vmem:[%s17 + $0x50] sm:$0xff] %v28
          %v30 = vld [vmem:[%s16 + $0x30] sm:$0xff]
          %31 = vst [vmem:[%s17 + $0x60] sm:$0xff] %v30
          %v32 = vld [vmem:[%s16 + $0x38] sm:$0xff]
          %33 = vst [vmem:[%s17 + $0x70] sm:$0xff] %v32
        $region18: #{reverse.0} parent=12 // loop_footer
          %s15 = sadd.s32 1, %s11
        $region19: #{reverse.0} parent=12 // loop_footer_branch
          %10 = sbr.rel target = $region15
        $region20: #{reverse.0} parent=12 // loop_exit
          _
      $region13: #{reverse.0} parent=4 // pred_fallthru
        _
    $region5: #{reverse.0} parent=1 // pred_fallthru
      _
    %62 = vnop
    %s63 = scalar_lea.vmem [#allocation0], 7
    %v64 = vld [vmem:[%s63] ss:$-1 sm:$0xff]
    %v65 = vrot.slane %v64, 1
    %66 = vst [vmem:[#allocation1] sm:$0xff] %v65
    %s67 = scalar_lea.vmem [#allocation0], 8
    %s68 = scalar_lea.vmem %s67, 7 [#allocation0]
    %v69 = vld [vmem:[%s68] ss:$-1 sm:$0xff]
    %v70 = vrot.slane %v69, 1
    %v71 = vlaneseq
    %v72 = vshrl.u32 %v71, 7
    %vm73 = vcmp.lt.s32.totalorder %v72, 7
    %74 = vst.msk [vmem:[#allocation1] sm:$0xff] %vm73, %v70
    %s75 = scalar_lea.vmem [#allocation1], 8
    %s76 = scalar_lea.vmem [#allocation0], 16
    %s77 = scalar_lea.vmem %s76, 7 [#allocation0]
    %v78 = vld [vmem:[%s77] ss:$-1 sm:$0xff]
    %v79 = vrot.slane %v78, 1
    %80 = vst [vmem:[%s75] sm:$0xff] %v79
    %s81 = scalar_lea.vmem %s76, 8 [#allocation0]
    %s82 = scalar_lea.vmem %s81, 7 [#allocation0]
    %v83 = vld [vmem:[%s82] ss:$-1 sm:$0xff]
    %v84 = vrot.slane %v83, 1
    %v85 = vlaneseq
    %v86 = vshrl.u32 %v85, 7
    %vm87 = vcmp.lt.s32.totalorder %v86, 7
    %88 = vst.msk [vmem:[%s75] sm:$0xff] %vm87, %v84
    %s89 = scalar_lea.vmem [#allocation1], 16
    %s90 = scalar_lea.vmem [#allocation0], 32
    %s91 = scalar_lea.vmem %s90, 7 [#allocation0]
    %v92 = vld [vmem:[%s91] ss:$-1 sm:$0xff]
    %v93 = vrot.slane %v92, 1
    %94 = vst [vmem:[%s89] sm:$0xff] %v93
    %s95 = scalar_lea.vmem %s90, 8 [#allocation0]
    %s96 = scalar_lea.vmem %s95, 7 [#allocation0]
    %v97 = vld [vmem:[%s96] ss:$-1 sm:$0xff]
    %v98 = vrot.slane %v97, 1
    %v99 = vlaneseq
    %v100 = vshrl.u32 %v99, 7
    %vm101 = vcmp.lt.s32.totalorder %v100, 7
    %102 = vst.msk [vmem:[%s89] sm:$0xff] %vm101, %v98
    %s103 = scalar_lea.vmem [#allocation1], 24
    %s104 = scalar_lea.vmem [#allocation0], 48
    %s105 = scalar_lea.vmem %s104, 7 [#allocation0]
    %v106 = vld [vmem:[%s105] ss:$-1 sm:$0xff]
    %v107 = vrot.slane %v106, 1
    %108 = vst [vmem:[%s103] sm:$0xff] %v107
    %s109 = scalar_lea.vmem %s104, 8 [#allocation0]
    %s110 = scalar_lea.vmem %s109, 7 [#allocation0]
    %v111 = vld [vmem:[%s110] ss:$-1 sm:$0xff]
    %v112 = vrot.slane %v111, 1
    %v113 = vlaneseq
    %v114 = vshrl.u32 %v113, 7
    %vm115 = vcmp.lt.s32.totalorder %v114, 7
    %116 = vst.msk [vmem:[%s103] sm:$0xff] %vm115, %v112
    %s117 = scalar_lea.vmem [#allocation1], 32
    %s118 = scalar_lea.vmem [#allocation0], 64
    %s119 = scalar_lea.vmem %s118, 7 [#allocation0]
    %v120 = vld [vmem:[%s119] ss:$-1 sm:$0xff]
    %v121 = vrot.slane %v120, 1
    %122 = vst [vmem:[%s117] sm:$0xff] %v121
    %s123 = scalar_lea.vmem %s118, 8 [#allocation0]
    %s124 = scalar_lea.vmem %s123, 7 [#allocation0]
    %v125 = vld [vmem:[%s124] ss:$-1 sm:$0xff]
    %v126 = vrot.slane %v125, 1
    %v127 = vlaneseq
    %v128 = vshrl.u32 %v127, 7
    %vm129 = vcmp.lt.s32.totalorder %v128, 7
    %130 = vst.msk [vmem:[%s117] sm:$0xff] %vm129, %v126
    %s131 = scalar_lea.vmem [#allocation1], 40
    %s132 = scalar_lea.vmem [#allocation0], 80
    %s133 = scalar_lea.vmem %s132, 7 [#allocation0]
    %v134 = vld [vmem:[%s133] ss:$-1 sm:$0xff]
    %v135 = vrot.slane %v134, 1
    %136 = vst [vmem:[%s131] sm:$0xff] %v135
    %s137 = scalar_lea.vmem %s132, 8 [#allocation0]
    %s138 = scalar_lea.vmem %s137, 7 [#allocation0]
    %v139 = vld [vmem:[%s138] ss:$-1 sm:$0xff]
    %v140 = vrot.slane %v139, 1
    %v141 = vlaneseq
    %v142 = vshrl.u32 %v141, 7
    %vm143 = vcmp.lt.s32.totalorder %v142, 7
    %144 = vst.msk [vmem:[%s131] sm:$0xff] %vm143, %v140
    %s145 = scalar_lea.vmem [#allocation1], 48
    %s146 = scalar_lea.vmem [#allocation0], 96
    %s147 = scalar_lea.vmem %s146, 7 [#allocation0]
    %v148 = vld [vmem:[%s147] ss:$-1 sm:$0xff]
    %v149 = vrot.slane %v148, 1
    %150 = vst [vmem:[%s145] sm:$0xff] %v149
    %s151 = scalar_lea.vmem %s146, 8 [#allocation0]
    %s152 = scalar_lea.vmem %s151, 7 [#allocation0]
    %v153 = vld [vmem:[%s152] ss:$-1 sm:$0xff]
    %v154 = vrot.slane %v153, 1
    %v155 = vlaneseq
    %v156 = vshrl.u32 %v155, 7
    %vm157 = vcmp.lt.s32.totalorder %v156, 7
    %158 = vst.msk [vmem:[%s145] sm:$0xff] %vm157, %v154
    %s159 = scalar_lea.vmem [#allocation1], 56
    %s160 = scalar_lea.vmem [#allocation0], 112
    %s161 = scalar_lea.vmem %s160, 7 [#allocation0]
    %v162 = vld [vmem:[%s161] ss:$-1 sm:$0xff]
    %v163 = vrot.slane %v162, 1
    %164 = vst [vmem:[%s159] sm:$0xff] %v163
    %s165 = scalar_lea.vmem %s160, 8 [#allocation0]
    %s166 = scalar_lea.vmem %s165, 7 [#allocation0]
    %v167 = vld [vmem:[%s166] ss:$-1 sm:$0xff]
    %v168 = vrot.slane %v167, 1
    %v169 = vlaneseq
    %v170 = vshrl.u32 %v169, 7
    %vm171 = vcmp.lt.s32.totalorder %v170, 7
    %172 = vst.msk [vmem:[%s159] sm:$0xff] %vm171, %v168
    // Predicated region
    $region36: #{reverse.0} parent=1 // pred_check
      _
    $region37: #{reverse.0} parent=1 // pred_check_branch
      %174 = sbr.rel (0) target = $region39
    $region38: #{reverse.0} parent=1 // pred_region
      // Predicated region
      $region40: #{reverse.0} parent=38 // pred_check
        _
      $region41: #{reverse.0} parent=38 // pred_check_branch
        %176 = sbr.rel (0) target = $region43
      $region42: #{reverse.0} parent=38 // pred_region
        // Predicated region
        $region55: #{reverse.0} parent=42 // pred_check
          _
        $region56: #{reverse.0} parent=42 // pred_check_branch
          %205 = sbr.rel (0) target = $region58
        $region57: #{reverse.0} parent=42 // pred_region
          loop: start=0, step=1, limit=1
          $region59: #{reverse.0} parent=57 // loop_pre_header
            _
          $region60: #{reverse.0} parent=57 // loop_header
            %s207 = sphi 0, %s211
            %p208 = scmp.ge.s32.totalorder %s207, 1
            %s212 = sphi [#allocation1], [#allocation1]
            %s213 = sphi %s1, %s1
          $region61: #{reverse.0} parent=57 // loop_header_branch
            %210 = sbr.rel (%p208) target = $region65
          $region62: #{reverse.0} parent=57 // loop_body
            %v214 = vld [vmem:[%s212] sm:$0xff]
            %215 = vst [vmem:[%s213] sm:$0xff] %v214
            %v216 = vld [vmem:[%s212 + $0x8] sm:$0xff]
            %217 = vst [vmem:[%s213 + $0x8] sm:$0xff] %v216
            %v218 = vld [vmem:[%s212 + $0x10] sm:$0xff]
            %219 = vst [vmem:[%s213 + $0x10] sm:$0xff] %v218
            %v220 = vld [vmem:[%s212 + $0x18] sm:$0xff]
            %221 = vst [vmem:[%s213 + $0x18] sm:$0xff] %v220
            %v222 = vld [vmem:[%s212 + $0x20] sm:$0xff]
            %223 = vst [vmem:[%s213 + $0x20] sm:$0xff] %v222
            %v224 = vld [vmem:[%s212 + $0x28] sm:$0xff]
            %225 = vst [vmem:[%s213 + $0x28] sm:$0xff] %v224
            %v226 = vld [vmem:[%s212 + $0x30] sm:$0xff]
            %227 = vst [vmem:[%s213 + $0x30] sm:$0xff] %v226
            %v228 = vld [vmem:[%s212 + $0x38] sm:$0xff]
            %229 = vst [vmem:[%s213 + $0x38] sm:$0xff] %v228
          $region63: #{reverse.0} parent=57 // loop_footer
            %s211 = sadd.s32 1, %s207
          $region64: #{reverse.0} parent=57 // loop_footer_branch
            %206 = sbr.rel target = $region60
          $region65: #{reverse.0} parent=57 // loop_exit
            _
        $region58: #{reverse.0} parent=42 // pred_fallthru
          _
        // Predicated region
        $region66: #{reverse.0} parent=42 // pred_check
          _
        $region67: #{reverse.0} parent=42 // pred_check_branch
          %231 = sbr.rel target = $region69
        $region68: #{reverse.0} parent=42 // pred_region
          _
        $region69: #{reverse.0} parent=42 // pred_fallthru
          _
      $region43: #{reverse.0} parent=38 // pred_fallthru
        _
      // Predicated region
      $region44: #{reverse.0} parent=38 // pred_check
        _
      $region45: #{reverse.0} parent=38 // pred_check_branch
        %178 = sbr.rel target = $region47
      $region46: #{reverse.0} parent=38 // pred_region
        loop: start=0, step=1, limit=1
        $region48: #{reverse.0} parent=46 // loop_pre_header
          _
        $region49: #{reverse.0} parent=46 // loop_header
          %s181 = sphi 0, %s185
          %p182 = scmp.ge.s32.totalorder %s181, 1
          %s186 = sphi [#allocation1], [#allocation1]
          %s187 = sphi %s1, %s1
        $region50: #{reverse.0} parent=46 // loop_header_branch
          %184 = sbr.rel (%p182) target = $region54
        $region51: #{reverse.0} parent=46 // loop_body
          %v188 = vld [vmem:[%s186] sm:$0xff]
          %189 = vst [vmem:[%s187] sm:$0xff] %v188
          %v190 = vld [vmem:[%s186 + $0x8] sm:$0xff]
          %191 = vst [vmem:[%s187 + $0x8] sm:$0xff] %v190
          %v192 = vld [vmem:[%s186 + $0x10] sm:$0xff]
          %193 = vst [vmem:[%s187 + $0x10] sm:$0xff] %v192
          %v194 = vld [vmem:[%s186 + $0x18] sm:$0xff]
          %195 = vst [vmem:[%s187 + $0x18] sm:$0xff] %v194
          %v196 = vld [vmem:[%s186 + $0x20] sm:$0xff]
          %197 = vst [vmem:[%s187 + $0x20] sm:$0xff] %v196
          %v198 = vld [vmem:[%s186 + $0x28] sm:$0xff]
          %199 = vst [vmem:[%s187 + $0x28] sm:$0xff] %v198
          %v200 = vld [vmem:[%s186 + $0x30] sm:$0xff]
          %201 = vst [vmem:[%s187 + $0x30] sm:$0xff] %v200
          %v202 = vld [vmem:[%s186 + $0x38] sm:$0xff]
          %203 = vst [vmem:[%s187 + $0x38] sm:$0xff] %v202
        $region52: #{reverse.0} parent=46 // loop_footer
          %s185 = sadd.s32 1, %s181
        $region53: #{reverse.0} parent=46 // loop_footer_branch
          %180 = sbr.rel target = $region49
        $region54: #{reverse.0} parent=46 // loop_exit
          _
      $region47: #{reverse.0} parent=38 // pred_fallthru
        _
    $region39: #{reverse.0} parent=1 // pred_fallthru
      _
    %232 = vnop

// kernel: freprocess_forward.4
$region0: #{freprocess_forward.4}
  #allocation0 [shape = 'u32[]', space=smem, size = 0x4, offset = 0x4, fixed_abs, tag = 'smem constant byte address 0x4 - core index']
  #allocation1 [shape = 'u32[144,128]{1,0:T(1,128)}', space=vmem, size = 0x12000, scoped, tag = 'internal scratch']
  %s0 = inlined_call_operand.hbm [shape: f32[2,4,144], index: 0, kind: input, shape index: {}]
  %s1 = inlined_call_operand.hbm [shape: f32[2,4,144], index: 1, kind: input, shape index: {}]
  %s2 = inlined_call_operand.hbm [shape: f32[2,4,144], index: 2, kind: input, shape index: {}]
  %s3 = inlined_call_operand.hbm [shape: f32[2,4,144], index: 3, kind: input, shape index: {}]
  %s4 = inlined_call_operand.hbm [shape: f32[4,4], index: 4, kind: input, shape index: {}]
  %s5 = inlined_call_operand.hbm [shape: f32[4,4], index: 5, kind: input, shape index: {}]
  %s6 = inlined_call_operand.hbm [shape: f32[4,1], index: 6, kind: input, shape index: {}]
  %s7 = inlined_call_operand.hbm [shape: f32[4,4], index: 7, kind: input, shape index: {}]
  %s8 = inlined_call_operand.hbm [shape: f32[4,1], index: 8, kind: input, shape index: {}]
  %s9 = inlined_call_operand.hbm [shape: f32[4,4], index: 9, kind: input, shape index: {}]
  %s10 = inlined_call_operand.hbm [shape: f32[4,4], index: 10, kind: input, shape index: {}]
  %s11 = inlined_call_operand.hbm [shape: f32[4,1], index: 11, kind: input, shape index: {}]
  %s12 = inlined_call_operand.hbm [shape: f32[4,4], index: 12, kind: input, shape index: {}]
  %s13 = inlined_call_operand.hbm [shape: f32[4,1], index: 13, kind: input, shape index: {}]
  %s14 = inlined_call_operand.hbm [shape: f32[2,4,144], index: 14, kind: output, shape index: {0}]
  %s15 = inlined_call_operand.hbm [shape: f32[2,4,144], index: 15, kind: output, shape index: {1}]
  %16 = xla_tuple %s14, %s15
  %s17 = sld [smem:[#allocation0]]
  $region153: #{freprocess_forward.4} parent=0
    _
  %s19 = ssub.s32 1, %s17
  %s20 = scalar_select 0, %s19, %s17
  $region1: #{freprocess_forward.4} parent=0
    #allocation2 [shape = 'u8[8192]{0}', space=vmem, size = 0x2000, scoped, tag = 'input window, operand 0']
    #allocation3 [shape = 's32[2]{0}', space=sflag, size = 0x8, scoped, tag = 'scoped memory for freprocess_forward.4']
    #allocation4 [shape = 's32[2]{0}', space=sflag, size = 0x8, scoped, tag = 'scoped memory for freprocess_forward.4']
    #allocation5 [shape = 'u8[8192]{0}', space=vmem, size = 0x2000, scoped, tag = 'input window, operand 1']
    #allocation6 [shape = 's32[2]{0}', space=sflag, size = 0x8, scoped, tag = 'scoped memory for freprocess_forward.4']
    #allocation7 [shape = 'u8[8192]{0}', space=vmem, size = 0x2000, scoped, tag = 'input window, operand 2']
    #allocation8 [shape = 'u8[8192]{0}', space=vmem, size = 0x2000, scoped, tag = 'input window, operand 3']
    #allocation9 [shape = 's32[2]{0}', space=sflag, size = 0x8, scoped, tag = 'scoped memory for freprocess_forward.4']
    #allocation10 [shape = 'u8[2048]{0}', space=vmem, size = 0x800, scoped, tag = 'input window, operand 4, single buffered']
    #allocation11 [shape = 'u8[2048]{0}', space=vmem, size = 0x800, scoped, tag = 'input window, operand 5, single buffered']
    #allocation12 [shape = 's32[1]{0}', space=sflag, size = 0x4, scoped, tag = 'scoped memory for freprocess_forward.4']
    #allocation13 [shape = 'u8[2048]{0}', space=vmem, size = 0x800, scoped, tag = 'input window, operand 6, single buffered']
    #allocation14 [shape = 'u8[2048]{0}', space=vmem, size = 0x800, scoped, tag = 'input window, operand 7, single buffered']
    #allocation15 [shape = 's32[1]{0}', space=sflag, size = 0x4, scoped, tag = 'scoped memory for freprocess_forward.4']
    #allocation16 [shape = 'u8[2048]{0}', space=vmem, size = 0x800, scoped, tag = 'input window, operand 8, single buffered']
    #allocation17 [shape = 'u8[2048]{0}', space=vmem, size = 0x800, scoped, tag = 'input window, operand 9, single buffered']
    #allocation18 [shape = 's32[1]{0}', space=sflag, size = 0x4, scoped, tag = 'scoped memory for freprocess_forward.4']
    #allocation19 [shape = 'u8[2048]{0}', space=vmem, size = 0x800, scoped, tag = 'input window, operand 10, single buffered']
    #allocation20 [shape = 'u8[2048]{0}', space=vmem, size = 0x800, scoped, tag = 'input window, operand 11, single buffered']
    #allocation21 [shape = 's32[1]{0}', space=sflag, size = 0x4, scoped, tag = 'scoped memory for freprocess_forward.4']
    #allocation22 [shape = 'u8[2048]{0}', space=vmem, size = 0x800, scoped, tag = 'input window, operand 12, single buffered']
    #allocation23 [shape = 'u8[2048]{0}', space=vmem, size = 0x800, scoped, tag = 'input window, operand 13, single buffered']
    #allocation24 [shape = 's32[1]{0}', space=sflag, size = 0x4, scoped, tag = 'scoped memory for freprocess_forward.4']
    #allocation25 [shape = 'u8[8192]{0}', space=vmem, size = 0x2000, scoped, tag = 'output window, operand 0']
    #allocation26 [shape = 'u8[8192]{0}', space=vmem, size = 0x2000, scoped, tag = 'output window, operand 1']
    #allocation27 [shape = 's32[2]{0}', space=sflag, size = 0x8, scoped, tag = 'scoped memory for freprocess_forward.4']
    %21 = vsyncpa [#allocation3], 0
    %s22 = scalar_lea.sflag [#allocation3], 1
    %23 = vsyncpa %s22, 0
    %24 = vsyncpa [#allocation6], 0
    %s25 = scalar_lea.sflag [#allocation6], 1
    %26 = vsyncpa %s25, 0
    %27 = vsyncpa [#allocation9], 0
    %s28 = scalar_lea.sflag [#allocation9], 1
    %29 = vsyncpa %s28, 0
    %30 = vsyncpa [#allocation12], 0
    %31 = vsyncpa [#allocation15], 0
    %32 = vsyncpa [#allocation18], 0
    %33 = vsyncpa [#allocation21], 0
    %34 = vsyncpa [#allocation24], 0
    %35 = vsyncpa [#allocation4], 0
    %s36 = scalar_lea.sflag [#allocation4], 1
    %37 = vsyncpa %s36, 0
    %38 = vsyncpa [#allocation27], 0
    %s39 = scalar_lea.sflag [#allocation27], 1
    %40 = vsyncpa %s39, 0
    loop: start=0, step=1, limit=4
    $region2: #{freprocess_forward.4} parent=1 // loop_pre_header
      _
    $region3: #{freprocess_forward.4} parent=1 // loop_header
      %s42 = sphi 0, %s46
      %p43 = scmp.ge.s32.totalorder %s42, 4
      %s49 = sphi 0, %s61
      %s50 = sphi 0, %s57
      %s51 = sphi 0, %s49
      %s52 = sphi 0, %s50
      %s53 = sphi 0, %s51
      %s54 = sphi 0, %s52
      %s66 = sphi 0, %s68
      %s69 = sphi 0, %s66
      %s70 = sphi 0, %s69
      %s86 = sphi 0, %s70
      %s94 = sphi 0, %s96
      %s97 = sphi 0, %s94
      %s98 = sphi 0, %s97
      %s114 = sphi 0, %s98
      %s122 = sphi 0, %s124
      %s125 = sphi 0, %s122
      %s126 = sphi 0, %s125
      %s142 = sphi 0, %s126
      %s150 = sphi 0, %s152
      %s153 = sphi 0, %s150
      %s154 = sphi 0, %s153
      %s170 = sphi 0, %s154
      %s174 = sphi 0, %s174
      %s176 = sphi 0, %s174
      %s177 = sphi 0, %s176
      %s191 = sphi 0, %s177
      %s195 = sphi 0, %s195
      %s197 = sphi 0, %s195
      %s198 = sphi 0, %s197
      %s212 = sphi 0, %s198
      %s216 = sphi 0, %s216
      %s218 = sphi 0, %s216
      %s219 = sphi 0, %s218
      %s233 = sphi 0, %s219
      %s237 = sphi 0, %s237
      %s239 = sphi 0, %s237
      %s240 = sphi 0, %s239
      %s254 = sphi 0, %s240
      %s258 = sphi 0, %s258
      %s260 = sphi 0, %s258
      %s261 = sphi 0, %s260
      %s275 = sphi 0, %s261
      %s279 = sphi 0, %s279
      %s281 = sphi 0, %s279
      %s282 = sphi 0, %s281
      %s296 = sphi 0, %s282
      %s300 = sphi 0, %s300
      %s302 = sphi 0, %s300
      %s303 = sphi 0, %s302
      %s317 = sphi 0, %s303
      %s321 = sphi 0, %s321
      %s323 = sphi 0, %s321
      %s324 = sphi 0, %s323
      %s338 = sphi 0, %s324
      %s342 = sphi 0, %s342
      %s344 = sphi 0, %s342
      %s345 = sphi 0, %s344
      %s359 = sphi 0, %s345
      %s363 = sphi 0, %s363
      %s365 = sphi 0, %s363
      %s366 = sphi 0, %s365
      %s380 = sphi 0, %s366
      %s388 = sphi 0, %s390
      %s391 = sphi 0, %s388
      %s392 = sphi 0, %s391
      %s408 = sphi 0, %s392
      %s416 = sphi 0, %s418
      %s419 = sphi 0, %s416
      %s420 = sphi 0, %s419
      %s436 = sphi 0, %s420
    $region4: #{freprocess_forward.4} parent=1 // loop_header_branch
      %45 = sbr.rel (%p43) target = $region8
    $region5: #{freprocess_forward.4} parent=1 // loop_body
      %s47 = ssub.s32 %s42, 1
      %s48 = ssub.s32 %s42, 2
      %s55 = sadd.s32 1, %s50
      %p56 = scmp.ge.s32.totalorder %s55, 1
      %s57 = scalar_select %p56, 0, %s55
      %s58 = sadd.s32 1, %s49
      %s59 = scalar_select %p56, %s58, %s49
      %p60 = scmp.ge.s32.totalorder %s59, 2
      %s61 = scalar_select %p60, 0, %s59
      %s62 = ssub.s32 %s49, %s61
      %s63 = ssub.s32 %s50, %s57
      %s64 = sor.u32 %s62, %s63
      %p65 = scmp.eq.s32.totalorder %s64, 0
      %s67 = sadd.s32 %s66, 1
      %s68 = scalar_select %p65, %s66, %s67
      %p71 = pneg %p65
      %p72 = scmp.eq.s32.totalorder %s42, 1
      %p73 = por %p71, %p72
      %p74 = scmp.ne.s32.totalorder %s66, %s69
      %p75 = scmp.eq.s32.totalorder %s42, 0
      %p76 = por %p74, %p75
      %p77 = scmp.ne.s32.totalorder %s66, %s69
      %p78 = scmp.eq.s32.totalorder %s47, 1
      %p79 = por %p77, %p78
      %p80 = scmp.ne.s32.totalorder %s69, %s70
      %p81 = scmp.eq.s32.totalorder %s47, 0
      %p82 = por %p80, %p81
      %p83 = scmp.ne.s32.totalorder %s69, %s70
      %p84 = scmp.eq.s32.totalorder %s48, 1
      %p85 = por %p83, %p84
      %p87 = scmp.ne.s32.totalorder %s70, %s86
      %p88 = scmp.eq.s32.totalorder %s48, 0
      %p89 = por %p87, %p88
      %s90 = ssub.s32 %s49, %s61
      %s91 = ssub.s32 %s50, %s57
      %s92 = sor.u32 %s90, %s91
      %p93 = scmp.eq.s32.totalorder %s92, 0
      %s95 = sadd.s32 %s94, 1
      %s96 = scalar_select %p93, %s94, %s95
      %p99 = pneg %p93
      %p100 = scmp.eq.s32.totalorder %s42, 1
      %p101 = por %p99, %p100
      %p102 = scmp.ne.s32.totalorder %s94, %s97
      %p103 = scmp.eq.s32.totalorder %s42, 0
      %p104 = por %p102, %p103
      %p105 = scmp.ne.s32.totalorder %s94, %s97
      %p106 = scmp.eq.s32.totalorder %s47, 1
      %p107 = por %p105, %p106
      %p108 = scmp.ne.s32.totalorder %s97, %s98
      %p109 = scmp.eq.s32.totalorder %s47, 0
      %p110 = por %p108, %p109
      %p111 = scmp.ne.s32.totalorder %s97, %s98
      %p112 = scmp.eq.s32.totalorder %s48, 1
      %p113 = por %p111, %p112
      %p115 = scmp.ne.s32.totalorder %s98, %s114
      %p116 = scmp.eq.s32.totalorder %s48, 0
      %p117 = por %p115, %p116
      %s118 = ssub.s32 %s49, %s61
      %s119 = ssub.s32 %s50, %s57
      %s120 = sor.u32 %s118, %s119
      %p121 = scmp.eq.s32.totalorder %s120, 0
      %s123 = sadd.s32 %s122, 1
      %s124 = scalar_select %p121, %s122, %s123
      %p127 = pneg %p121
      %p128 = scmp.eq.s32.totalorder %s42, 1
      %p129 = por %p127, %p128
      %p130 = scmp.ne.s32.totalorder %s122, %s125
      %p131 = scmp.eq.s32.totalorder %s42, 0
      %p132 = por %p130, %p131
      %p133 = scmp.ne.s32.totalorder %s122, %s125
      %p134 = scmp.eq.s32.totalorder %s47, 1
      %p135 = por %p133, %p134
      %p136 = scmp.ne.s32.totalorder %s125, %s126
      %p137 = scmp.eq.s32.totalorder %s47, 0
      %p138 = por %p136, %p137
      %p139 = scmp.ne.s32.totalorder %s125, %s126
      %p140 = scmp.eq.s32.totalorder %s48, 1
      %p141 = por %p139, %p140
      %p143 = scmp.ne.s32.totalorder %s126, %s142
      %p144 = scmp.eq.s32.totalorder %s48, 0
      %p145 = por %p143, %p144
      %s146 = ssub.s32 %s49, %s61
      %s147 = ssub.s32 %s50, %s57
      %s148 = sor.u32 %s146, %s147
      %p149 = scmp.eq.s32.totalorder %s148, 0
      %s151 = sadd.s32 %s150, 1
      %s152 = scalar_select %p149, %s150, %s151
      %p155 = pneg %p149
      %p156 = scmp.eq.s32.totalorder %s42, 1
      %p157 = por %p155, %p156
      %p158 = scmp.ne.s32.totalorder %s150, %s153
      %p159 = scmp.eq.s32.totalorder %s42, 0
      %p160 = por %p158, %p159
      %p161 = scmp.ne.s32.totalorder %s150, %s153
      %p162 = scmp.eq.s32.totalorder %s47, 1
      %p163 = por %p161, %p162
      %p164 = scmp.ne.s32.totalorder %s153, %s154
      %p165 = scmp.eq.s32.totalorder %s47, 0
      %p166 = por %p164, %p165
      %p167 = scmp.ne.s32.totalorder %s153, %s154
      %p168 = scmp.eq.s32.totalorder %s48, 1
      %p169 = por %p167, %p168
      %p171 = scmp.ne.s32.totalorder %s154, %s170
      %p172 = scmp.eq.s32.totalorder %s48, 0
      %p173 = por %p171, %p172
      %s175 = sadd.s32 %s174, 1
      %p178 = scmp.eq.s32.totalorder %s42, 1
      %p179 = scmp.ne.s32.totalorder %s174, %s176
      %p180 = scmp.eq.s32.totalorder %s42, 0
      %p181 = por %p179, %p180
      %p182 = scmp.ne.s32.totalorder %s174, %s176
      %p183 = scmp.eq.s32.totalorder %s47, 1
      %p184 = por %p182, %p183
      %p185 = scmp.ne.s32.totalorder %s176, %s177
      %p186 = scmp.eq.s32.totalorder %s47, 0
      %p187 = por %p185, %p186
      %p188 = scmp.ne.s32.totalorder %s176, %s177
      %p189 = scmp.eq.s32.totalorder %s48, 1
      %p190 = por %p188, %p189
      %p192 = scmp.ne.s32.totalorder %s177, %s191
      %p193 = scmp.eq.s32.totalorder %s48, 0
      %p194 = por %p192, %p193
      %s196 = sadd.s32 %s195, 1
      %p199 = scmp.eq.s32.totalorder %s42, 1
      %p200 = scmp.ne.s32.totalorder %s195, %s197
      %p201 = scmp.eq.s32.totalorder %s42, 0
      %p202 = por %p200, %p201
      %p203 = scmp.ne.s32.totalorder %s195, %s197
      %p204 = scmp.eq.s32.totalorder %s47, 1
      %p205 = por %p203, %p204
      %p206 = scmp.ne.s32.totalorder %s197, %s198
      %p207 = scmp.eq.s32.totalorder %s47, 0
      %p208 = por %p206, %p207
      %p209 = scmp.ne.s32.totalorder %s197, %s198
      %p210 = scmp.eq.s32.totalorder %s48, 1
      %p211 = por %p209, %p210
      %p213 = scmp.ne.s32.totalorder %s198, %s212
      %p214 = scmp.eq.s32.totalorder %s48, 0
      %p215 = por %p213, %p214
      %s217 = sadd.s32 %s216, 1
      %p220 = scmp.eq.s32.totalorder %s42, 1
      %p221 = scmp.ne.s32.totalorder %s216, %s218
      %p222 = scmp.eq.s32.totalorder %s42, 0
      %p223 = por %p221, %p222
      %p224 = scmp.ne.s32.totalorder %s216, %s218
      %p225 = scmp.eq.s32.totalorder %s47, 1
      %p226 = por %p224, %p225
      %p227 = scmp.ne.s32.totalorder %s218, %s219
      %p228 = scmp.eq.s32.totalorder %s47, 0
      %p229 = por %p227, %p228
      %p230 = scmp.ne.s32.totalorder %s218, %s219
      %p231 = scmp.eq.s32.totalorder %s48, 1
      %p232 = por %p230, %p231
      %p234 = scmp.ne.s32.totalorder %s219, %s233
      %p235 = scmp.eq.s32.totalorder %s48, 0
      %p236 = por %p234, %p235
      %s238 = sadd.s32 %s237, 1
      %p241 = scmp.eq.s32.totalorder %s42, 1
      %p242 = scmp.ne.s32.totalorder %s237, %s239
      %p243 = scmp.eq.s32.totalorder %s42, 0
      %p244 = por %p242, %p243
      %p245 = scmp.ne.s32.totalorder %s237, %s239
      %p246 = scmp.eq.s32.totalorder %s47, 1
      %p247 = por %p245, %p246
      %p248 = scmp.ne.s32.totalorder %s239, %s240
      %p249 = scmp.eq.s32.totalorder %s47, 0
      %p250 = por %p248, %p249
      %p251 = scmp.ne.s32.totalorder %s239, %s240
      %p252 = scmp.eq.s32.totalorder %s48, 1
      %p253 = por %p251, %p252
      %p255 = scmp.ne.s32.totalorder %s240, %s254
      %p256 = scmp.eq.s32.totalorder %s48, 0
      %p257 = por %p255, %p256
      %s259 = sadd.s32 %s258, 1
      %p262 = scmp.eq.s32.totalorder %s42, 1
      %p263 = scmp.ne.s32.totalorder %s258, %s260
      %p264 = scmp.eq.s32.totalorder %s42, 0
      %p265 = por %p263, %p264
      %p266 = scmp.ne.s32.totalorder %s258, %s260
      %p267 = scmp.eq.s32.totalorder %s47, 1
      %p268 = por %p266, %p267
      %p269 = scmp.ne.s32.totalorder %s260, %s261
      %p270 = scmp.eq.s32.totalorder %s47, 0
      %p271 = por %p269, %p270
      %p272 = scmp.ne.s32.totalorder %s260, %s261
      %p273 = scmp.eq.s32.totalorder %s48, 1
      %p274 = por %p272, %p273
      %p276 = scmp.ne.s32.totalorder %s261, %s275
      %p277 = scmp.eq.s32.totalorder %s48, 0
      %p278 = por %p276, %p277
      %s280 = sadd.s32 %s279, 1
      %p283 = scmp.eq.s32.totalorder %s42, 1
      %p284 = scmp.ne.s32.totalorder %s279, %s281
      %p285 = scmp.eq.s32.totalorder %s42, 0
      %p286 = por %p284, %p285
      %p287 = scmp.ne.s32.totalorder %s279, %s281
      %p288 = scmp.eq.s32.totalorder %s47, 1
      %p289 = por %p287, %p288
      %p290 = scmp.ne.s32.totalorder %s281, %s282
      %p291 = scmp.eq.s32.totalorder %s47, 0
      %p292 = por %p290, %p291
      %p293 = scmp.ne.s32.totalorder %s281, %s282
      %p294 = scmp.eq.s32.totalorder %s48, 1
      %p295 = por %p293, %p294
      %p297 = scmp.ne.s32.totalorder %s282, %s296
      %p298 = scmp.eq.s32.totalorder %s48, 0
      %p299 = por %p297, %p298
      %s301 = sadd.s32 %s300, 1
      %p304 = scmp.eq.s32.totalorder %s42, 1
      %p305 = scmp.ne.s32.totalorder %s300, %s302
      %p306 = scmp.eq.s32.totalorder %s42, 0
      %p307 = por %p305, %p306
      %p308 = scmp.ne.s32.totalorder %s300, %s302
      %p309 = scmp.eq.s32.totalorder %s47, 1
      %p310 = por %p308, %p309
      %p311 = scmp.ne.s32.totalorder %s302, %s303
      %p312 = scmp.eq.s32.totalorder %s47, 0
      %p313 = por %p311, %p312
      %p314 = scmp.ne.s32.totalorder %s302, %s303
      %p315 = scmp.eq.s32.totalorder %s48, 1
      %p316 = por %p314, %p315
      %p318 = scmp.ne.s32.totalorder %s303, %s317
      %p319 = scmp.eq.s32.totalorder %s48, 0
      %p320 = por %p318, %p319
      %s322 = sadd.s32 %s321, 1
      %p325 = scmp.eq.s32.totalorder %s42, 1
      %p326 = scmp.ne.s32.totalorder %s321, %s323
      %p327 = scmp.eq.s32.totalorder %s42, 0
      %p328 = por %p326, %p327
      %p329 = scmp.ne.s32.totalorder %s321, %s323
      %p330 = scmp.eq.s32.totalorder %s47, 1
      %p331 = por %p329, %p330
      %p332 = scmp.ne.s32.totalorder %s323, %s324
      %p333 = scmp.eq.s32.totalorder %s47, 0
      %p334 = por %p332, %p333
      %p335 = scmp.ne.s32.totalorder %s323, %s324
      %p336 = scmp.eq.s32.totalorder %s48, 1
      %p337 = por %p335, %p336
      %p339 = scmp.ne.s32.totalorder %s324, %s338
      %p340 = scmp.eq.s32.totalorder %s48, 0
      %p341 = por %p339, %p340
      %s343 = sadd.s32 %s342, 1
      %p346 = scmp.eq.s32.totalorder %s42, 1
      %p347 = scmp.ne.s32.totalorder %s342, %s344
      %p348 = scmp.eq.s32.totalorder %s42, 0
      %p349 = por %p347, %p348
      %p350 = scmp.ne.s32.totalorder %s342, %s344
      %p351 = scmp.eq.s32.totalorder %s47, 1
      %p352 = por %p350, %p351
      %p353 = scmp.ne.s32.totalorder %s344, %s345
      %p354 = scmp.eq.s32.totalorder %s47, 0
      %p355 = por %p353, %p354
      %p356 = scmp.ne.s32.totalorder %s344, %s345
      %p357 = scmp.eq.s32.totalorder %s48, 1
      %p358 = por %p356, %p357
      %p360 = scmp.ne.s32.totalorder %s345, %s359
      %p361 = scmp.eq.s32.totalorder %s48, 0
      %p362 = por %p360, %p361
      %s364 = sadd.s32 %s363, 1
      %p367 = scmp.eq.s32.totalorder %s42, 1
      %p368 = scmp.ne.s32.totalorder %s363, %s365
      %p369 = scmp.eq.s32.totalorder %s42, 0
      %p370 = por %p368, %p369
      %p371 = scmp.ne.s32.totalorder %s363, %s365
      %p372 = scmp.eq.s32.totalorder %s47, 1
      %p373 = por %p371, %p372
      %p374 = scmp.ne.s32.totalorder %s365, %s366
      %p375 = scmp.eq.s32.totalorder %s47, 0
      %p376 = por %p374, %p375
      %p377 = scmp.ne.s32.totalorder %s365, %s366
      %p378 = scmp.eq.s32.totalorder %s48, 1
      %p379 = por %p377, %p378
      %p381 = scmp.ne.s32.totalorder %s366, %s380
      %p382 = scmp.eq.s32.totalorder %s48, 0
      %p383 = por %p381, %p382
      %s384 = ssub.s32 %s49, %s61
      %s385 = ssub.s32 %s50, %s57
      %s386 = sor.u32 %s384, %s385
      %p387 = scmp.eq.s32.totalorder %s386, 0
      %s389 = sadd.s32 %s388, 1
      %s390 = scalar_select %p387, %s388, %s389
      %p393 = pneg %p387
      %p394 = scmp.eq.s32.totalorder %s42, 1
      %p395 = por %p393, %p394
      %p396 = scmp.ne.s32.totalorder %s388, %s391
      %p397 = scmp.eq.s32.totalorder %s42, 0
      %p398 = por %p396, %p397
      %p399 = scmp.ne.s32.totalorder %s388, %s391
      %p400 = scmp.eq.s32.totalorder %s47, 1
      %p401 = por %p399, %p400
      %p402 = scmp.ne.s32.totalorder %s391, %s392
      %p403 = scmp.eq.s32.totalorder %s47, 0
      %p404 = por %p402, %p403
      %p405 = scmp.ne.s32.totalorder %s391, %s392
      %p406 = scmp.eq.s32.totalorder %s48, 1
      %p407 = por %p405, %p406
      %p409 = scmp.ne.s32.totalorder %s392, %s408
      %p410 = scmp.eq.s32.totalorder %s48, 0
      %p411 = por %p409, %p410
      %s412 = ssub.s32 %s49, %s61
      %s413 = ssub.s32 %s50, %s57
      %s414 = sor.u32 %s412, %s413
      %p415 = scmp.eq.s32.totalorder %s414, 0
      %s417 = sadd.s32 %s416, 1
      %s418 = scalar_select %p415, %s416, %s417
      %p421 = pneg %p415
      %p422 = scmp.eq.s32.totalorder %s42, 1
      %p423 = por %p421, %p422
      %p424 = scmp.ne.s32.totalorder %s416, %s419
      %p425 = scmp.eq.s32.totalorder %s42, 0
      %p426 = por %p424, %p425
      %p427 = scmp.ne.s32.totalorder %s416, %s419
      %p428 = scmp.eq.s32.totalorder %s47, 1
      %p429 = por %p427, %p428
      %p430 = scmp.ne.s32.totalorder %s419, %s420
      %p431 = scmp.eq.s32.totalorder %s47, 0
      %p432 = por %p430, %p431
      %p433 = scmp.ne.s32.totalorder %s419, %s420
      %p434 = scmp.eq.s32.totalorder %s48, 1
      %p435 = por %p433, %p434
      %p437 = scmp.ne.s32.totalorder %s420, %s436
      %p438 = scmp.eq.s32.totalorder %s48, 0
      %p439 = por %p437, %p438
      %p440 = scmp.le.s32.totalorder 1, %s42
      %p441 = scmp.lt.s32.totalorder %s42, 3
      %p442 = pnand %p440, %p441
      %p443 = pneg %p442
      // Predicated region
      $region9: #{freprocess_forward.4} parent=5 // pred_check
        _
      $region10: #{freprocess_forward.4} parent=5 // pred_check_branch
        %445 = sbr.rel (%p442) target = $region12
      $region11: #{freprocess_forward.4} parent=5 // pred_region
        %s446 = ssub.s32 %s42, 1
        // Predicated region
        $region13: #{freprocess_forward.4} parent=11 // pred_check
          %p447 = pneg %p187
        $region14: #{freprocess_forward.4} parent=11 // pred_check_branch
          %449 = sbr.rel (%p447) target = $region16
        $region15: #{freprocess_forward.4} parent=11 // pred_region
          %s451 = ssub.s32 64, 64
          %452 = vsyncadd [#allocation9], %s451
          %s454 = sshll.u32 [#allocation10], 4
          %s455 = int_to_ptr.vmem [resolvable:$true] %s454
          %457 = dma.hbm_to_vmem [thread:$0]  %s4, 64, %s455, [#allocation9]
        $region16: #{freprocess_forward.4} parent=11 // pred_fallthru
          _
        // Predicated region
        $region17: #{freprocess_forward.4} parent=11 // pred_check
          %p458 = pneg %p208
        $region18: #{freprocess_forward.4} parent=11 // pred_check_branch
          %460 = sbr.rel (%p458) target = $region20
        $region19: #{freprocess_forward.4} parent=11 // pred_region
          %s462 = ssub.s32 64, 64
          %463 = vsyncadd [#allocation12], %s462
          %s465 = sshll.u32 [#allocation11], 4
          %s466 = int_to_ptr.vmem [resolvable:$true] %s465
          %468 = dma.hbm_to_vmem [thread:$0]  %s5, 64, %s466, [#allocation12]
        $region20: #{freprocess_forward.4} parent=11 // pred_fallthru
          _
        // Predicated region
        $region21: #{freprocess_forward.4} parent=11 // pred_check
          %p469 = pneg %p229
        $region22: #{freprocess_forward.4} parent=11 // pred_check_branch
          %471 = sbr.rel (%p469) target = $region24
        $region23: #{freprocess_forward.4} parent=11 // pred_region
          %s473 = ssub.s32 64, 64
          %474 = vsyncadd [#allocation12], %s473
          %s476 = sshll.u32 [#allocation13], 4
          %s477 = int_to_ptr.vmem [resolvable:$true] %s476
          %479 = dma.hbm_to_vmem [thread:$0]  %s6, 64, %s477, [#allocation12]
        $region24: #{freprocess_forward.4} parent=11 // pred_fallthru
          _
        // Predicated region
        $region25: #{freprocess_forward.4} parent=11 // pred_check
          %p480 = pneg %p250
        $region26: #{freprocess_forward.4} parent=11 // pred_check_branch
          %482 = sbr.rel (%p480) target = $region28
        $region27: #{freprocess_forward.4} parent=11 // pred_region
          %s484 = ssub.s32 64, 64
          %485 = vsyncadd [#allocation15], %s484
          %s487 = sshll.u32 [#allocation14], 4
          %s488 = int_to_ptr.vmem [resolvable:$true] %s487
          %490 = dma.hbm_to_vmem [thread:$0]  %s7, 64, %s488, [#allocation15]
        $region28: #{freprocess_forward.4} parent=11 // pred_fallthru
          _
        // Predicated region
        $region29: #{freprocess_forward.4} parent=11 // pred_check
          %p491 = pneg %p271
        $region30: #{freprocess_forward.4} parent=11 // pred_check_branch
          %493 = sbr.rel (%p491) target = $region32
        $region31: #{freprocess_forward.4} parent=11 // pred_region
          %s495 = ssub.s32 64, 64
          %496 = vsyncadd [#allocation15], %s495
          %s498 = sshll.u32 [#allocation16], 4
          %s499 = int_to_ptr.vmem [resolvable:$true] %s498
          %501 = dma.hbm_to_vmem [thread:$0]  %s8, 64, %s499, [#allocation15]
        $region32: #{freprocess_forward.4} parent=11 // pred_fallthru
          _
        // Predicated region
        $region33: #{freprocess_forward.4} parent=11 // pred_check
          %p502 = pneg %p292
        $region34: #{freprocess_forward.4} parent=11 // pred_check_branch
          %504 = sbr.rel (%p502) target = $region36
        $region35: #{freprocess_forward.4} parent=11 // pred_region
          %s506 = ssub.s32 64, 64
          %507 = vsyncadd [#allocation18], %s506
          %s509 = sshll.u32 [#allocation17], 4
          %s510 = int_to_ptr.vmem [resolvable:$true] %s509
          %512 = dma.hbm_to_vmem [thread:$0]  %s9, 64, %s510, [#allocation18]
        $region36: #{freprocess_forward.4} parent=11 // pred_fallthru
          _
        // Predicated region
        $region37: #{freprocess_forward.4} parent=11 // pred_check
          %p513 = pneg %p313
        $region38: #{freprocess_forward.4} parent=11 // pred_check_branch
          %515 = sbr.rel (%p513) target = $region40
        $region39: #{freprocess_forward.4} parent=11 // pred_region
          %s517 = ssub.s32 64, 64
          %518 = vsyncadd [#allocation18], %s517
          %s520 = sshll.u32 [#allocation19], 4
          %s521 = int_to_ptr.vmem [resolvable:$true] %s520
          %523 = dma.hbm_to_vmem [thread:$0]  %s10, 64, %s521, [#allocation18]
        $region40: #{freprocess_forward.4} parent=11 // pred_fallthru
          _
        // Predicated region
        $region41: #{freprocess_forward.4} parent=11 // pred_check
          %p524 = pneg %p334
        $region42: #{freprocess_forward.4} parent=11 // pred_check_branch
          %526 = sbr.rel (%p524) target = $region44
        $region43: #{freprocess_forward.4} parent=11 // pred_region
          %s528 = ssub.s32 64, 64
          %529 = vsyncadd [#allocation21], %s528
          %s531 = sshll.u32 [#allocation20], 4
          %s532 = int_to_ptr.vmem [resolvable:$true] %s531
          %534 = dma.hbm_to_vmem [thread:$0]  %s11, 64, %s532, [#allocation21]
        $region44: #{freprocess_forward.4} parent=11 // pred_fallthru
          _
        // Predicated region
        $region45: #{freprocess_forward.4} parent=11 // pred_check
          %p535 = pneg %p355
        $region46: #{freprocess_forward.4} parent=11 // pred_check_branch
          %537 = sbr.rel (%p535) target = $region48
        $region47: #{freprocess_forward.4} parent=11 // pred_region
          %s539 = ssub.s32 64, 64
          %540 = vsyncadd [#allocation21], %s539
          %s542 = sshll.u32 [#allocation22], 4
          %s543 = int_to_ptr.vmem [resolvable:$true] %s542
          %545 = dma.hbm_to_vmem [thread:$0]  %s12, 64, %s543, [#allocation21]
        $region48: #{freprocess_forward.4} parent=11 // pred_fallthru
          _
        // Predicated region
        $region49: #{freprocess_forward.4} parent=11 // pred_check
          %p546 = pneg %p376
        $region50: #{freprocess_forward.4} parent=11 // pred_check_branch
          %548 = sbr.rel (%p546) target = $region52
        $region51: #{freprocess_forward.4} parent=11 // pred_region
          %s550 = ssub.s32 64, 64
          %551 = vsyncadd [#allocation24], %s550
          %s553 = sshll.u32 [#allocation23], 4
          %s554 = int_to_ptr.vmem [resolvable:$true] %s553
          %556 = dma.hbm_to_vmem [thread:$0]  %s13, 64, %s554, [#allocation24]
        $region52: #{freprocess_forward.4} parent=11 // pred_fallthru
          _
      $region12: #{freprocess_forward.4} parent=5 // pred_fallthru
        _
      %p557 = scmp.lt.s32.totalorder %s42, 2
      // Predicated region
      $region53: #{freprocess_forward.4} parent=5 // pred_check
        %p558 = pneg %p557
      $region54: #{freprocess_forward.4} parent=5 // pred_check_branch
        %560 = sbr.rel (%p558) target = $region56
      $region55: #{freprocess_forward.4} parent=5 // pred_region
        // Predicated region
        $region57: #{freprocess_forward.4} parent=55 // pred_check
          %p561 = pneg %p76
        $region58: #{freprocess_forward.4} parent=55 // pred_check_branch
          %563 = sbr.rel (%p561) target = $region60
        $region59: #{freprocess_forward.4} parent=55 // pred_region
          %s564 = sand.u32 %s66, 1
          %s565 = scalar_lea.sflag [#allocation3], %s564
          %s566 = sand.u32 %s66, 1
          %s567 = smul.addr %s566, 8
          %s568 = scalar_lea.vmem [#allocation2], %s567
          %s569 = smul.u32 2, %s50
          %s571 = ssub.s32 128, 128
          %572 = vsyncadd %s565, %s571
          %s573 = smul.addr %s49, 2
          %s574 = sadd.s32 %s569, %s573
          %s575 = smul.addr %s574, 64
          %s576 = scalar_lea.hbm %s0, %s575
          %s578 = sshll.u32 %s568, 4
          %s579 = int_to_ptr.vmem [resolvable:$true] %s578
          %581 = dma.hbm_to_vmem [thread:$0]  %s576, 128, %s579, %s565
        $region60: #{freprocess_forward.4} parent=55 // pred_fallthru
          _
        // Predicated region
        $region61: #{freprocess_forward.4} parent=55 // pred_check
          %p582 = pneg %p104
        $region62: #{freprocess_forward.4} parent=55 // pred_check_branch
          %584 = sbr.rel (%p582) target = $region64
        $region63: #{freprocess_forward.4} parent=55 // pred_region
          %s585 = sand.u32 %s42, 1
          %s586 = scalar_lea.sflag [#allocation6], %s585
          %s587 = sand.u32 %s94, 1
          %s588 = smul.addr %s587, 8
          %s589 = scalar_lea.vmem [#allocation5], %s588
          %s590 = smul.u32 2, %s50
          %s592 = ssub.s32 128, 128
          %593 = vsyncadd %s586, %s592
          %s594 = smul.addr %s49, 2
          %s595 = sadd.s32 %s590, %s594
          %s596 = smul.addr %s595, 64
          %s597 = scalar_lea.hbm %s1, %s596
          %s599 = sshll.u32 %s589, 4
          %s600 = int_to_ptr.vmem [resolvable:$true] %s599
          %602 = dma.hbm_to_vmem [thread:$0]  %s597, 128, %s600, %s586
        $region64: #{freprocess_forward.4} parent=55 // pred_fallthru
          _
        // Predicated region
        $region65: #{freprocess_forward.4} parent=55 // pred_check
          %p603 = pneg %p132
        $region66: #{freprocess_forward.4} parent=55 // pred_check_branch
          %605 = sbr.rel (%p603) target = $region68
        $region67: #{freprocess_forward.4} parent=55 // pred_region
          %s606 = sand.u32 %s42, 1
          %s607 = scalar_lea.sflag [#allocation6], %s606
          %s608 = sand.u32 %s122, 1
          %s609 = smul.addr %s608, 8
          %s610 = scalar_lea.vmem [#allocation7], %s609
          %s611 = smul.u32 2, %s50
          %s613 = ssub.s32 128, 128
          %614 = vsyncadd %s607, %s613
          %s615 = smul.addr %s49, 2
          %s616 = sadd.s32 %s611, %s615
          %s617 = smul.addr %s616, 64
          %s618 = scalar_lea.hbm %s2, %s617
          %s620 = sshll.u32 %s610, 4
          %s621 = int_to_ptr.vmem [resolvable:$true] %s620
          %623 = dma.hbm_to_vmem [thread:$0]  %s618, 128, %s621, %s607
        $region68: #{freprocess_forward.4} parent=55 // pred_fallthru
          _
        // Predicated region
        $region69: #{freprocess_forward.4} parent=55 // pred_check
          %p624 = pneg %p160
        $region70: #{freprocess_forward.4} parent=55 // pred_check_branch
          %626 = sbr.rel (%p624) target = $region72
        $region71: #{freprocess_forward.4} parent=55 // pred_region
          %s627 = sand.u32 %s42, 1
          %s628 = scalar_lea.sflag [#allocation9], %s627
          %s629 = sand.u32 %s150, 1
          %s630 = smul.addr %s629, 8
          %s631 = scalar_lea.vmem [#allocation8], %s630
          %s632 = smul.u32 2, %s50
          %s634 = ssub.s32 128, 128
          %635 = vsyncadd %s628, %s634
          %s636 = smul.addr %s49, 2
          %s637 = sadd.s32 %s632, %s636
          %s638 = smul.addr %s637, 64
          %s639 = scalar_lea.hbm %s3, %s638
          %s641 = sshll.u32 %s631, 4
          %s642 = int_to_ptr.vmem [resolvable:$true] %s641
          %644 = dma.hbm_to_vmem [thread:$0]  %s639, 128, %s642, %s628
        $region72: #{freprocess_forward.4} parent=55 // pred_fallthru
          _
      $region56: #{freprocess_forward.4} parent=5 // pred_fallthru
        _
      %p645 = scmp.le.s32.totalorder 1, %s42
      %p646 = scmp.lt.s32.totalorder %s42, 3
      %p647 = pnand %p645, %p646
      %p648 = pneg %p647
      // Predicated region
      $region73: #{freprocess_forward.4} parent=5 // pred_check
        _
      $region74: #{freprocess_forward.4} parent=5 // pred_check_branch
        %650 = sbr.rel (%p647) target = $region76
      $region75: #{freprocess_forward.4} parent=5 // pred_region
        %s651 = ssub.s32 %s42, 1
        %s652 = sand.u32 %s69, 1
        %s653 = scalar_lea.sflag [#allocation3], %s652
        %s654 = sand.u32 %s69, 1
        %s655 = smul.addr %s654, 8
        %s656 = scalar_lea.vmem [#allocation2], %s655
        // Predicated region
        $region77: #{freprocess_forward.4} parent=75 // pred_check
          %p657 = pneg %p82
        $region78: #{freprocess_forward.4} parent=75 // pred_check_branch
          %659 = sbr.rel (%p657) target = $region80
        $region79: #{freprocess_forward.4} parent=75 // pred_region
          %660 = dma.done %s653, 128
        $region80: #{freprocess_forward.4} parent=75 // pred_fallthru
          _
        %s661 = sand.u32 %s47, 1
        %s662 = scalar_lea.sflag [#allocation6], %s661
        %s663 = sand.u32 %s97, 1
        %s664 = smul.addr %s663, 8
        %s665 = scalar_lea.vmem [#allocation5], %s664
        // Predicated region
        $region81: #{freprocess_forward.4} parent=75 // pred_check
          %p666 = pneg %p110
        $region82: #{freprocess_forward.4} parent=75 // pred_check_branch
          %668 = sbr.rel (%p666) target = $region84
        $region83: #{freprocess_forward.4} parent=75 // pred_region
          %669 = dma.done %s662, 128
        $region84: #{freprocess_forward.4} parent=75 // pred_fallthru
          _
        %s670 = sand.u32 %s47, 1
        %s671 = scalar_lea.sflag [#allocation6], %s670
        %s672 = sand.u32 %s125, 1
        %s673 = smul.addr %s672, 8
        %s674 = scalar_lea.vmem [#allocation7], %s673
        // Predicated region
        $region85: #{freprocess_forward.4} parent=75 // pred_check
          %p675 = pneg %p138
        $region86: #{freprocess_forward.4} parent=75 // pred_check_branch
          %677 = sbr.rel (%p675) target = $region88
        $region87: #{freprocess_forward.4} parent=75 // pred_region
          %678 = dma.done %s671, 128
        $region88: #{freprocess_forward.4} parent=75 // pred_fallthru
          _
        %s679 = sand.u32 %s47, 1
        %s680 = scalar_lea.sflag [#allocation9], %s679
        %s681 = sand.u32 %s153, 1
        %s682 = smul.addr %s681, 8
        %s683 = scalar_lea.vmem [#allocation8], %s682
        // Predicated region
        $region89: #{freprocess_forward.4} parent=75 // pred_check
          %p684 = pneg %p166
        $region90: #{freprocess_forward.4} parent=75 // pred_check_branch
          %686 = sbr.rel (%p684) target = $region92
        $region91: #{freprocess_forward.4} parent=75 // pred_region
          %687 = dma.done %s680, 128
        $region92: #{freprocess_forward.4} parent=75 // pred_fallthru
          _
        // Predicated region
        $region93: #{freprocess_forward.4} parent=75 // pred_check
          %p688 = pneg %p187
        $region94: #{freprocess_forward.4} parent=75 // pred_check_branch
          %690 = sbr.rel (%p688) target = $region96
        $region95: #{freprocess_forward.4} parent=75 // pred_region
          %691 = dma.done [#allocation9], 64
        $region96: #{freprocess_forward.4} parent=75 // pred_fallthru
          _
        // Predicated region
        $region97: #{freprocess_forward.4} parent=75 // pred_check
          %p692 = pneg %p208
        $region98: #{freprocess_forward.4} parent=75 // pred_check_branch
          %694 = sbr.rel (%p692) target = $region100
        $region99: #{freprocess_forward.4} parent=75 // pred_region
          %695 = dma.done [#allocation12], 64
        $region100: #{freprocess_forward.4} parent=75 // pred_fallthru
          _
        // Predicated region
        $region101: #{freprocess_forward.4} parent=75 // pred_check
          %p696 = pneg %p229
        $region102: #{freprocess_forward.4} parent=75 // pred_check_branch
          %698 = sbr.rel (%p696) target = $region104
        $region103: #{freprocess_forward.4} parent=75 // pred_region
          %699 = dma.done [#allocation12], 64
        $region104: #{freprocess_forward.4} parent=75 // pred_fallthru
          _
        // Predicated region
        $region105: #{freprocess_forward.4} parent=75 // pred_check
          %p700 = pneg %p250
        $region106: #{freprocess_forward.4} parent=75 // pred_check_branch
          %702 = sbr.rel (%p700) target = $region108
        $region107: #{freprocess_forward.4} parent=75 // pred_region
          %703 = dma.done [#allocation15], 64
        $region108: #{freprocess_forward.4} parent=75 // pred_fallthru
          _
        // Predicated region
        $region109: #{freprocess_forward.4} parent=75 // pred_check
          %p704 = pneg %p271
        $region110: #{freprocess_forward.4} parent=75 // pred_check_branch
          %706 = sbr.rel (%p704) target = $region112
        $region111: #{freprocess_forward.4} parent=75 // pred_region
          %707 = dma.done [#allocation15], 64
        $region112: #{freprocess_forward.4} parent=75 // pred_fallthru
          _
        // Predicated region
        $region113: #{freprocess_forward.4} parent=75 // pred_check
          %p708 = pneg %p292
        $region114: #{freprocess_forward.4} parent=75 // pred_check_branch
          %710 = sbr.rel (%p708) target = $region116
        $region115: #{freprocess_forward.4} parent=75 // pred_region
          %711 = dma.done [#allocation18], 64
        $region116: #{freprocess_forward.4} parent=75 // pred_fallthru
          _
        // Predicated region
        $region117: #{freprocess_forward.4} parent=75 // pred_check
          %p712 = pneg %p313
        $region118: #{freprocess_forward.4} parent=75 // pred_check_branch
          %714 = sbr.rel (%p712) target = $region120
        $region119: #{freprocess_forward.4} parent=75 // pred_region
          %715 = dma.done [#allocation18], 64
        $region120: #{freprocess_forward.4} parent=75 // pred_fallthru
          _
        // Predicated region
        $region121: #{freprocess_forward.4} parent=75 // pred_check
          %p716 = pneg %p334
        $region122: #{freprocess_forward.4} parent=75 // pred_check_branch
          %718 = sbr.rel (%p716) target = $region124
        $region123: #{freprocess_forward.4} parent=75 // pred_region
          %719 = dma.done [#allocation21], 64
        $region124: #{freprocess_forward.4} parent=75 // pred_fallthru
          _
        // Predicated region
        $region125: #{freprocess_forward.4} parent=75 // pred_check
          %p720 = pneg %p355
        $region126: #{freprocess_forward.4} parent=75 // pred_check_branch
          %722 = sbr.rel (%p720) target = $region128
        $region127: #{freprocess_forward.4} parent=75 // pred_region
          %723 = dma.done [#allocation21], 64
        $region128: #{freprocess_forward.4} parent=75 // pred_fallthru
          _
        // Predicated region
        $region129: #{freprocess_forward.4} parent=75 // pred_check
          %p724 = pneg %p376
        $region130: #{freprocess_forward.4} parent=75 // pred_check_branch
          %726 = sbr.rel (%p724) target = $region132
        $region131: #{freprocess_forward.4} parent=75 // pred_region
          %727 = dma.done [#allocation24], 64
        $region132: #{freprocess_forward.4} parent=75 // pred_fallthru
          _
        %s728 = sand.u32 %s69, 1
        %s729 = scalar_lea.sflag [#allocation3], %s728
        %s730 = sand.u32 %s69, 1
        %s731 = smul.addr %s730, 8
        %s732 = scalar_lea.vmem [#allocation2], %s731
        %p733 = pneg %p82
        %p734 = pneg %p79
        %s735 = sand.u32 %s47, 1
        %s736 = scalar_lea.sflag [#allocation6], %s735
        %s737 = sand.u32 %s97, 1
        %s738 = smul.addr %s737, 8
        %s739 = scalar_lea.vmem [#allocation5], %s738
        %p740 = pneg %p110
        %p741 = pneg %p107
        %s742 = sand.u32 %s47, 1
        %s743 = scalar_lea.sflag [#allocation6], %s742
        %s744 = sand.u32 %s125, 1
        %s745 = smul.addr %s744, 8
        %s746 = scalar_lea.vmem [#allocation7], %s745
        %p747 = pneg %p138
        %p748 = pneg %p135
        %s749 = sand.u32 %s47, 1
        %s750 = scalar_lea.sflag [#allocation9], %s749
        %s751 = sand.u32 %s153, 1
        %s752 = smul.addr %s751, 8
        %s753 = scalar_lea.vmem [#allocation8], %s752
        %p754 = pneg %p166
        %p755 = pneg %p163
        %p756 = pneg %p187
        %p757 = pneg %p184
        %p758 = pneg %p208
        %p759 = pneg %p205
        %p760 = pneg %p229
        %p761 = pneg %p226
        %p762 = pneg %p250
        %p763 = pneg %p247
        %p764 = pneg %p271
        %p765 = pneg %p268
        %p766 = pneg %p292
        %p767 = pneg %p289
        %p768 = pneg %p313
        %p769 = pneg %p310
        %p770 = pneg %p334
        %p771 = pneg %p331
        %p772 = pneg %p355
        %p773 = pneg %p352
        %p774 = pneg %p376
        %p775 = pneg %p373
        %p776 = pneg %p404
        %p777 = pneg %p401
        %s778 = sand.u32 %s391, 1
        %s779 = scalar_lea.sflag [#allocation4], %s778
        %s780 = sand.u32 %s391, 1
        %s781 = smul.addr %s780, 8
        %s782 = scalar_lea.vmem [#allocation25], %s781
        %p783 = pneg %p432
        %p784 = pneg %p429
        %s785 = sand.u32 %s419, 1
        %s786 = scalar_lea.sflag [#allocation27], %s785
        %s787 = sand.u32 %s419, 1
        %s788 = smul.addr %s787, 8
        %s789 = scalar_lea.vmem [#allocation26], %s788
        %s790 = smul.u32 2, %s52
        %s791 = smul.u32 2, %s52
        %s792 = smul.u32 2, %s52
        %s793 = smul.u32 2, %s52
        %s794 = smul.u32 2, %s52
        %s795 = smul.u32 2, %s52
        %v796 = vld [vmem:[%s656] sm:$0xff]
        %v797 = vld [vmem:[%s665] sm:$0xff]
        %v798 = vld [vmem:[%s674] sm:$0xff]
        %v799 = vld [vmem:[%s683] sm:$0xff]
        %v800 = vmul.f32 %v796, %v796
        %v801 = vmul.f32 %v797, %v797
        %v802 = vadd.f32 %v800, %v801
        %v803 = vrsqrt.pop %v802
        %v804 = vmul.f32 %v802, %v803
        %vm805 = vcmp.eq.f32.partialorder %v802, inf
        %v806 = vsel %vm805, %v802, %v804
        %vm807 = vcmp.eq.f32.partialorder %v802, 0.0
        %v808 = vand.u32 %v802, 2147483648
        %v809 = vsel %vm807, %v808, %v806
        %v810 = vmul.f32 %v798, %v798
        %v811 = vmul.f32 %v799, %v799
        %v812 = vadd.f32 %v810, %v811
        %v813 = vrsqrt.pop %v812
        %v814 = vmul.f32 %v812, %v813
        %vm815 = vcmp.eq.f32.partialorder %v812, inf
        %v816 = vsel %vm815, %v812, %v814
        %vm817 = vcmp.eq.f32.partialorder %v812, 0.0
        %v818 = vand.u32 %v812, 2147483648
        %v819 = vsel %vm817, %v818, %v816
        %v820 = vand.u32 2147483647, %v796
        %v821 = vand.u32 2147483647, %v797
        %v822 = vmax.f32 %v820, %v821
        %v823 = vmin.f32 %v820, %v821
        %vm824 = vcmp.eq.f32.partialorder %v822, 0.0
        %v825 = vsel %vm824, 1.0, %v822
        %v826 = vrcp.pop %v825
        %v827 = vmul.f32 %v823, %v826
        %v828 = vmul.f32 %v827, %v827
        %v829 = vmul.f32 %v828, 0.0208351
        %v830 = vadd.f32 %v829, -0.085133
        %v831 = vmul.f32 %v830, %v828
        %v832 = vadd.f32 %v831, 0.180141
        %v833 = vmul.f32 %v832, %v828
        %v834 = vadd.f32 %v833, -0.3302995
        %v835 = vmul.f32 %v834, %v828
        %v836 = vadd.f32 %v835, 0.999866
        %v837 = vmul.f32 %v827, %v836
        %vm838 = vcmp.gt.f32.partialorder %v821, %v820
        %v839 = vsub.f32 1.5707964, %v837
        %v840 = vsel %vm838, %v839, %v837
        %vm841 = vcmp.lt.f32.partialorder %v796, 0.0
        %v842 = vsub.f32 3.1415927, %v840
        %v843 = vsel %vm841, %v842, %v840
        %vm844 = vcmp.lt.f32.partialorder %v797, 0.0
        %v845 = vsub.f32 0.0, %v843
        %v846 = vsel %vm844, %v845, %v843
        %vm847 = vcmp.eq.f32.partialorder %v820, 0.0
        %vm848 = vcmp.eq.f32.partialorder %v821, 0.0
        %vm849 = vmand %vm847, %vm848
        %v850 = vsel %vm849, 0.0, %v846
        %v851 = vand.u32 2147483647, %v798
        %v852 = vand.u32 2147483647, %v799
        %v853 = vmax.f32 %v851, %v852
        %v854 = vmin.f32 %v851, %v852
        %vm855 = vcmp.eq.f32.partialorder %v853, 0.0
        %v856 = vsel %vm855, 1.0, %v853
        %v857 = vrcp.pop %v856
        %v858 = vmul.f32 %v854, %v857
        %v859 = vmul.f32 %v858, %v858
        %v860 = vmul.f32 %v859, 0.0208351
        %v861 = vadd.f32 %v860, -0.085133
        %v862 = vmul.f32 %v861, %v859
        %v863 = vadd.f32 %v862, 0.180141
        %v864 = vmul.f32 %v863, %v859
        %v865 = vadd.f32 %v864, -0.3302995
        %v866 = vmul.f32 %v865, %v859
        %v867 = vadd.f32 %v866, 0.999866
        %v868 = vmul.f32 %v858, %v867
        %vm869 = vcmp.gt.f32.partialorder %v852, %v851
        %v870 = vsub.f32 1.5707964, %v868
        %v871 = vsel %vm869, %v870, %v868
        %vm872 = vcmp.lt.f32.partialorder %v798, 0.0
        %v873 = vsub.f32 3.1415927, %v871
        %v874 = vsel %vm872, %v873, %v871
        %vm875 = vcmp.lt.f32.partialorder %v799, 0.0
        %v876 = vsub.f32 0.0, %v874
        %v877 = vsel %vm875, %v876, %v874
        %vm878 = vcmp.eq.f32.partialorder %v851, 0.0
        %vm879 = vcmp.eq.f32.partialorder %v852, 0.0
        %vm880 = vmand %vm878, %vm879
        %v881 = vsel %vm880, 0.0, %v877
        %v882 = vld [vmem:[#allocation10] sm:$0xf]
        %v883 = vld [vmem:[#allocation11] sm:$0xf]
        %v884 = vld [vmem:[#allocation13] sm:$0xf]
        %v885 = vld [vmem:[#allocation14] sm:$0xf]
        %v886 = vld [vmem:[#allocation16] sm:$0xf]
        %888 = vset.pattern.permute.xlu0 0
        %889 = vperm.xlu0 %888, %v882
        %v890 = vpop.permute.xlu0 %889
        %v893 = vlaneseq
        %v894 = vshrl.u32 %v893, 7
        %v895 = vsub.s32 0, %v894
        %v896 = vrot.slane %v809, %v895
        %v897 = vlaneseq
        %v898 = vshrl.u32 %v897, 7
        %v899 = vsub.s32 4, %v898
        %v900 = vrot.slane %v809, %v899
        %v903 = vlaneseq
        %v904 = vshrl.u32 %v903, 7
        %v905 = vsub.s32 0, %v904
        %v906 = vrot.slane %v896, %v905
        %v907 = vlaneseq
        %v908 = vshrl.u32 %v907, 7
        %v909 = vsub.s32 0, %v908
        %v910 = vrot.slane %v900, %v909
        %v911 = vmul.f32 %v890, %v906
        %v912 = vmul.f32 %v890, %v910
        %913 = vset.pattern.permute.xlu0 1
        %914 = vperm.xlu0 %913, %v882
        %v915 = vpop.permute.xlu0 %914
        %v917 = vlaneseq
        %v918 = vshrl.u32 %v917, 7
        %v919 = vsub.s32 1, %v918
        %v920 = vrot.slane %v809, %v919
        %v921 = vlaneseq
        %v922 = vshrl.u32 %v921, 7
        %v923 = vsub.s32 5, %v922
        %v924 = vrot.slane %v809, %v923
        %v927 = vlaneseq
        %v928 = vshrl.u32 %v927, 7
        %v929 = vsub.s32 1, %v928
        %v930 = vrot.slane %v920, %v929
        %v931 = vlaneseq
        %v932 = vshrl.u32 %v931, 7
        %v933 = vsub.s32 1, %v932
        %v934 = vrot.slane %v924, %v933
        %v935 = vmul.f32 %v915, %v930
        %v936 = vmul.f32 %v915, %v934
        %v937 = vadd.f32 %v911, %v935
        %v938 = vadd.f32 %v912, %v936
        %939 = vset.pattern.permute.xlu0 2
        %940 = vperm.xlu0 %939, %v882
        %v941 = vpop.permute.xlu0 %940
        %v943 = vlaneseq
        %v944 = vshrl.u32 %v943, 7
        %v945 = vsub.s32 2, %v944
        %v946 = vrot.slane %v809, %v945
        %v947 = vlaneseq
        %v948 = vshrl.u32 %v947, 7
        %v949 = vsub.s32 6, %v948
        %v950 = vrot.slane %v809, %v949
        %v953 = vlaneseq
        %v954 = vshrl.u32 %v953, 7
        %v955 = vsub.s32 2, %v954
        %v956 = vrot.slane %v946, %v955
        %v957 = vlaneseq
        %v958 = vshrl.u32 %v957, 7
        %v959 = vsub.s32 2, %v958
        %v960 = vrot.slane %v950, %v959
        %v961 = vmul.f32 %v941, %v956
        %v962 = vmul.f32 %v941, %v960
        %v963 = vadd.f32 %v937, %v961
        %v964 = vadd.f32 %v938, %v962
        %965 = vset.pattern.permute.xlu0 3
        %966 = vperm.xlu0 %965, %v882
        %v967 = vpop.permute.xlu0 %966
        %v969 = vlaneseq
        %v970 = vshrl.u32 %v969, 7
        %v971 = vsub.s32 3, %v970
        %v972 = vrot.slane %v809, %v971
        %v973 = vlaneseq
        %v974 = vshrl.u32 %v973, 7
        %v975 = vsub.s32 7, %v974
        %v976 = vrot.slane %v809, %v975
        %v979 = vlaneseq
        %v980 = vshrl.u32 %v979, 7
        %v981 = vsub.s32 3, %v980
        %v982 = vrot.slane %v972, %v981
        %v983 = vlaneseq
        %v984 = vshrl.u32 %v983, 7
        %v985 = vsub.s32 3, %v984
        %v986 = vrot.slane %v976, %v985
        %v987 = vmul.f32 %v967, %v982
        %v988 = vmul.f32 %v967, %v986
        %v989 = vadd.f32 %v963, %v987
        %v990 = vadd.f32 %v964, %v988
        %992 = vset.pattern.permute.xlu0 0
        %993 = vperm.xlu0 %992, %v883
        %v994 = vpop.permute.xlu0 %993
        %v997 = vlaneseq
        %v998 = vshrl.u32 %v997, 7
        %v999 = vsub.s32 0, %v998
        %v1000 = vrot.slane %v819, %v999
        %v1001 = vlaneseq
        %v1002 = vshrl.u32 %v1001, 7
        %v1003 = vsub.s32 4, %v1002
        %v1004 = vrot.slane %v819, %v1003
        %v1007 = vlaneseq
        %v1008 = vshrl.u32 %v1007, 7
        %v1009 = vsub.s32 0, %v1008
        %v1010 = vrot.slane %v1000, %v1009
        %v1011 = vlaneseq
        %v1012 = vshrl.u32 %v1011, 7
        %v1013 = vsub.s32 0, %v1012
        %v1014 = vrot.slane %v1004, %v1013
        %v1015 = vmul.f32 %v994, %v1010
        %v1016 = vmul.f32 %v994, %v1014
        %1017 = vset.pattern.permute.xlu0 1
        %1018 = vperm.xlu0 %1017, %v883
        %v1019 = vpop.permute.xlu0 %1018
        %v1021 = vlaneseq
        %v1022 = vshrl.u32 %v1021, 7
        %v1023 = vsub.s32 1, %v1022
        %v1024 = vrot.slane %v819, %v1023
        %v1025 = vlaneseq
        %v1026 = vshrl.u32 %v1025, 7
        %v1027 = vsub.s32 5, %v1026
        %v1028 = vrot.slane %v819, %v1027
        %v1031 = vlaneseq
        %v1032 = vshrl.u32 %v1031, 7
        %v1033 = vsub.s32 1, %v1032
        %v1034 = vrot.slane %v1024, %v1033
        %v1035 = vlaneseq
        %v1036 = vshrl.u32 %v1035, 7
        %v1037 = vsub.s32 1, %v1036
        %v1038 = vrot.slane %v1028, %v1037
        %v1039 = vmul.f32 %v1019, %v1034
        %v1040 = vmul.f32 %v1019, %v1038
        %v1041 = vadd.f32 %v1015, %v1039
        %v1042 = vadd.f32 %v1016, %v1040
        %1043 = vset.pattern.permute.xlu0 2
        %1044 = vperm.xlu0 %1043, %v883
        %v1045 = vpop.permute.xlu0 %1044
        %v1047 = vlaneseq
        %v1048 = vshrl.u32 %v1047, 7
        %v1049 = vsub.s32 2, %v1048
        %v1050 = vrot.slane %v819, %v1049
        %v1051 = vlaneseq
        %v1052 = vshrl.u32 %v1051, 7
        %v1053 = vsub.s32 6, %v1052
        %v1054 = vrot.slane %v819, %v1053
        %v1057 = vlaneseq
        %v1058 = vshrl.u32 %v1057, 7
        %v1059 = vsub.s32 2, %v1058
        %v1060 = vrot.slane %v1050, %v1059
        %v1061 = vlaneseq
        %v1062 = vshrl.u32 %v1061, 7
        %v1063 = vsub.s32 2, %v1062
        %v1064 = vrot.slane %v1054, %v1063
        %v1065 = vmul.f32 %v1045, %v1060
        %v1066 = vmul.f32 %v1045, %v1064
        %v1067 = vadd.f32 %v1041, %v1065
        %v1068 = vadd.f32 %v1042, %v1066
        %1069 = vset.pattern.permute.xlu0 3
        %1070 = vperm.xlu0 %1069, %v883
        %v1071 = vpop.permute.xlu0 %1070
        %v1073 = vlaneseq
        %v1074 = vshrl.u32 %v1073, 7
        %v1075 = vsub.s32 3, %v1074
        %v1076 = vrot.slane %v819, %v1075
        %v1077 = vlaneseq
        %v1078 = vshrl.u32 %v1077, 7
        %v1079 = vsub.s32 7, %v1078
        %v1080 = vrot.slane %v819, %v1079
        %v1083 = vlaneseq
        %v1084 = vshrl.u32 %v1083, 7
        %v1085 = vsub.s32 3, %v1084
        %v1086 = vrot.slane %v1076, %v1085
        %v1087 = vlaneseq
        %v1088 = vshrl.u32 %v1087, 7
        %v1089 = vsub.s32 3, %v1088
        %v1090 = vrot.slane %v1080, %v1089
        %v1091 = vmul.f32 %v1071, %v1086
        %v1092 = vmul.f32 %v1071, %v1090
        %v1093 = vadd.f32 %v1067, %v1091
        %v1094 = vadd.f32 %v1068, %v1092
        %v1095 = vadd.f32 %v989, %v1093
        %v1096 = vadd.f32 %v990, %v1094
        %1098 = vset.pattern.permute.xlu0 0
        %1099 = vperm.xlu0 %1098, %v884
        %v1100 = vpop.permute.xlu0 %1099
        %v1102 = vadd.f32 %v1095, %v1100
        %v1103 = vadd.f32 %v1096, %v1100
        %v1104 = vmul.f32 %v1102, 0.1
        %v1105 = vmul.f32 %v1103, 0.1
        %v1106 = vmax.f32 %v1102, %v1104
        %v1107 = vmax.f32 %v1103, %v1105
        %1109 = vset.pattern.permute.xlu0 0
        %1110 = vperm.xlu0 %1109, %v885
        %v1111 = vpop.permute.xlu0 %1110
        %v1113 = vlaneseq
        %v1114 = vshrl.u32 %v1113, 7
        %v1115 = vsub.s32 0, %v1114
        %v1116 = vrot.slane %v1106, %v1115
        %v1117 = vlaneseq
        %v1118 = vshrl.u32 %v1117, 7
        %v1119 = vsub.s32 0, %v1118
        %v1120 = vrot.slane %v1107, %v1119
        %v1121 = vmul.f32 %v1111, %v1116
        %v1122 = vmul.f32 %v1111, %v1120
        %1123 = vset.pattern.permute.xlu0 1
        %1124 = vperm.xlu0 %1123, %v885
        %v1125 = vpop.permute.xlu0 %1124
        %v1127 = vlaneseq
        %v1128 = vshrl.u32 %v1127, 7
        %v1129 = vsub.s32 1, %v1128
        %v1130 = vrot.slane %v1106, %v1129
        %v1131 = vlaneseq
        %v1132 = vshrl.u32 %v1131, 7
        %v1133 = vsub.s32 1, %v1132
        %v1134 = vrot.slane %v1107, %v1133
        %v1135 = vmul.f32 %v1125, %v1130
        %v1136 = vmul.f32 %v1125, %v1134
        %v1137 = vadd.f32 %v1121, %v1135
        %v1138 = vadd.f32 %v1122, %v1136
        %1139 = vset.pattern.permute.xlu0 2
        %1140 = vperm.xlu0 %1139, %v885
        %v1141 = vpop.permute.xlu0 %1140
        %v1143 = vlaneseq
        %v1144 = vshrl.u32 %v1143, 7
        %v1145 = vsub.s32 2, %v1144
        %v1146 = vrot.slane %v1106, %v1145
        %v1147 = vlaneseq
        %v1148 = vshrl.u32 %v1147, 7
        %v1149 = vsub.s32 2, %v1148
        %v1150 = vrot.slane %v1107, %v1149
        %v1151 = vmul.f32 %v1141, %v1146
        %v1152 = vmul.f32 %v1141, %v1150
        %v1153 = vadd.f32 %v1137, %v1151
        %v1154 = vadd.f32 %v1138, %v1152
        %1155 = vset.pattern.permute.xlu0 3
        %1156 = vperm.xlu0 %1155, %v885
        %v1157 = vpop.permute.xlu0 %1156
        %v1159 = vlaneseq
        %v1160 = vshrl.u32 %v1159, 7
        %v1161 = vsub.s32 3, %v1160
        %v1162 = vrot.slane %v1106, %v1161
        %v1163 = vlaneseq
        %v1164 = vshrl.u32 %v1163, 7
        %v1165 = vsub.s32 3, %v1164
        %v1166 = vrot.slane %v1107, %v1165
        %v1167 = vmul.f32 %v1157, %v1162
        %v1168 = vmul.f32 %v1157, %v1166
        %v1169 = vadd.f32 %v1153, %v1167
        %v1170 = vadd.f32 %v1154, %v1168
        %1172 = vset.pattern.permute.xlu0 0
        %1173 = vperm.xlu0 %1172, %v886
        %v1174 = vpop.permute.xlu0 %1173
        %v1176 = vadd.f32 %v1169, %v1174
        %v1177 = vadd.f32 %v1170, %v1174
        %v1178 = vld [vmem:[#allocation17] sm:$0xf]
        %v1179 = vld [vmem:[#allocation19] sm:$0xf]
        %v1180 = vld [vmem:[#allocation20] sm:$0xf]
        %v1181 = vld [vmem:[#allocation22] sm:$0xf]
        %v1182 = vld [vmem:[#allocation23] sm:$0xf]
        %1184 = vset.pattern.permute.xlu0 0
        %1185 = vperm.xlu0 %1184, %v1178
        %v1186 = vpop.permute.xlu0 %1185
        %v1189 = vlaneseq
        %v1190 = vshrl.u32 %v1189, 7
        %v1191 = vsub.s32 0, %v1190
        %v1192 = vrot.slane %v850, %v1191
        %v1193 = vlaneseq
        %v1194 = vshrl.u32 %v1193, 7
        %v1195 = vsub.s32 4, %v1194
        %v1196 = vrot.slane %v850, %v1195
        %v1199 = vlaneseq
        %v1200 = vshrl.u32 %v1199, 7
        %v1201 = vsub.s32 0, %v1200
        %v1202 = vrot.slane %v1192, %v1201
        %v1203 = vlaneseq
        %v1204 = vshrl.u32 %v1203, 7
        %v1205 = vsub.s32 0, %v1204
        %v1206 = vrot.slane %v1196, %v1205
        %v1207 = vmul.f32 %v1186, %v1202
        %v1208 = vmul.f32 %v1186, %v1206
        %1209 = vset.pattern.permute.xlu0 1
        %1210 = vperm.xlu0 %1209, %v1178
        %v1211 = vpop.permute.xlu0 %1210
        %v1213 = vlaneseq
        %v1214 = vshrl.u32 %v1213, 7
        %v1215 = vsub.s32 1, %v1214
        %v1216 = vrot.slane %v850, %v1215
        %v1217 = vlaneseq
        %v1218 = vshrl.u32 %v1217, 7
        %v1219 = vsub.s32 5, %v1218
        %v1220 = vrot.slane %v850, %v1219
        %v1223 = vlaneseq
        %v1224 = vshrl.u32 %v1223, 7
        %v1225 = vsub.s32 1, %v1224
        %v1226 = vrot.slane %v1216, %v1225
        %v1227 = vlaneseq
        %v1228 = vshrl.u32 %v1227, 7
        %v1229 = vsub.s32 1, %v1228
        %v1230 = vrot.slane %v1220, %v1229
        %v1231 = vmul.f32 %v1211, %v1226
        %v1232 = vmul.f32 %v1211, %v1230
        %v1233 = vadd.f32 %v1207, %v1231
        %v1234 = vadd.f32 %v1208, %v1232
        %1235 = vset.pattern.permute.xlu0 2
        %1236 = vperm.xlu0 %1235, %v1178
        %v1237 = vpop.permute.xlu0 %1236
        %v1239 = vlaneseq
        %v1240 = vshrl.u32 %v1239, 7
        %v1241 = vsub.s32 2, %v1240
        %v1242 = vrot.slane %v850, %v1241
        %v1243 = vlaneseq
        %v1244 = vshrl.u32 %v1243, 7
        %v1245 = vsub.s32 6, %v1244
        %v1246 = vrot.slane %v850, %v1245
        %v1249 = vlaneseq
        %v1250 = vshrl.u32 %v1249, 7
        %v1251 = vsub.s32 2, %v1250
        %v1252 = vrot.slane %v1242, %v1251
        %v1253 = vlaneseq
        %v1254 = vshrl.u32 %v1253, 7
        %v1255 = vsub.s32 2, %v1254
        %v1256 = vrot.slane %v1246, %v1255
        %v1257 = vmul.f32 %v1237, %v1252
        %v1258 = vmul.f32 %v1237, %v1256
        %v1259 = vadd.f32 %v1233, %v1257
        %v1260 = vadd.f32 %v1234, %v1258
        %1261 = vset.pattern.permute.xlu0 3
        %1262 = vperm.xlu0 %1261, %v1178
        %v1263 = vpop.permute.xlu0 %1262
        %v1265 = vlaneseq
        %v1266 = vshrl.u32 %v1265, 7
        %v1267 = vsub.s32 3, %v1266
        %v1268 = vrot.slane %v850, %v1267
        %v1269 = vlaneseq
        %v1270 = vshrl.u32 %v1269, 7
        %v1271 = vsub.s32 7, %v1270
        %v1272 = vrot.slane %v850, %v1271
        %v1275 = vlaneseq
        %v1276 = vshrl.u32 %v1275, 7
        %v1277 = vsub.s32 3, %v1276
        %v1278 = vrot.slane %v1268, %v1277
        %v1279 = vlaneseq
        %v1280 = vshrl.u32 %v1279, 7
        %v1281 = vsub.s32 3, %v1280
        %v1282 = vrot.slane %v1272, %v1281
        %v1283 = vmul.f32 %v1263, %v1278
        %v1284 = vmul.f32 %v1263, %v1282
        %v1285 = vadd.f32 %v1259, %v1283
        %v1286 = vadd.f32 %v1260, %v1284
        %1288 = vset.pattern.permute.xlu0 0
        %1289 = vperm.xlu0 %1288, %v1179
        %v1290 = vpop.permute.xlu0 %1289
        %v1293 = vlaneseq
        %v1294 = vshrl.u32 %v1293, 7
        %v1295 = vsub.s32 0, %v1294
        %v1296 = vrot.slane %v881, %v1295
        %v1297 = vlaneseq
        %v1298 = vshrl.u32 %v1297, 7
        %v1299 = vsub.s32 4, %v1298
        %v1300 = vrot.slane %v881, %v1299
        %v1303 = vlaneseq
        %v1304 = vshrl.u32 %v1303, 7
        %v1305 = vsub.s32 0, %v1304
        %v1306 = vrot.slane %v1296, %v1305
        %v1307 = vlaneseq
        %v1308 = vshrl.u32 %v1307, 7
        %v1309 = vsub.s32 0, %v1308
        %v1310 = vrot.slane %v1300, %v1309
        %v1311 = vmul.f32 %v1290, %v1306
        %v1312 = vmul.f32 %v1290, %v1310
        %1313 = vset.pattern.permute.xlu0 1
        %1314 = vperm.xlu0 %1313, %v1179
        %v1315 = vpop.permute.xlu0 %1314
        %v1317 = vlaneseq
        %v1318 = vshrl.u32 %v1317, 7
        %v1319 = vsub.s32 1, %v1318
        %v1320 = vrot.slane %v881, %v1319
        %v1321 = vlaneseq
        %v1322 = vshrl.u32 %v1321, 7
        %v1323 = vsub.s32 5, %v1322
        %v1324 = vrot.slane %v881, %v1323
        %v1327 = vlaneseq
        %v1328 = vshrl.u32 %v1327, 7
        %v1329 = vsub.s32 1, %v1328
        %v1330 = vrot.slane %v1320, %v1329
        %v1331 = vlaneseq
        %v1332 = vshrl.u32 %v1331, 7
        %v1333 = vsub.s32 1, %v1332
        %v1334 = vrot.slane %v1324, %v1333
        %v1335 = vmul.f32 %v1315, %v1330
        %v1336 = vmul.f32 %v1315, %v1334
        %v1337 = vadd.f32 %v1311, %v1335
        %v1338 = vadd.f32 %v1312, %v1336
        %1339 = vset.pattern.permute.xlu0 2
        %1340 = vperm.xlu0 %1339, %v1179
        %v1341 = vpop.permute.xlu0 %1340
        %v1343 = vlaneseq
        %v1344 = vshrl.u32 %v1343, 7
        %v1345 = vsub.s32 2, %v1344
        %v1346 = vrot.slane %v881, %v1345
        %v1347 = vlaneseq
        %v1348 = vshrl.u32 %v1347, 7
        %v1349 = vsub.s32 6, %v1348
        %v1350 = vrot.slane %v881, %v1349
        %v1353 = vlaneseq
        %v1354 = vshrl.u32 %v1353, 7
        %v1355 = vsub.s32 2, %v1354
        %v1356 = vrot.slane %v1346, %v1355
        %v1357 = vlaneseq
        %v1358 = vshrl.u32 %v1357, 7
        %v1359 = vsub.s32 2, %v1358
        %v1360 = vrot.slane %v1350, %v1359
        %v1361 = vmul.f32 %v1341, %v1356
        %v1362 = vmul.f32 %v1341, %v1360
        %v1363 = vadd.f32 %v1337, %v1361
        %v1364 = vadd.f32 %v1338, %v1362
        %1365 = vset.pattern.permute.xlu0 3
        %1366 = vperm.xlu0 %1365, %v1179
        %v1367 = vpop.permute.xlu0 %1366
        %v1369 = vlaneseq
        %v1370 = vshrl.u32 %v1369, 7
        %v1371 = vsub.s32 3, %v1370
        %v1372 = vrot.slane %v881, %v1371
        %v1373 = vlaneseq
        %v1374 = vshrl.u32 %v1373, 7
        %v1375 = vsub.s32 7, %v1374
        %v1376 = vrot.slane %v881, %v1375
        %v1379 = vlaneseq
        %v1380 = vshrl.u32 %v1379, 7
        %v1381 = vsub.s32 3, %v1380
        %v1382 = vrot.slane %v1372, %v1381
        %v1383 = vlaneseq
        %v1384 = vshrl.u32 %v1383, 7
        %v1385 = vsub.s32 3, %v1384
        %v1386 = vrot.slane %v1376, %v1385
        %v1387 = vmul.f32 %v1367, %v1382
        %v1388 = vmul.f32 %v1367, %v1386
        %v1389 = vadd.f32 %v1363, %v1387
        %v1390 = vadd.f32 %v1364, %v1388
        %v1391 = vadd.f32 %v1285, %v1389
        %v1392 = vadd.f32 %v1286, %v1390
        %1394 = vset.pattern.permute.xlu0 0
        %1395 = vperm.xlu0 %1394, %v1180
        %v1396 = vpop.permute.xlu0 %1395
        %v1398 = vadd.f32 %v1391, %v1396
        %v1399 = vadd.f32 %v1392, %v1396
        %v1400 = vmul.f32 %v1398, 0.1
        %v1401 = vmul.f32 %v1399, 0.1
        %v1402 = vmax.f32 %v1398, %v1400
        %v1403 = vmax.f32 %v1399, %v1401
        %1405 = vset.pattern.permute.xlu0 0
        %1406 = vperm.xlu0 %1405, %v1181
        %v1407 = vpop.permute.xlu0 %1406
        %v1409 = vlaneseq
        %v1410 = vshrl.u32 %v1409, 7
        %v1411 = vsub.s32 0, %v1410
        %v1412 = vrot.slane %v1402, %v1411
        %v1413 = vlaneseq
        %v1414 = vshrl.u32 %v1413, 7
        %v1415 = vsub.s32 0, %v1414
        %v1416 = vrot.slane %v1403, %v1415
        %v1417 = vmul.f32 %v1407, %v1412
        %v1418 = vmul.f32 %v1407, %v1416
        %1419 = vset.pattern.permute.xlu0 1
        %1420 = vperm.xlu0 %1419, %v1181
        %v1421 = vpop.permute.xlu0 %1420
        %v1423 = vlaneseq
        %v1424 = vshrl.u32 %v1423, 7
        %v1425 = vsub.s32 1, %v1424
        %v1426 = vrot.slane %v1402, %v1425
        %v1427 = vlaneseq
        %v1428 = vshrl.u32 %v1427, 7
        %v1429 = vsub.s32 1, %v1428
        %v1430 = vrot.slane %v1403, %v1429
        %v1431 = vmul.f32 %v1421, %v1426
        %v1432 = vmul.f32 %v1421, %v1430
        %v1433 = vadd.f32 %v1417, %v1431
        %v1434 = vadd.f32 %v1418, %v1432
        %1435 = vset.pattern.permute.xlu0 2
        %1436 = vperm.xlu0 %1435, %v1181
        %v1437 = vpop.permute.xlu0 %1436
        %v1439 = vlaneseq
        %v1440 = vshrl.u32 %v1439, 7
        %v1441 = vsub.s32 2, %v1440
        %v1442 = vrot.slane %v1402, %v1441
        %v1443 = vlaneseq
        %v1444 = vshrl.u32 %v1443, 7
        %v1445 = vsub.s32 2, %v1444
        %v1446 = vrot.slane %v1403, %v1445
        %v1447 = vmul.f32 %v1437, %v1442
        %v1448 = vmul.f32 %v1437, %v1446
        %v1449 = vadd.f32 %v1433, %v1447
        %v1450 = vadd.f32 %v1434, %v1448
        %1451 = vset.pattern.permute.xlu0 3
        %1452 = vperm.xlu0 %1451, %v1181
        %v1453 = vpop.permute.xlu0 %1452
        %v1455 = vlaneseq
        %v1456 = vshrl.u32 %v1455, 7
        %v1457 = vsub.s32 3, %v1456
        %v1458 = vrot.slane %v1402, %v1457
        %v1459 = vlaneseq
        %v1460 = vshrl.u32 %v1459, 7
        %v1461 = vsub.s32 3, %v1460
        %v1462 = vrot.slane %v1403, %v1461
        %v1463 = vmul.f32 %v1453, %v1458
        %v1464 = vmul.f32 %v1453, %v1462
        %v1465 = vadd.f32 %v1449, %v1463
        %v1466 = vadd.f32 %v1450, %v1464
        %1468 = vset.pattern.permute.xlu0 0
        %1469 = vperm.xlu0 %1468, %v1182
        %v1470 = vpop.permute.xlu0 %1469
        %v1472 = vadd.f32 %v1465, %v1470
        %v1473 = vadd.f32 %v1466, %v1470
        %v1474 = vand.u32 2147483647, %v1472
        %vm1475 = vcmp.le.f32.partialorder %v1474, 0.7853982
        %vm1476 = vcmp.lt.s32.totalorder %v1472, 0
        %v1477 = vand.u32 %v1472, 2139095040
        %v1478 = vshrl.u32 %v1477, 23
        %v1479 = vsub.s32 %v1478, 127
        %v1480 = vand.u32 2147483647, %v1472
        %v1481 = vand.u32 %v1480, 8388607
        %v1482 = vor.u32 %v1481, 8388608
        %v1483 = vsub.s32 0, %v1482
        %v1484 = vadd.s32 %v1479, 1
        %vm1485 = vcmp.gt.s32.totalorder %v1484, 0
        %v1486 = vsel %vm1485, %v1484, 0
        %v1487 = vshrl.u32 %v1486, 5
        %v1488 = vand.u32 %v1486, 31
        %v1489 = vsub.s32 32, %v1488
        %v1490 = vshrl.u32 683565275, %v1489
        %v1491 = vshll.u32 683565275, %v1488
        %v1492 = vshrl.u32 2475754826, %v1489
        %v1493 = vor.u32 %v1491, %v1492
        %v1494 = vshll.u32 2475754826, %v1488
        %v1495 = vshrl.u32 2131351028, %v1489
        %v1496 = vor.u32 %v1494, %v1495
        %v1497 = vshll.u32 2131351028, %v1488
        %v1498 = vshrl.u32 2102212464, %v1489
        %v1499 = vor.u32 %v1497, %v1498
        %v1500 = vshll.u32 2102212464, %v1488
        %v1501 = vshrl.u32 920167782, %v1489
        %v1502 = vor.u32 %v1500, %v1501
        %v1503 = vshll.u32 920167782, %v1488
        %v1504 = vshrl.u32 1326507024, %v1489
        %v1505 = vor.u32 %v1503, %v1504
        %vm1506 = vcmp.lt.s32.totalorder %v1487, 1
        %vm1507 = vcmp.lt.s32.totalorder %v1487, 2
        %vm1508 = vcmp.lt.s32.totalorder %v1487, 3
        %vm1509 = vcmp.lt.s32.totalorder %v1487, 4
        %v1510 = vsel %vm1506, %v1490, %v1493
        %v1511 = vsel %vm1509, %v1499, 2102212464
        %v1512 = vsel %vm1508, %v1496, %v1511
        %v1513 = vsel %vm1507, %v1510, %v1512
        %v1514 = vsel %vm1506, %v1493, %v1496
        %v1515 = vsel %vm1509, %v1502, 920167782
        %v1516 = vsel %vm1508, %v1499, %v1515
        %v1517 = vsel %vm1507, %v1514, %v1516
        %v1518 = vsel %vm1506, %v1496, %v1499
        %v1519 = vsel %vm1509, %v1505, 1326507024
        %v1520 = vsel %vm1508, %v1502, %v1519
        %v1521 = vsel %vm1507, %v1518, %v1520
        %v1522 = vshll.u32 %v1482, 8
        %v1523 = vmul.u32.u64.compose %v1522, %v1521
        %v1524 = vextract.low.u32 %v1523
        %v1525 = vextract.high.u32 %v1523
        %v1526 = vmul.u32.u64.compose %v1522, %v1517
        %v1527 = vextract.low.u32 %v1526
        %v1528 = vextract.high.u32 %v1526
        %v1529 = vmul.u32 %v1522, %v1513
        %v1530 = vadd.s32 %v1525, %v1527
        %vm1531 = vc.u32 %v1525, %v1527
        %v1532 = vadd.s32 %v1528, 1
        %v1533 = vsel %vm1531, %v1532, %v1528
        %v1534 = vadd.s32 %v1529, %v1533
        %v1535 = vadd.s32 %v1534, 536870912
        %v1536 = vshrl.u32 %v1535, 30
        %v1537 = vshll.u32 %v1536, 30
        %v1538 = vsub.s32 %v1534, %v1537
        %vm1539 = vcmp.lt.s32.totalorder %v1538, 0
        %v1540 = vsub.s32 0, %v1538
        %v1541 = vsel %vm1539, %v1540, %v1538
        %v1542 = vclz %v1541
        %v1543 = vsub.s32 %v1542, 2
        %vm1544 = vcmp.gt.s32.totalorder 0, %v1543
        %v1545 = vsel %vm1544, 0, %v1543
        %v1546 = vsub.s32 32, %v1545
        %v1547 = vshll.u32 %v1538, %v1545
        %v1548 = vshrl.u32 %v1530, %v1546
        %v1549 = vor.u32 %v1547, %v1548
        %v1550 = vsub.s32 4294967266, %v1545
        %v1551 = vadd.s32 %v1550, 127
        %v1552 = vshll.u32 %v1551, 23
        %v1553 = vor.u32 4788187, %v1552
        %v1554 = vand.u32 2147483647, %v1553
        %v1556 = vcvt.s32.f32 %v1549
        %v1557 = vmul.f32 %v1556, %v1554
        %v1558 = vxor.u32 %v1557, 2147483648
        %v1559 = vsel %vm1476, %v1558, %v1557
        %v1560 = vsub.s32 4, %v1536
        %v1561 = vsel %vm1476, %v1560, %v1536
        %v1562 = vsel %vm1475, %v1472, %v1559
        %v1563 = vsel %vm1475, 0, %v1561
        %v1564 = vcosq.f32.pop %v1562
        %v1565 = vsinq.f32.pop %v1562
        %vm1566 = vweird.f32 %v1472
        %v1567 = vand.u32 %v1563, 3
        %vm1568 = vcmp.lt.s32.totalorder %v1567, 2
        %vm1569 = vcmp.eq.s32.totalorder %v1567, 0
        %v1570 = vxor.u32 %v1565, 2147483648
        %v1571 = vsel %vm1569, %v1564, %v1570
        %vm1572 = vcmp.eq.s32.totalorder %v1567, 2
        %v1573 = vxor.u32 %v1564, 2147483648
        %v1574 = vsel %vm1572, %v1573, %v1565
        %v1575 = vsel %vm1568, %v1571, %v1574
        %v1576 = vsel %vm1566, nan, %v1575
        %v1577 = vand.u32 2147483647, %v1473
        %vm1578 = vcmp.le.f32.partialorder %v1577, 0.7853982
        %vm1579 = vcmp.lt.s32.totalorder %v1473, 0
        %v1580 = vand.u32 %v1473, 2139095040
        %v1581 = vshrl.u32 %v1580, 23
        %v1582 = vsub.s32 %v1581, 127
        %v1583 = vand.u32 2147483647, %v1473
        %v1584 = vand.u32 %v1583, 8388607
        %v1585 = vor.u32 %v1584, 8388608
        %v1586 = vsub.s32 0, %v1585
        %v1587 = vadd.s32 %v1582, 1
        %vm1588 = vcmp.gt.s32.totalorder %v1587, 0
        %v1589 = vsel %vm1588, %v1587, 0
        %v1590 = vshrl.u32 %v1589, 5
        %v1591 = vand.u32 %v1589, 31
        %v1592 = vsub.s32 32, %v1591
        %v1593 = vshrl.u32 683565275, %v1592
        %v1594 = vshll.u32 683565275, %v1591
        %v1595 = vshrl.u32 2475754826, %v1592
        %v1596 = vor.u32 %v1594, %v1595
        %v1597 = vshll.u32 2475754826, %v1591
        %v1598 = vshrl.u32 2131351028, %v1592
        %v1599 = vor.u32 %v1597, %v1598
        %v1600 = vshll.u32 2131351028, %v1591
        %v1601 = vshrl.u32 2102212464, %v1592
        %v1602 = vor.u32 %v1600, %v1601
        %v1603 = vshll.u32 2102212464, %v1591
        %v1604 = vshrl.u32 920167782, %v1592
        %v1605 = vor.u32 %v1603, %v1604
        %v1606 = vshll.u32 920167782, %v1591
        %v1607 = vshrl.u32 1326507024, %v1592
        %v1608 = vor.u32 %v1606, %v1607
        %vm1609 = vcmp.lt.s32.totalorder %v1590, 1
        %vm1610 = vcmp.lt.s32.totalorder %v1590, 2
        %vm1611 = vcmp.lt.s32.totalorder %v1590, 3
        %vm1612 = vcmp.lt.s32.totalorder %v1590, 4
        %v1613 = vsel %vm1609, %v1593, %v1596
        %v1614 = vsel %vm1612, %v1602, 2102212464
        %v1615 = vsel %vm1611, %v1599, %v1614
        %v1616 = vsel %vm1610, %v1613, %v1615
        %v1617 = vsel %vm1609, %v1596, %v1599
        %v1618 = vsel %vm1612, %v1605, 920167782
        %v1619 = vsel %vm1611, %v1602, %v1618
        %v1620 = vsel %vm1610, %v1617, %v1619
        %v1621 = vsel %vm1609, %v1599, %v1602
        %v1622 = vsel %vm1612, %v1608, 1326507024
        %v1623 = vsel %vm1611, %v1605, %v1622
        %v1624 = vsel %vm1610, %v1621, %v1623
        %v1625 = vshll.u32 %v1585, 8
        %v1626 = vmul.u32.u64.compose %v1625, %v1624
        %v1627 = vextract.low.u32 %v1626
        %v1628 = vextract.high.u32 %v1626
        %v1629 = vmul.u32.u64.compose %v1625, %v1620
        %v1630 = vextract.low.u32 %v1629
        %v1631 = vextract.high.u32 %v1629
        %v1632 = vmul.u32 %v1625, %v1616
        %v1633 = vadd.s32 %v1628, %v1630
        %vm1634 = vc.u32 %v1628, %v1630
        %v1635 = vadd.s32 %v1631, 1
        %v1636 = vsel %vm1634, %v1635, %v1631
        %v1637 = vadd.s32 %v1632, %v1636
        %v1638 = vadd.s32 %v1637, 536870912
        %v1639 = vshrl.u32 %v1638, 30
        %v1640 = vshll.u32 %v1639, 30
        %v1641 = vsub.s32 %v1637, %v1640
        %vm1642 = vcmp.lt.s32.totalorder %v1641, 0
        %v1643 = vsub.s32 0, %v1641
        %v1644 = vsel %vm1642, %v1643, %v1641
        %v1645 = vclz %v1644
        %v1646 = vsub.s32 %v1645, 2
        %vm1647 = vcmp.gt.s32.totalorder 0, %v1646
        %v1648 = vsel %vm1647, 0, %v1646
        %v1649 = vsub.s32 32, %v1648
        %v1650 = vshll.u32 %v1641, %v1648
        %v1651 = vshrl.u32 %v1633, %v1649
        %v1652 = vor.u32 %v1650, %v1651
        %v1653 = vsub.s32 4294967266, %v1648
        %v1654 = vadd.s32 %v1653, 127
        %v1655 = vshll.u32 %v1654, 23
        %v1656 = vor.u32 4788187, %v1655
        %v1657 = vand.u32 2147483647, %v1656
        %v1659 = vcvt.s32.f32 %v1652
        %v1660 = vmul.f32 %v1659, %v1657
        %v1661 = vxor.u32 %v1660, 2147483648
        %v1662 = vsel %vm1579, %v1661, %v1660
        %v1663 = vsub.s32 4, %v1639
        %v1664 = vsel %vm1579, %v1663, %v1639
        %v1665 = vsel %vm1578, %v1473, %v1662
        %v1666 = vsel %vm1578, 0, %v1664
        %v1667 = vcosq.f32.pop %v1665
        %v1668 = vsinq.f32.pop %v1665
        %vm1669 = vweird.f32 %v1473
        %v1670 = vand.u32 %v1666, 3
        %vm1671 = vcmp.lt.s32.totalorder %v1670, 2
        %vm1672 = vcmp.eq.s32.totalorder %v1670, 0
        %v1673 = vxor.u32 %v1668, 2147483648
        %v1674 = vsel %vm1672, %v1667, %v1673
        %vm1675 = vcmp.eq.s32.totalorder %v1670, 2
        %v1676 = vxor.u32 %v1667, 2147483648
        %v1677 = vsel %vm1675, %v1676, %v1668
        %v1678 = vsel %vm1671, %v1674, %v1677
        %v1679 = vsel %vm1669, nan, %v1678
        %v1680 = vmul.f32 %v1176, %v1576
        %v1681 = vmul.f32 %v1177, %v1679
        %v1682 = vadd.f32 %v1680, 2e-08
        %v1683 = vadd.f32 %v1681, 2e-08
        %v1686 = vcombine.low %v1682, %v1683
        %vm1688 = vcmask 1043456
        %vm1689 = vcmask 130052
        %vm1690 = vmor %vm1689, %vm1688
        %1691 = vst.msk [vmem:[%s782] sm:$0xff] %vm1690, %v1686
        %v1692 = vand.u32 2147483647, %v1472
        %vm1693 = vcmp.le.f32.partialorder %v1692, 0.7853982
        %vm1694 = vcmp.lt.s32.totalorder %v1472, 0
        %v1695 = vand.u32 %v1472, 2139095040
        %v1696 = vshrl.u32 %v1695, 23
        %v1697 = vsub.s32 %v1696, 127
        %v1698 = vand.u32 2147483647, %v1472
        %v1699 = vand.u32 %v1698, 8388607
        %v1700 = vor.u32 %v1699, 8388608
        %v1701 = vsub.s32 0, %v1700
        %v1702 = vadd.s32 %v1697, 1
        %vm1703 = vcmp.gt.s32.totalorder %v1702, 0
        %v1704 = vsel %vm1703, %v1702, 0
        %v1705 = vshrl.u32 %v1704, 5
        %v1706 = vand.u32 %v1704, 31
        %v1707 = vsub.s32 32, %v1706
        %v1708 = vshrl.u32 683565275, %v1707
        %v1709 = vshll.u32 683565275, %v1706
        %v1710 = vshrl.u32 2475754826, %v1707
        %v1711 = vor.u32 %v1709, %v1710
        %v1712 = vshll.u32 2475754826, %v1706
        %v1713 = vshrl.u32 2131351028, %v1707
        %v1714 = vor.u32 %v1712, %v1713
        %v1715 = vshll.u32 2131351028, %v1706
        %v1716 = vshrl.u32 2102212464, %v1707
        %v1717 = vor.u32 %v1715, %v1716
        %v1718 = vshll.u32 2102212464, %v1706
        %v1719 = vshrl.u32 920167782, %v1707
        %v1720 = vor.u32 %v1718, %v1719
        %v1721 = vshll.u32 920167782, %v1706
        %v1722 = vshrl.u32 1326507024, %v1707
        %v1723 = vor.u32 %v1721, %v1722
        %vm1724 = vcmp.lt.s32.totalorder %v1705, 1
        %vm1725 = vcmp.lt.s32.totalorder %v1705, 2
        %vm1726 = vcmp.lt.s32.totalorder %v1705, 3
        %vm1727 = vcmp.lt.s32.totalorder %v1705, 4
        %v1728 = vsel %vm1724, %v1708, %v1711
        %v1729 = vsel %vm1727, %v1717, 2102212464
        %v1730 = vsel %vm1726, %v1714, %v1729
        %v1731 = vsel %vm1725, %v1728, %v1730
        %v1732 = vsel %vm1724, %v1711, %v1714
        %v1733 = vsel %vm1727, %v1720, 920167782
        %v1734 = vsel %vm1726, %v1717, %v1733
        %v1735 = vsel %vm1725, %v1732, %v1734
        %v1736 = vsel %vm1724, %v1714, %v1717
        %v1737 = vsel %vm1727, %v1723, 1326507024
        %v1738 = vsel %vm1726, %v1720, %v1737
        %v1739 = vsel %vm1725, %v1736, %v1738
        %v1740 = vshll.u32 %v1700, 8
        %v1741 = vmul.u32.u64.compose %v1740, %v1739
        %v1742 = vextract.low.u32 %v1741
        %v1743 = vextract.high.u32 %v1741
        %v1744 = vmul.u32.u64.compose %v1740, %v1735
        %v1745 = vextract.low.u32 %v1744
        %v1746 = vextract.high.u32 %v1744
        %v1747 = vmul.u32 %v1740, %v1731
        %v1748 = vadd.s32 %v1743, %v1745
        %vm1749 = vc.u32 %v1743, %v1745
        %v1750 = vadd.s32 %v1746, 1
        %v1751 = vsel %vm1749, %v1750, %v1746
        %v1752 = vadd.s32 %v1747, %v1751
        %v1753 = vadd.s32 %v1752, 536870912
        %v1754 = vshrl.u32 %v1753, 30
        %v1755 = vshll.u32 %v1754, 30
        %v1756 = vsub.s32 %v1752, %v1755
        %vm1757 = vcmp.lt.s32.totalorder %v1756, 0
        %v1758 = vsub.s32 0, %v1756
        %v1759 = vsel %vm1757, %v1758, %v1756
        %v1760 = vclz %v1759
        %v1761 = vsub.s32 %v1760, 2
        %vm1762 = vcmp.gt.s32.totalorder 0, %v1761
        %v1763 = vsel %vm1762, 0, %v1761
        %v1764 = vsub.s32 32, %v1763
        %v1765 = vshll.u32 %v1756, %v1763
        %v1766 = vshrl.u32 %v1748, %v1764
        %v1767 = vor.u32 %v1765, %v1766
        %v1768 = vsub.s32 4294967266, %v1763
        %v1769 = vadd.s32 %v1768, 127
        %v1770 = vshll.u32 %v1769, 23
        %v1771 = vor.u32 4788187, %v1770
        %v1772 = vand.u32 2147483647, %v1771
        %v1774 = vcvt.s32.f32 %v1767
        %v1775 = vmul.f32 %v1774, %v1772
        %v1776 = vxor.u32 %v1775, 2147483648
        %v1777 = vsel %vm1694, %v1776, %v1775
        %v1778 = vsub.s32 4, %v1754
        %v1779 = vsel %vm1694, %v1778, %v1754
        %v1780 = vsel %vm1693, %v1472, %v1777
        %v1781 = vsel %vm1693, 0, %v1779
        %v1782 = vcosq.f32.pop %v1780
        %v1783 = vsinq.f32.pop %v1780
        %vm1784 = vweird.f32 %v1472
        %v1785 = vadd.s32 %v1781, 3
        %v1786 = vand.u32 %v1785, 3
        %vm1787 = vcmp.lt.s32.totalorder %v1786, 2
        %vm1788 = vcmp.eq.s32.totalorder %v1786, 0
        %v1789 = vxor.u32 %v1783, 2147483648
        %v1790 = vsel %vm1788, %v1782, %v1789
        %vm1791 = vcmp.eq.s32.totalorder %v1786, 2
        %v1792 = vxor.u32 %v1782, 2147483648
        %v1793 = vsel %vm1791, %v1792, %v1783
        %v1794 = vsel %vm1787, %v1790, %v1793
        %v1795 = vsel %vm1784, nan, %v1794
        %v1796 = vand.u32 2147483647, %v1473
        %vm1797 = vcmp.le.f32.partialorder %v1796, 0.7853982
        %vm1798 = vcmp.lt.s32.totalorder %v1473, 0
        %v1799 = vand.u32 %v1473, 2139095040
        %v1800 = vshrl.u32 %v1799, 23
        %v1801 = vsub.s32 %v1800, 127
        %v1802 = vand.u32 2147483647, %v1473
        %v1803 = vand.u32 %v1802, 8388607
        %v1804 = vor.u32 %v1803, 8388608
        %v1805 = vsub.s32 0, %v1804
        %v1806 = vadd.s32 %v1801, 1
        %vm1807 = vcmp.gt.s32.totalorder %v1806, 0
        %v1808 = vsel %vm1807, %v1806, 0
        %v1809 = vshrl.u32 %v1808, 5
        %v1810 = vand.u32 %v1808, 31
        %v1811 = vsub.s32 32, %v1810
        %v1812 = vshrl.u32 683565275, %v1811
        %v1813 = vshll.u32 683565275, %v1810
        %v1814 = vshrl.u32 2475754826, %v1811
        %v1815 = vor.u32 %v1813, %v1814
        %v1816 = vshll.u32 2475754826, %v1810
        %v1817 = vshrl.u32 2131351028, %v1811
        %v1818 = vor.u32 %v1816, %v1817
        %v1819 = vshll.u32 2131351028, %v1810
        %v1820 = vshrl.u32 2102212464, %v1811
        %v1821 = vor.u32 %v1819, %v1820
        %v1822 = vshll.u32 2102212464, %v1810
        %v1823 = vshrl.u32 920167782, %v1811
        %v1824 = vor.u32 %v1822, %v1823
        %v1825 = vshll.u32 920167782, %v1810
        %v1826 = vshrl.u32 1326507024, %v1811
        %v1827 = vor.u32 %v1825, %v1826
        %vm1828 = vcmp.lt.s32.totalorder %v1809, 1
        %vm1829 = vcmp.lt.s32.totalorder %v1809, 2
        %vm1830 = vcmp.lt.s32.totalorder %v1809, 3
        %vm1831 = vcmp.lt.s32.totalorder %v1809, 4
        %v1832 = vsel %vm1828, %v1812, %v1815
        %v1833 = vsel %vm1831, %v1821, 2102212464
        %v1834 = vsel %vm1830, %v1818, %v1833
        %v1835 = vsel %vm1829, %v1832, %v1834
        %v1836 = vsel %vm1828, %v1815, %v1818
        %v1837 = vsel %vm1831, %v1824, 920167782
        %v1838 = vsel %vm1830, %v1821, %v1837
        %v1839 = vsel %vm1829, %v1836, %v1838
        %v1840 = vsel %vm1828, %v1818, %v1821
        %v1841 = vsel %vm1831, %v1827, 1326507024
        %v1842 = vsel %vm1830, %v1824, %v1841
        %v1843 = vsel %vm1829, %v1840, %v1842
        %v1844 = vshll.u32 %v1804, 8
        %v1845 = vmul.u32.u64.compose %v1844, %v1843
        %v1846 = vextract.low.u32 %v1845
        %v1847 = vextract.high.u32 %v1845
        %v1848 = vmul.u32.u64.compose %v1844, %v1839
        %v1849 = vextract.low.u32 %v1848
        %v1850 = vextract.high.u32 %v1848
        %v1851 = vmul.u32 %v1844, %v1835
        %v1852 = vadd.s32 %v1847, %v1849
        %vm1853 = vc.u32 %v1847, %v1849
        %v1854 = vadd.s32 %v1850, 1
        %v1855 = vsel %vm1853, %v1854, %v1850
        %v1856 = vadd.s32 %v1851, %v1855
        %v1857 = vadd.s32 %v1856, 536870912
        %v1858 = vshrl.u32 %v1857, 30
        %v1859 = vshll.u32 %v1858, 30
        %v1860 = vsub.s32 %v1856, %v1859
        %vm1861 = vcmp.lt.s32.totalorder %v1860, 0
        %v1862 = vsub.s32 0, %v1860
        %v1863 = vsel %vm1861, %v1862, %v1860
        %v1864 = vclz %v1863
        %v1865 = vsub.s32 %v1864, 2
        %vm1866 = vcmp.gt.s32.totalorder 0, %v1865
        %v1867 = vsel %vm1866, 0, %v1865
        %v1868 = vsub.s32 32, %v1867
        %v1869 = vshll.u32 %v1860, %v1867
        %v1870 = vshrl.u32 %v1852, %v1868
        %v1871 = vor.u32 %v1869, %v1870
        %v1872 = vsub.s32 4294967266, %v1867
        %v1873 = vadd.s32 %v1872, 127
        %v1874 = vshll.u32 %v1873, 23
        %v1875 = vor.u32 4788187, %v1874
        %v1876 = vand.u32 2147483647, %v1875
        %v1878 = vcvt.s32.f32 %v1871
        %v1879 = vmul.f32 %v1878, %v1876
        %v1880 = vxor.u32 %v1879, 2147483648
        %v1881 = vsel %vm1798, %v1880, %v1879
        %v1882 = vsub.s32 4, %v1858
        %v1883 = vsel %vm1798, %v1882, %v1858
        %v1884 = vsel %vm1797, %v1473, %v1881
        %v1885 = vsel %vm1797, 0, %v1883
        %v1886 = vcosq.f32.pop %v1884
        %v1887 = vsinq.f32.pop %v1884
        %vm1888 = vweird.f32 %v1473
        %v1889 = vadd.s32 %v1885, 3
        %v1890 = vand.u32 %v1889, 3
        %vm1891 = vcmp.lt.s32.totalorder %v1890, 2
        %vm1892 = vcmp.eq.s32.totalorder %v1890, 0
        %v1893 = vxor.u32 %v1887, 2147483648
        %v1894 = vsel %vm1892, %v1886, %v1893
        %vm1895 = vcmp.eq.s32.totalorder %v1890, 2
        %v1896 = vxor.u32 %v1886, 2147483648
        %v1897 = vsel %vm1895, %v1896, %v1887
        %v1898 = vsel %vm1891, %v1894, %v1897
        %v1899 = vsel %vm1888, nan, %v1898
        %v1900 = vmul.f32 %v1176, %v1795
        %v1901 = vmul.f32 %v1177, %v1899
        %v1902 = vadd.f32 %v1900, 1e-08
        %v1903 = vadd.f32 %v1901, 1e-08
        %v1906 = vcombine.low %v1902, %v1903
        %1908 = vst.msk [vmem:[%s789] sm:$0xff] %vm1690, %v1906
        %s1909 = sand.u32 %s391, 1
        %s1910 = scalar_lea.sflag [#allocation4], %s1909
        %s1911 = sand.u32 %s391, 1
        %s1912 = smul.addr %s1911, 8
        %s1913 = scalar_lea.vmem [#allocation25], %s1912
        %s1914 = sand.u32 %s419, 1
        %s1915 = scalar_lea.sflag [#allocation27], %s1914
        %s1916 = sand.u32 %s419, 1
        %s1917 = smul.addr %s1916, 8
        %s1918 = scalar_lea.vmem [#allocation26], %s1917
        // Predicated region
        $region133: #{freprocess_forward.4} parent=75 // pred_check
          %p1919 = pneg %p401
        $region134: #{freprocess_forward.4} parent=75 // pred_check_branch
          %1921 = sbr.rel (%p1919) target = $region136
        $region135: #{freprocess_forward.4} parent=75 // pred_region
          %s1922 = smul.u32 2, %s52
          %s1924 = ssub.s32 128, 128
          %1925 = vsyncadd %s1910, %s1924
          %s1926 = smul.addr %s51, 2
          %s1927 = sadd.s32 %s1922, %s1926
          %s1928 = smul.addr %s1927, 64
          %s1929 = scalar_lea.hbm %s14, %s1928
          %s1931 = sshll.u32 %s1913, 4
          %s1932 = int_to_ptr.vmem [resolvable:$true] %s1931
          %1934 = dma.vmem_to_hbm [thread:$0]  %s1932, 128, %s1929, %s1910
        $region136: #{freprocess_forward.4} parent=75 // pred_fallthru
          _
        // Predicated region
        $region137: #{freprocess_forward.4} parent=75 // pred_check
          %p1935 = pneg %p429
        $region138: #{freprocess_forward.4} parent=75 // pred_check_branch
          %1937 = sbr.rel (%p1935) target = $region140
        $region139: #{freprocess_forward.4} parent=75 // pred_region
          %s1938 = smul.u32 2, %s52
          %s1940 = ssub.s32 128, 128
          %1941 = vsyncadd %s1915, %s1940
          %s1942 = smul.addr %s51, 2
          %s1943 = sadd.s32 %s1938, %s1942
          %s1944 = smul.addr %s1943, 64
          %s1945 = scalar_lea.hbm %s15, %s1944
          %s1947 = sshll.u32 %s1918, 4
          %s1948 = int_to_ptr.vmem [resolvable:$true] %s1947
          %1950 = dma.vmem_to_hbm [thread:$0]  %s1948, 128, %s1945, %s1915
        $region140: #{freprocess_forward.4} parent=75 // pred_fallthru
          _
      $region76: #{freprocess_forward.4} parent=5 // pred_fallthru
        _
      %p1951 = scmp.le.s32.totalorder 2, %s42
      // Predicated region
      $region141: #{freprocess_forward.4} parent=5 // pred_check
        %p1952 = pneg %p1951
      $region142: #{freprocess_forward.4} parent=5 // pred_check_branch
        %1954 = sbr.rel (%p1952) target = $region144
      $region143: #{freprocess_forward.4} parent=5 // pred_region
        %s1955 = ssub.s32 %s42, 2
        // Predicated region
        $region145: #{freprocess_forward.4} parent=143 // pred_check
          %p1956 = pneg %p407
        $region146: #{freprocess_forward.4} parent=143 // pred_check_branch
          %1958 = sbr.rel (%p1956) target = $region148
        $region147: #{freprocess_forward.4} parent=143 // pred_region
          %s1959 = sand.u32 %s392, 1
          %s1960 = scalar_lea.sflag [#allocation4], %s1959
          %s1961 = sand.u32 %s392, 1
          %s1962 = smul.addr %s1961, 8
          %s1963 = scalar_lea.vmem [#allocation25], %s1962
          %1964 = dma.done %s1960, 128
        $region148: #{freprocess_forward.4} parent=143 // pred_fallthru
          _
        // Predicated region
        $region149: #{freprocess_forward.4} parent=143 // pred_check
          %p1965 = pneg %p435
        $region150: #{freprocess_forward.4} parent=143 // pred_check_branch
          %1967 = sbr.rel (%p1965) target = $region152
        $region151: #{freprocess_forward.4} parent=143 // pred_region
          %s1968 = sand.u32 %s420, 1
          %s1969 = scalar_lea.sflag [#allocation27], %s1968
          %s1970 = sand.u32 %s420, 1
          %s1971 = smul.addr %s1970, 8
          %s1972 = scalar_lea.vmem [#allocation26], %s1971
          %1973 = dma.done %s1969, 128
        $region152: #{freprocess_forward.4} parent=143 // pred_fallthru
          _
      $region144: #{freprocess_forward.4} parent=5 // pred_fallthru
        _
    $region6: #{freprocess_forward.4} parent=1 // loop_footer
      %s46 = sadd.s32 1, %s42
    $region7: #{freprocess_forward.4} parent=1 // loop_footer_branch
      %41 = sbr.rel target = $region3
    $region8: #{freprocess_forward.4} parent=1 // loop_exit
      _
    %1974 = vsyncpa [#allocation3], 1
    %s1975 = scalar_lea.sflag [#allocation3], 1
    %1976 = vsyncpa %s1975, 1
    %1977 = vsyncpa [#allocation6], 1
    %s1978 = scalar_lea.sflag [#allocation6], 1
    %1979 = vsyncpa %s1978, 1
    %1980 = vsyncpa [#allocation9], 1
    %s1981 = scalar_lea.sflag [#allocation9], 1
    %1982 = vsyncpa %s1981, 1
    %1983 = vsyncpa [#allocation12], 1
    %1984 = vsyncpa [#allocation15], 1
    %1985 = vsyncpa [#allocation18], 1
    %1986 = vsyncpa [#allocation21], 1
    %1987 = vsyncpa [#allocation24], 1
    %1988 = vsyncpa [#allocation4], 1
    %s1989 = scalar_lea.sflag [#allocation4], 1
    %1990 = vsyncpa %s1989, 1
    %1991 = vsyncpa [#allocation27], 1
    %s1992 = scalar_lea.sflag [#allocation27], 1
    %1993 = vsyncpa %s1992, 1

// kernel: freprocess_forward.5
$region0: #{freprocess_forward.5}
  #allocation0 [shape = 'u32[]', space=smem, size = 0x4, offset = 0x4, fixed_abs, tag = 'smem constant byte address 0x4 - core index']
  #allocation1 [shape = 'u32[144,128]{1,0:T(1,128)}', space=vmem, size = 0x12000, scoped, tag = 'internal scratch']
  %s0 = inlined_call_operand.hbm [shape: f32[2,4,256], index: 0, kind: input, shape index: {}]
  %s1 = inlined_call_operand.hbm [shape: f32[4,4], index: 1, kind: input, shape index: {}]
  %s2 = inlined_call_operand.hbm [shape: f32[4,1], index: 2, kind: input, shape index: {}]
  %s3 = inlined_call_operand.hbm [shape: f32[2,4,256], index: 3, kind: output, shape index: {}]
  %s4 = sld [smem:[#allocation0]]
  $region57: #{freprocess_forward.5} parent=0
    _
  %s6 = ssub.s32 1, %s4
  %s7 = scalar_select 0, %s6, %s4
  $region1: #{freprocess_forward.5} parent=0
    #allocation2 [shape = 'u8[8192]{0}', space=vmem, size = 0x2000, scoped, tag = 'input window, operand 0']
    #allocation3 [shape = 's32[2]{0}', space=sflag, size = 0x8, scoped, tag = 'scoped memory for freprocess_forward.5']
    #allocation4 [shape = 's32[2]{0}', space=sflag, size = 0x8, scoped, tag = 'scoped memory for freprocess_forward.5']
    #allocation5 [shape = 'u8[2048]{0}', space=vmem, size = 0x800, scoped, tag = 'input window, operand 1, single buffered']
    #allocation6 [shape = 's32[1]{0}', space=sflag, size = 0x4, scoped, tag = 'scoped memory for freprocess_forward.5']
    #allocation7 [shape = 'u8[2048]{0}', space=vmem, size = 0x800, scoped, tag = 'input window, operand 2, single buffered']
    #allocation8 [shape = 'u8[8192]{0}', space=vmem, size = 0x2000, scoped, tag = 'output window, operand 0']
    %8 = vsyncpa [#allocation3], 0
    %s9 = scalar_lea.sflag [#allocation3], 1
    %10 = vsyncpa %s9, 0
    %11 = vsyncpa [#allocation6], 0
    %12 = vsyncpa [#allocation4], 0
    %s13 = scalar_lea.sflag [#allocation4], 1
    %14 = vsyncpa %s13, 0
    loop: start=0, step=1, limit=4
    $region2: #{freprocess_forward.5} parent=1 // loop_pre_header
      _
    $region3: #{freprocess_forward.5} parent=1 // loop_header
      %s16 = sphi 0, %s20
      %p17 = scmp.ge.s32.totalorder %s16, 4
      %s23 = sphi 0, %s35
      %s24 = sphi 0, %s31
      %s25 = sphi 0, %s23
      %s26 = sphi 0, %s24
      %s27 = sphi 0, %s25
      %s28 = sphi 0, %s26
      %s40 = sphi 0, %s42
      %s43 = sphi 0, %s40
      %s44 = sphi 0, %s43
      %s60 = sphi 0, %s44
      %s64 = sphi 0, %s64
      %s66 = sphi 0, %s64
      %s67 = sphi 0, %s66
      %s81 = sphi 0, %s67
      %s85 = sphi 0, %s85
      %s87 = sphi 0, %s85
      %s88 = sphi 0, %s87
      %s102 = sphi 0, %s88
      %s110 = sphi 0, %s112
      %s113 = sphi 0, %s110
      %s114 = sphi 0, %s113
      %s130 = sphi 0, %s114
    $region4: #{freprocess_forward.5} parent=1 // loop_header_branch
      %19 = sbr.rel (%p17) target = $region8
    $region5: #{freprocess_forward.5} parent=1 // loop_body
      %s21 = ssub.s32 %s16, 1
      %s22 = ssub.s32 %s16, 2
      %s29 = sadd.s32 1, %s24
      %p30 = scmp.ge.s32.totalorder %s29, 1
      %s31 = scalar_select %p30, 0, %s29
      %s32 = sadd.s32 1, %s23
      %s33 = scalar_select %p30, %s32, %s23
      %p34 = scmp.ge.s32.totalorder %s33, 2
      %s35 = scalar_select %p34, 0, %s33
      %s36 = ssub.s32 %s23, %s35
      %s37 = ssub.s32 %s24, %s31
      %s38 = sor.u32 %s36, %s37
      %p39 = scmp.eq.s32.totalorder %s38, 0
      %s41 = sadd.s32 %s40, 1
      %s42 = scalar_select %p39, %s40, %s41
      %p45 = pneg %p39
      %p46 = scmp.eq.s32.totalorder %s16, 1
      %p47 = por %p45, %p46
      %p48 = scmp.ne.s32.totalorder %s40, %s43
      %p49 = scmp.eq.s32.totalorder %s16, 0
      %p50 = por %p48, %p49
      %p51 = scmp.ne.s32.totalorder %s40, %s43
      %p52 = scmp.eq.s32.totalorder %s21, 1
      %p53 = por %p51, %p52
      %p54 = scmp.ne.s32.totalorder %s43, %s44
      %p55 = scmp.eq.s32.totalorder %s21, 0
      %p56 = por %p54, %p55
      %p57 = scmp.ne.s32.totalorder %s43, %s44
      %p58 = scmp.eq.s32.totalorder %s22, 1
      %p59 = por %p57, %p58
      %p61 = scmp.ne.s32.totalorder %s44, %s60
      %p62 = scmp.eq.s32.totalorder %s22, 0
      %p63 = por %p61, %p62
      %s65 = sadd.s32 %s64, 1
      %p68 = scmp.eq.s32.totalorder %s16, 1
      %p69 = scmp.ne.s32.totalorder %s64, %s66
      %p70 = scmp.eq.s32.totalorder %s16, 0
      %p71 = por %p69, %p70
      %p72 = scmp.ne.s32.totalorder %s64, %s66
      %p73 = scmp.eq.s32.totalorder %s21, 1
      %p74 = por %p72, %p73
      %p75 = scmp.ne.s32.totalorder %s66, %s67
      %p76 = scmp.eq.s32.totalorder %s21, 0
      %p77 = por %p75, %p76
      %p78 = scmp.ne.s32.totalorder %s66, %s67
      %p79 = scmp.eq.s32.totalorder %s22, 1
      %p80 = por %p78, %p79
      %p82 = scmp.ne.s32.totalorder %s67, %s81
      %p83 = scmp.eq.s32.totalorder %s22, 0
      %p84 = por %p82, %p83
      %s86 = sadd.s32 %s85, 1
      %p89 = scmp.eq.s32.totalorder %s16, 1
      %p90 = scmp.ne.s32.totalorder %s85, %s87
      %p91 = scmp.eq.s32.totalorder %s16, 0
      %p92 = por %p90, %p91
      %p93 = scmp.ne.s32.totalorder %s85, %s87
      %p94 = scmp.eq.s32.totalorder %s21, 1
      %p95 = por %p93, %p94
      %p96 = scmp.ne.s32.totalorder %s87, %s88
      %p97 = scmp.eq.s32.totalorder %s21, 0
      %p98 = por %p96, %p97
      %p99 = scmp.ne.s32.totalorder %s87, %s88
      %p100 = scmp.eq.s32.totalorder %s22, 1
      %p101 = por %p99, %p100
      %p103 = scmp.ne.s32.totalorder %s88, %s102
      %p104 = scmp.eq.s32.totalorder %s22, 0
      %p105 = por %p103, %p104
      %s106 = ssub.s32 %s23, %s35
      %s107 = ssub.s32 %s24, %s31
      %s108 = sor.u32 %s106, %s107
      %p109 = scmp.eq.s32.totalorder %s108, 0
      %s111 = sadd.s32 %s110, 1
      %s112 = scalar_select %p109, %s110, %s111
      %p115 = pneg %p109
      %p116 = scmp.eq.s32.totalorder %s16, 1
      %p117 = por %p115, %p116
      %p118 = scmp.ne.s32.totalorder %s110, %s113
      %p119 = scmp.eq.s32.totalorder %s16, 0
      %p120 = por %p118, %p119
      %p121 = scmp.ne.s32.totalorder %s110, %s113
      %p122 = scmp.eq.s32.totalorder %s21, 1
      %p123 = por %p121, %p122
      %p124 = scmp.ne.s32.totalorder %s113, %s114
      %p125 = scmp.eq.s32.totalorder %s21, 0
      %p126 = por %p124, %p125
      %p127 = scmp.ne.s32.totalorder %s113, %s114
      %p128 = scmp.eq.s32.totalorder %s22, 1
      %p129 = por %p127, %p128
      %p131 = scmp.ne.s32.totalorder %s114, %s130
      %p132 = scmp.eq.s32.totalorder %s22, 0
      %p133 = por %p131, %p132
      %p134 = scmp.le.s32.totalorder 1, %s16
      %p135 = scmp.lt.s32.totalorder %s16, 3
      %p136 = pnand %p134, %p135
      %p137 = pneg %p136
      // Predicated region
      $region9: #{freprocess_forward.5} parent=5 // pred_check
        _
      $region10: #{freprocess_forward.5} parent=5 // pred_check_branch
        %139 = sbr.rel (%p136) target = $region12
      $region11: #{freprocess_forward.5} parent=5 // pred_region
        %s140 = ssub.s32 %s16, 1
        // Predicated region
        $region13: #{freprocess_forward.5} parent=11 // pred_check
          %p141 = pneg %p77
        $region14: #{freprocess_forward.5} parent=11 // pred_check_branch
          %143 = sbr.rel (%p141) target = $region16
        $region15: #{freprocess_forward.5} parent=11 // pred_region
          %s145 = ssub.s32 64, 64
          %146 = vsyncadd [#allocation6], %s145
          %s148 = sshll.u32 [#allocation5], 4
          %s149 = int_to_ptr.vmem [resolvable:$true] %s148
          %151 = dma.hbm_to_vmem [thread:$0]  %s1, 64, %s149, [#allocation6]
        $region16: #{freprocess_forward.5} parent=11 // pred_fallthru
          _
        // Predicated region
        $region17: #{freprocess_forward.5} parent=11 // pred_check
          %p152 = pneg %p98
        $region18: #{freprocess_forward.5} parent=11 // pred_check_branch
          %154 = sbr.rel (%p152) target = $region20
        $region19: #{freprocess_forward.5} parent=11 // pred_region
          %s156 = ssub.s32 64, 64
          %157 = vsyncadd [#allocation6], %s156
          %s159 = sshll.u32 [#allocation7], 4
          %s160 = int_to_ptr.vmem [resolvable:$true] %s159
          %162 = dma.hbm_to_vmem [thread:$0]  %s2, 64, %s160, [#allocation6]
        $region20: #{freprocess_forward.5} parent=11 // pred_fallthru
          _
      $region12: #{freprocess_forward.5} parent=5 // pred_fallthru
        _
      %p163 = scmp.lt.s32.totalorder %s16, 2
      // Predicated region
      $region21: #{freprocess_forward.5} parent=5 // pred_check
        %p164 = pneg %p163
      $region22: #{freprocess_forward.5} parent=5 // pred_check_branch
        %166 = sbr.rel (%p164) target = $region24
      $region23: #{freprocess_forward.5} parent=5 // pred_region
        // Predicated region
        $region25: #{freprocess_forward.5} parent=23 // pred_check
          %p167 = pneg %p50
        $region26: #{freprocess_forward.5} parent=23 // pred_check_branch
          %169 = sbr.rel (%p167) target = $region28
        $region27: #{freprocess_forward.5} parent=23 // pred_region
          %s170 = sand.u32 %s40, 1
          %s171 = scalar_lea.sflag [#allocation3], %s170
          %s172 = sand.u32 %s40, 1
          %s173 = smul.addr %s172, 8
          %s174 = scalar_lea.vmem [#allocation2], %s173
          %s175 = smul.u32 2, %s24
          %s177 = ssub.s32 128, 128
          %178 = vsyncadd %s171, %s177
          %s179 = smul.addr %s23, 2
          %s180 = sadd.s32 %s175, %s179
          %s181 = smul.addr %s180, 64
          %s182 = scalar_lea.hbm %s0, %s181
          %s184 = sshll.u32 %s174, 4
          %s185 = int_to_ptr.vmem [resolvable:$true] %s184
          %187 = dma.hbm_to_vmem [thread:$0]  %s182, 128, %s185, %s171
        $region28: #{freprocess_forward.5} parent=23 // pred_fallthru
          _
      $region24: #{freprocess_forward.5} parent=5 // pred_fallthru
        _
      %p188 = scmp.le.s32.totalorder 1, %s16
      %p189 = scmp.lt.s32.totalorder %s16, 3
      %p190 = pnand %p188, %p189
      %p191 = pneg %p190
      // Predicated region
      $region29: #{freprocess_forward.5} parent=5 // pred_check
        _
      $region30: #{freprocess_forward.5} parent=5 // pred_check_branch
        %193 = sbr.rel (%p190) target = $region32
      $region31: #{freprocess_forward.5} parent=5 // pred_region
        %s194 = ssub.s32 %s16, 1
        %s195 = sand.u32 %s43, 1
        %s196 = scalar_lea.sflag [#allocation3], %s195
        %s197 = sand.u32 %s43, 1
        %s198 = smul.addr %s197, 8
        %s199 = scalar_lea.vmem [#allocation2], %s198
        // Predicated region
        $region33: #{freprocess_forward.5} parent=31 // pred_check
          %p200 = pneg %p56
        $region34: #{freprocess_forward.5} parent=31 // pred_check_branch
          %202 = sbr.rel (%p200) target = $region36
        $region35: #{freprocess_forward.5} parent=31 // pred_region
          %203 = dma.done %s196, 128
        $region36: #{freprocess_forward.5} parent=31 // pred_fallthru
          _
        // Predicated region
        $region37: #{freprocess_forward.5} parent=31 // pred_check
          %p204 = pneg %p77
        $region38: #{freprocess_forward.5} parent=31 // pred_check_branch
          %206 = sbr.rel (%p204) target = $region40
        $region39: #{freprocess_forward.5} parent=31 // pred_region
          %207 = dma.done [#allocation6], 64
        $region40: #{freprocess_forward.5} parent=31 // pred_fallthru
          _
        // Predicated region
        $region41: #{freprocess_forward.5} parent=31 // pred_check
          %p208 = pneg %p98
        $region42: #{freprocess_forward.5} parent=31 // pred_check_branch
          %210 = sbr.rel (%p208) target = $region44
        $region43: #{freprocess_forward.5} parent=31 // pred_region
          %211 = dma.done [#allocation6], 64
        $region44: #{freprocess_forward.5} parent=31 // pred_fallthru
          _
        %s212 = sand.u32 %s43, 1
        %s213 = scalar_lea.sflag [#allocation3], %s212
        %s214 = sand.u32 %s43, 1
        %s215 = smul.addr %s214, 8
        %s216 = scalar_lea.vmem [#allocation2], %s215
        %p217 = pneg %p56
        %p218 = pneg %p53
        %p219 = pneg %p77
        %p220 = pneg %p74
        %p221 = pneg %p98
        %p222 = pneg %p95
        %p223 = pneg %p126
        %p224 = pneg %p123
        %s225 = sand.u32 %s113, 1
        %s226 = scalar_lea.sflag [#allocation4], %s225
        %s227 = sand.u32 %s113, 1
        %s228 = smul.addr %s227, 8
        %s229 = scalar_lea.vmem [#allocation8], %s228
        %s230 = smul.u32 2, %s26
        %s231 = smul.u32 2, %s26
        %v232 = vld [vmem:[#allocation5] sm:$0xf]
        %v233 = vld [vmem:[%s199] sm:$0xff]
        %v234 = vand.u32 2147483647, %v233
        %236 = vset.pattern.permute.xlu0 0
        %237 = vperm.xlu0 %236, %v232
        %v238 = vpop.permute.xlu0 %237
        %v241 = vlaneseq
        %v242 = vshrl.u32 %v241, 7
        %v243 = vsub.s32 0, %v242
        %v244 = vrot.slane %v234, %v243
        %v245 = vlaneseq
        %v246 = vshrl.u32 %v245, 7
        %v247 = vsub.s32 4, %v246
        %v248 = vrot.slane %v234, %v247
        %v251 = vlaneseq
        %v252 = vshrl.u32 %v251, 7
        %v253 = vsub.s32 0, %v252
        %v254 = vrot.slane %v244, %v253
        %v255 = vlaneseq
        %v256 = vshrl.u32 %v255, 7
        %v257 = vsub.s32 0, %v256
        %v258 = vrot.slane %v248, %v257
        %v259 = vmul.f32 %v238, %v254
        %v260 = vmul.f32 %v238, %v258
        %261 = vset.pattern.permute.xlu0 1
        %262 = vperm.xlu0 %261, %v232
        %v263 = vpop.permute.xlu0 %262
        %v265 = vlaneseq
        %v266 = vshrl.u32 %v265, 7
        %v267 = vsub.s32 1, %v266
        %v268 = vrot.slane %v234, %v267
        %v269 = vlaneseq
        %v270 = vshrl.u32 %v269, 7
        %v271 = vsub.s32 5, %v270
        %v272 = vrot.slane %v234, %v271
        %v275 = vlaneseq
        %v276 = vshrl.u32 %v275, 7
        %v277 = vsub.s32 1, %v276
        %v278 = vrot.slane %v268, %v277
        %v279 = vlaneseq
        %v280 = vshrl.u32 %v279, 7
        %v281 = vsub.s32 1, %v280
        %v282 = vrot.slane %v272, %v281
        %v283 = vmul.f32 %v263, %v278
        %v284 = vmul.f32 %v263, %v282
        %v285 = vadd.f32 %v259, %v283
        %v286 = vadd.f32 %v260, %v284
        %287 = vset.pattern.permute.xlu0 2
        %288 = vperm.xlu0 %287, %v232
        %v289 = vpop.permute.xlu0 %288
        %v291 = vlaneseq
        %v292 = vshrl.u32 %v291, 7
        %v293 = vsub.s32 2, %v292
        %v294 = vrot.slane %v234, %v293
        %v295 = vlaneseq
        %v296 = vshrl.u32 %v295, 7
        %v297 = vsub.s32 6, %v296
        %v298 = vrot.slane %v234, %v297
        %v301 = vlaneseq
        %v302 = vshrl.u32 %v301, 7
        %v303 = vsub.s32 2, %v302
        %v304 = vrot.slane %v294, %v303
        %v305 = vlaneseq
        %v306 = vshrl.u32 %v305, 7
        %v307 = vsub.s32 2, %v306
        %v308 = vrot.slane %v298, %v307
        %v309 = vmul.f32 %v289, %v304
        %v310 = vmul.f32 %v289, %v308
        %v311 = vadd.f32 %v285, %v309
        %v312 = vadd.f32 %v286, %v310
        %313 = vset.pattern.permute.xlu0 3
        %314 = vperm.xlu0 %313, %v232
        %v315 = vpop.permute.xlu0 %314
        %v317 = vlaneseq
        %v318 = vshrl.u32 %v317, 7
        %v319 = vsub.s32 3, %v318
        %v320 = vrot.slane %v234, %v319
        %v321 = vlaneseq
        %v322 = vshrl.u32 %v321, 7
        %v323 = vsub.s32 7, %v322
        %v324 = vrot.slane %v234, %v323
        %v327 = vlaneseq
        %v328 = vshrl.u32 %v327, 7
        %v329 = vsub.s32 3, %v328
        %v330 = vrot.slane %v320, %v329
        %v331 = vlaneseq
        %v332 = vshrl.u32 %v331, 7
        %v333 = vsub.s32 3, %v332
        %v334 = vrot.slane %v324, %v333
        %v335 = vmul.f32 %v315, %v330
        %v336 = vmul.f32 %v315, %v334
        %v337 = vadd.f32 %v311, %v335
        %v338 = vadd.f32 %v312, %v336
        %v339 = vld [vmem:[#allocation7] sm:$0xf]
        %341 = vset.pattern.permute.xlu0 0
        %342 = vperm.xlu0 %341, %v339
        %v343 = vpop.permute.xlu0 %342
        %v345 = vadd.f32 %v337, %v343
        %v346 = vadd.f32 %v338, %v343
        %v349 = vcombine.low %v345, %v346
        %351 = vst [vmem:[%s229] sm:$0xff] %v349
        %s352 = sand.u32 %s113, 1
        %s353 = scalar_lea.sflag [#allocation4], %s352
        %s354 = sand.u32 %s113, 1
        %s355 = smul.addr %s354, 8
        %s356 = scalar_lea.vmem [#allocation8], %s355
        // Predicated region
        $region45: #{freprocess_forward.5} parent=31 // pred_check
          %p357 = pneg %p123
        $region46: #{freprocess_forward.5} parent=31 // pred_check_branch
          %359 = sbr.rel (%p357) target = $region48
        $region47: #{freprocess_forward.5} parent=31 // pred_region
          %s360 = smul.u32 2, %s26
          %s362 = ssub.s32 128, 128
          %363 = vsyncadd %s353, %s362
          %s364 = smul.addr %s25, 2
          %s365 = sadd.s32 %s360, %s364
          %s366 = smul.addr %s365, 64
          %s367 = scalar_lea.hbm %s3, %s366
          %s369 = sshll.u32 %s356, 4
          %s370 = int_to_ptr.vmem [resolvable:$true] %s369
          %372 = dma.vmem_to_hbm [thread:$0]  %s370, 128, %s367, %s353
        $region48: #{freprocess_forward.5} parent=31 // pred_fallthru
          _
      $region32: #{freprocess_forward.5} parent=5 // pred_fallthru
        _
      %p373 = scmp.le.s32.totalorder 2, %s16
      // Predicated region
      $region49: #{freprocess_forward.5} parent=5 // pred_check
        %p374 = pneg %p373
      $region50: #{freprocess_forward.5} parent=5 // pred_check_branch
        %376 = sbr.rel (%p374) target = $region52
      $region51: #{freprocess_forward.5} parent=5 // pred_region
        %s377 = ssub.s32 %s16, 2
        // Predicated region
        $region53: #{freprocess_forward.5} parent=51 // pred_check
          %p378 = pneg %p129
        $region54: #{freprocess_forward.5} parent=51 // pred_check_branch
          %380 = sbr.rel (%p378) target = $region56
        $region55: #{freprocess_forward.5} parent=51 // pred_region
          %s381 = sand.u32 %s114, 1
          %s382 = scalar_lea.sflag [#allocation4], %s381
          %s383 = sand.u32 %s114, 1
          %s384 = smul.addr %s383, 8
          %s385 = scalar_lea.vmem [#allocation8], %s384
          %386 = dma.done %s382, 128
        $region56: #{freprocess_forward.5} parent=51 // pred_fallthru
          _
      $region52: #{freprocess_forward.5} parent=5 // pred_fallthru
        _
    $region6: #{freprocess_forward.5} parent=1 // loop_footer
      %s20 = sadd.s32 1, %s16
    $region7: #{freprocess_forward.5} parent=1 // loop_footer_branch
      %15 = sbr.rel target = $region3
    $region8: #{freprocess_forward.5} parent=1 // loop_exit
      _
    %387 = vsyncpa [#allocation3], 1
    %s388 = scalar_lea.sflag [#allocation3], 1
    %389 = vsyncpa %s388, 1
    %390 = vsyncpa [#allocation6], 1
    %391 = vsyncpa [#allocation4], 1
    %s392 = scalar_lea.sflag [#allocation4], 1
    %393 = vsyncpa %s392, 1

</llo_original>
